<compile_context>
chip_gen: v5e
topology: v5e:2x2
jax: 0.10.0
libtpu: 0.0.40
codegen_flags: <defaults>
</compile_context>

<pallas_src>
import jax
import jax.numpy as jnp
from jax.experimental import pallas as pl
from jax.experimental.pallas import tpu as pltpu

# ------------------------- hyperparameters (small-shape instance) -------------------------
N_BATCH   = 2
CHANS     = 32          # fixed by the hard-coded channel index lists
SAMPLES   = 256         # module default 1500; must be a multiple of 64 here
F1        = 64
D         = 2
KERNLEN   = 64
F2        = 32
N_CLASSES = 4
TCN_DEPTH = 2
TCN_K     = 4
TCN_FILT  = 32
BN_EPS    = 1e-5
L_FEAT    = SAMPLES // 64                 # sequence length seen by the TCNs

CH_LISTS = [
    [0, 15, 1, 14, 2, 11, 12, 3, 13],
    [27, 26, 18, 29, 17, 30, 31, 16, 28, 19],
    [4, 9],
    [7, 8, 22],
    [21, 25],
    [5, 6, 24],
    [10, 20, 23],
]


def _elu(x):
    # Select form only: the positive-branch exp overflow is never selected.
    return jnp.where(x > 0, x, jnp.exp(x) - 1.0)


# --------------------------------- the single fused kernel ---------------------------------
def make_kernel(items):
    """Kernel processing `items` batch elements per grid step."""
    cw = 2 * items * TCN_FILT            # fused TCN lane width: [it0_fwd|it0_rev|it1_fwd|...]

    def kernel(x_ref, m_ref, b2_ref, sw_ref, b3_ref, tw_ref, tb_ref, wd_ref, bd_ref, o_ref):
        f32, bf16 = jnp.float32, jnp.bfloat16

        # ---- EEGNet front end: everything up to the first ELU is one matmul + bias ----
        xs = [x_ref[p, 0].T for p in range(items)]                        # (SAMPLES, CHANS) each
        xt = xs[0] if items == 1 else jnp.concatenate(xs, axis=0)         # (items*T, CHANS)
        a1 = _elu(jnp.dot(xt, m_ref[...], preferred_element_type=f32) + b2_ref[...])   # (items*T, F1*D)
        # AvgPool(1,8): groups of 8 align with the (8,128) sublane tile -> free reshape + reduce.
        hp = jnp.mean(a1.reshape(items * SAMPLES // 8, 8, F1 * D), axis=1)              # (items*T/8, 128)
        hs = _elu(jnp.dot(hp.astype(bf16), sw_ref[...], preferred_element_type=f32) + b3_ref[...])  # (.., F2)
        fp = jnp.mean(hs.reshape(items * L_FEAT, 8, F2), axis=1)                        # (items*L, F2)

        # forward + time-reversed features, lane-concatenated per item: (L, cw)
        feats = []
        for p in range(items):
            f = fp[p * L_FEAT:(p + 1) * L_FEAT]                                          # (L, 32)
            # PyTorch: out2 = tcn2(x.flip(-1))[:, :, -1] (no flip back) -> feed flipped seq,
            # take the last row of the fused output below. Verified against the reference forward.
            f_rev = jnp.concatenate([f[L_FEAT - 1 - t:L_FEAT - t] for t in range(L_FEAT)], axis=0)
            feats += [f, f_rev]
        h = jnp.concatenate(feats, axis=1)                                               # (L, cw)

        # ---- bi-directional TCN: branches (and items) fused -> ONE matmul per conv layer ----
        for b in range(TCN_DEPTH):
            dil = 2 ** b
            pad = (TCN_K - 1) * dil
            res = h
            for c in range(2):
                li = b * 2 + c
                hpad = jnp.concatenate([jnp.zeros((pad, cw), f32), h], axis=0)           # causal zero pad
                taps = jnp.concatenate(
                    [hpad[k * dil:k * dil + L_FEAT] for k in range(TCN_K)], axis=1)      # (L, K*cw)
                h = _elu(jnp.dot(taps.astype(bf16), tw_ref[li],
                                 preferred_element_type=f32) + tb_ref[li])               # (L, cw)
            h = _elu(h + res)                                                            # residual + ELU

        # ---- dense + softmax head on the last time step only (static slice) ----
        last = h[L_FEAT - 1:L_FEAT]                                                      # (1, cw)
        logits = jnp.dot(last.astype(bf16), wd_ref[...],
                         preferred_element_type=f32) + bd_ref[...]                       # (1, items*classes)
        for p in range(items):
            lg = logits[:, p * N_CLASSES:(p + 1) * N_CLASSES]
            e = jnp.exp(lg - jnp.max(lg, axis=-1, keepdims=True))
            o_ref[p] = e / jnp.sum(e, axis=-1, keepdims=True)

    return kernel


# ------------------------------------ parameter setup --------------------------------------
def bn_fold(bn, conv_bias=None):
    scale = bn["gamma"] / jnp.sqrt(bn["var"] + BN_EPS)
    shift = bn["beta"] - bn["mean"] * scale
    if conv_bias is not None:
        shift = shift + conv_bias * scale
    return scale, shift


def _block_diag(mats):
    rows = sum(m.shape[0] for m in mats)
    cols = sum(m.shape[1] for m in mats)
    out = jnp.zeros((rows, cols), jnp.float32)
    r = c = 0
    for m in mats:
        out = out.at[r:r + m.shape[0], c:c + m.shape[1]].set(m)
        r += m.shape[0]
        c += m.shape[1]
    return out


def init_params(key):
    keys = jax.random.split(key, 128)
    it = iter(range(128))

    def nxt():
        return keys[next(it)]

    def winit(shape, scale=0.05):
        return scale * jax.random.normal(nxt(), shape, dtype=jnp.float32)

    def bninit(c):
        return dict(
            gamma=1.0 + 0.1 * jax.random.normal(nxt(), (c,), dtype=jnp.float32),
            beta=0.1 * jax.random.normal(nxt(), (c,), dtype=jnp.float32),
            mean=0.1 * jax.random.normal(nxt(), (c,), dtype=jnp.float32),
            var=0.5 + jax.random.uniform(nxt(), (c,), dtype=jnp.float32),
        )

    p = {}
    p["conv1_w"] = winit((F1, KERNLEN))                 # Conv2d(1, F1, (kernLength, 1), 'same')
    p["bn1"] = bninit(F1)
    small_ws = [winit((F1, len(ch))) for ch in CH_LISTS]   # depthwise2..depthwise8
    dw_big = winit((F1 * D, CHANS + 7))                 # Conv2d(F1, F1*D, (Chans+7,1), groups=F1)
    p["bn2"] = bninit(F1 * D)
    sep_full = winit((F2, F1 * D, 16, 1))               # Conv2d(128, 32, (16,1), 'same')
    # 'same' padding with spatial size 1 (left 7 / right 8): only tap 7 touches real data.
    p["sep_w_eff"] = sep_full[:, :, 7, 0]
    p["bn3"] = bninit(F2)

    # Exact fold of: index_select + 7 small grouped convs + concat + big grouped depthwise.
    # Output row o of the big depthwise belongs to group o // D and reads feature map o // D.
    weff = dw_big[:, :CHANS]
    for i, (chs, wsm) in enumerate(zip(CH_LISTS, small_ws)):
        col = dw_big[:, CHANS + i][:, None]             # weight on concat-row 32+i
        rep = jnp.repeat(wsm, D, axis=0)                # row o -> small-conv weights of group o//D
        weff = weff.at[:, jnp.array(chs)].add(col * rep)
    p["weff"] = weff                                    # (F1*D, Chans)

    def tcn_init():
        blocks, cur = [], F2
        for _ in range(TCN_DEPTH):
            blocks.append(dict(
                conv1_w=winit((TCN_FILT, cur, TCN_K)), conv1_b=winit((TCN_FILT,)),
                bn1=bninit(TCN_FILT),
                conv2_w=winit((TCN_FILT, TCN_FILT, TCN_K)), conv2_b=winit((TCN_FILT,)),
                bn2=bninit(TCN_FILT)))                  # res_conv is None (32 -> 32)
            cur = TCN_FILT
        return blocks

    p["tcn1"] = tcn_init()
    p["tcn2"] = tcn_init()
    p["dense_w"] = winit((N_CLASSES, 2 * TCN_FILT))
    p["dense_b"] = winit((N_CLASSES,))
    return p


def build_consts(p, items):
    """Fold all affine ops into the constants consumed by the fused kernel."""
    A1, B1 = bn_fold(p["bn1"])
    A2, B2 = bn_fold(p["bn2"])
    A3, B3 = bn_fold(p["bn3"])

    g_of_o = jnp.arange(F1 * D) // D
    weff = p["weff"]                                    # (F1*D, Chans)
    w2 = weff * A1[g_of_o][:, None] * A2[:, None]       # bn1/bn2 scales folded
    bias2 = A2 * B1[g_of_o] * jnp.sum(weff, axis=1) + B2

    # Meff[o, e] = sum_c w2[o, c] * conv1_w[o//D, e + pad_l - c]  (conv1 'same' fold, exact)
    pad_l = (KERNLEN - 1) // 2
    w1_rep = jnp.repeat(p["conv1_w"], D, axis=0)        # (F1*D, kernLen), row o -> w1[o//D]
    c_idx = jnp.arange(CHANS)[:, None]
    e_idx = jnp.arange(CHANS)[None, :]
    tap = e_idx + pad_l - c_idx
    valid = ((tap >= 0) & (tap < KERNLEN)).astype(jnp.float32)
    w1_g = w1_rep[:, jnp.clip(tap, 0, KERNLEN - 1)] * valid[None]
    meff = jnp.einsum("oc,oce->oe", w2, w1_g)           # (F1*D, Chans)

    m = meff.T                                          # (Chans, F1*D), f32 (front-end matmul)
    b2 = bias2[None, :]
    sw = ((p["sep_w_eff"] * A3[:, None]).T).astype(jnp.bfloat16)   # (F1*D, F2), bn3 scale folded
    b3 = B3[None, :]

    # TCN: per conv layer, one (K*cw, cw) weight.  Lane groups are ordered
    # [item0_fwd, item0_rev, item1_fwd, item1_rev, ...]; fwd uses tcn1, rev uses tcn2.
    nb = 2 * items
    tw_layers, tb_layers = [], []
    for b in range(TCN_DEPTH):
        for c in range(2):
            scaled, shifts = [], []
            for name in ("tcn1", "tcn2"):
                blk = p[name][b]
                sc, sh = bn_fold(blk[f"bn{c + 1}"], blk[f"conv{c + 1}_b"])
                scaled.append(blk[f"conv{c + 1}_w"] * sc[:, None, None])   # (cout, cin, K)
                shifts.append(sh)
            rows = [_block_diag([scaled[j % 2][:, :, k].T for j in range(nb)])   # (cw, cw) per tap
                    for k in range(TCN_K)]
            tw_layers.append(jnp.concatenate(rows, axis=0))                       # (K*cw, cw)
            tb_layers.append(jnp.concatenate([shifts[j % 2] for j in range(nb)])[None, :])
    tw = jnp.stack(tw_layers).astype(jnp.bfloat16)      # (2*depth, K*cw, cw)
    tb = jnp.stack(tb_layers)                           # (2*depth, 1, cw), f32

    # Dense head: per item a (2*filt, classes) block, block-diagonal across items.
    wd_item = jnp.concatenate([p["dense_w"][:, :TCN_FILT].T,
                               p["dense_w"][:, TCN_FILT:].T], axis=0)              # (64, classes)
    wd = _block_diag([wd_item] * items).astype(jnp.bfloat16)                       # (cw, items*classes)
    bd = jnp.tile(p["dense_b"], (items,))[None, :]                                  # (1, items*classes)

    return (m, b2, sw, b3, tw, tb, wd, bd)


# ---------------------------------------- forward -----------------------------------------
def build_forward(consts, items):
    kernel = make_kernel(items)
    n_steps = N_BATCH // items

    def const_spec(a):
        nd = a.ndim
        return pl.BlockSpec(a.shape, lambda i, _nd=nd: (0,) * _nd)

    in_specs = [pl.BlockSpec((items, 1, CHANS, SAMPLES), lambda i: (i, 0, 0, 0))]
    in_specs += [const_spec(c) for c in consts]

    call = pl.pallas_call(
        kernel,
        out_shape=jax.ShapeDtypeStruct((N_BATCH, 1, N_CLASSES), jnp.float32),
        grid=(n_steps,),
        in_specs=in_specs,
        out_specs=pl.BlockSpec((items, 1, N_CLASSES), lambda i: (i, 0, 0)),
        compiler_params=pltpu.CompilerParams(dimension_semantics=("parallel",)),
    )

    def forward(x):
        return call(x, *consts)[:, 0, :]

    return jax.jit(forward)


# ------------------------------------------ main -------------------------------------------
if __name__ == "__main__":
    key = jax.random.PRNGKey(0)
    pkey, xkey = jax.random.split(key)
    params = init_params(pkey)

    # Batch handling per chip generation: dual-TensorCore chips keep one item per
    # grid step ("parallel" grid -> one item per core); single-TC chips fold both
    # items into a single grid step (bigger matmul M, no per-step overhead).
    kind = jax.devices()[0].device_kind.lower()
    dual_core = any(t in kind for t in ("v7", "7x", "v4", "v5p"))
    items_per_step = 1 if dual_core else N_BATCH

    consts = build_consts(params, items_per_step)
    x = jax.random.normal(xkey, (N_BATCH, 1, CHANS, SAMPLES), dtype=jnp.float32)

    fwd = build_forward(consts, items_per_step)
    out = jax.block_until_ready(fwd(x))

    assert out.shape == (N_BATCH, N_CLASSES)
    assert bool(jnp.all(jnp.isfinite(out)))
    assert bool(jnp.allclose(jnp.sum(out, axis=1), 1.0, atol=1e-5))
    print("KERNEL_OK")
</pallas_src>

<mosaic_0001>
module attributes {stable_mosaic.version = 11 : i64} {
  func.func @kernel(%arg0: i32, %arg1: memref<2x1x32x256xf32, #tpu.memory_space<vmem>>, %arg2: memref<32x128xf32, #tpu.memory_space<vmem>>, %arg3: memref<1x128xf32, #tpu.memory_space<vmem>>, %arg4: memref<128x32xbf16, #tpu.memory_space<vmem>>, %arg5: memref<1x32xf32, #tpu.memory_space<vmem>>, %arg6: memref<4x512x128xbf16, #tpu.memory_space<vmem>>, %arg7: memref<4x1x128xf32, #tpu.memory_space<vmem>>, %arg8: memref<128x8xbf16, #tpu.memory_space<vmem>>, %arg9: memref<1x8xf32, #tpu.memory_space<vmem>>, %arg10: memref<2x1x4xf32, #tpu.memory_space<vmem>>) attributes {dimension_semantics = [#tpu.dimension_semantics<parallel>], iteration_bounds = array<i64: 1>, scalar_prefetch = 0 : i64, scratch_operands = 0 : i64, tpu.core_type = #tpu.core_type<tc>, window_params = [{transform_indices = @transform_0, window_bounds = array<i64: 2, 1, 32, 256>}, {pipeline_mode = #tpu.pipeline_mode<synchronous>, transform_indices = @transform_1, window_bounds = array<i64: 32, 128>}, {pipeline_mode = #tpu.pipeline_mode<synchronous>, transform_indices = @transform_2, window_bounds = array<i64: 1, 128>}, {pipeline_mode = #tpu.pipeline_mode<synchronous>, transform_indices = @transform_3, window_bounds = array<i64: 128, 32>}, {pipeline_mode = #tpu.pipeline_mode<synchronous>, transform_indices = @transform_4, window_bounds = array<i64: 1, 32>}, {pipeline_mode = #tpu.pipeline_mode<synchronous>, transform_indices = @transform_5, window_bounds = array<i64: 4, 512, 128>}, {pipeline_mode = #tpu.pipeline_mode<synchronous>, transform_indices = @transform_6, window_bounds = array<i64: 4, 1, 128>}, {pipeline_mode = #tpu.pipeline_mode<synchronous>, transform_indices = @transform_7, window_bounds = array<i64: 128, 8>}, {pipeline_mode = #tpu.pipeline_mode<synchronous>, transform_indices = @transform_8, window_bounds = array<i64: 1, 8>}, {transform_indices = @transform_9, window_bounds = array<i64: 2, 1, 4>}]} {
    %c0 = arith.constant 0 : index
    %c0_0 = arith.constant 0 : index
    %c0_1 = arith.constant 0 : index
    %c0_2 = arith.constant 0 : index
    %0 = vector.load %arg1[%c0, %c0_0, %c0_1, %c0_2] : memref<2x1x32x256xf32, #tpu.memory_space<vmem>>, vector<1x1x32x256xf32>
    %1 = vector.shape_cast %0 : vector<1x1x32x256xf32> to vector<32x256xf32>
    %2 = tpu.transpose %1, [1, 0] : vector<32x256xf32> -> vector<256x32xf32>
    %c1 = arith.constant 1 : index
    %c0_3 = arith.constant 0 : index
    %c0_4 = arith.constant 0 : index
    %c0_5 = arith.constant 0 : index
    %3 = vector.load %arg1[%c1, %c0_3, %c0_4, %c0_5] : memref<2x1x32x256xf32, #tpu.memory_space<vmem>>, vector<1x1x32x256xf32>
    %4 = vector.shape_cast %3 : vector<1x1x32x256xf32> to vector<32x256xf32>
    %5 = tpu.transpose %4, [1, 0] : vector<32x256xf32> -> vector<256x32xf32>
    %6 = tpu.concatenate %2, %5 in 0 : vector<256x32xf32>, vector<256x32xf32> -> vector<512x32xf32>
    %c0_6 = arith.constant 0 : index
    %c0_7 = arith.constant 0 : index
    %7 = vector.load %arg2[%c0_6, %c0_7] : memref<32x128xf32, #tpu.memory_space<vmem>>, vector<32x128xf32>
    %cst = arith.constant dense<0.000000e+00> : vector<512x128xf32>
    %8 = tpu.matmul %6, %7, %cst {dimension_numbers = #tpu.dot_dimension_numbers<[1], [0], [0], [1], [0, 0, 1, 1], [], []>} : vector<512x32xf32>, vector<32x128xf32>, vector<512x128xf32> -> vector<512x128xf32>
    %c0_8 = arith.constant 0 : index
    %c0_9 = arith.constant 0 : index
    %9 = vector.load %arg3[%c0_8, %c0_9] : memref<1x128xf32, #tpu.memory_space<vmem>>, vector<1x128xf32>
    %10 = vector.broadcast %9 : vector<1x128xf32> to vector<512x128xf32>
    %11 = arith.addf %8, %10 : vector<512x128xf32>
    %cst_10 = arith.constant 0.000000e+00 : f32
    %12 = vector.broadcast %cst_10 : f32 to vector<512x128xf32>
    %13 = arith.cmpf ogt, %11, %12 : vector<512x128xf32>
    %14 = math.exp %11 : vector<512x128xf32>
    %cst_11 = arith.constant 1.000000e+00 : f32
    %15 = vector.broadcast %cst_11 : f32 to vector<512x128xf32>
    %16 = arith.subf %14, %15 : vector<512x128xf32>
    %17 = arith.select %13, %11, %16 : vector<512x128xi1>, vector<512x128xf32>
    %18 = vector.shape_cast %17 : vector<512x128xf32> to vector<64x8x128xf32>
    %cst_12 = arith.constant dense<0.000000e+00> : vector<64x128xf32>
    %19 = vector.multi_reduction <add>, %18, %cst_12 [1] : vector<64x8x128xf32> to vector<64x128xf32>
    %cst_13 = arith.constant 8.000000e+00 : f32
    %20 = vector.broadcast %cst_13 : f32 to vector<64x128xf32>
    %21 = arith.divf %19, %20 : vector<64x128xf32>
    %22 = arith.truncf %21 : vector<64x128xf32> to vector<64x128xbf16>
    %c0_14 = arith.constant 0 : index
    %c0_15 = arith.constant 0 : index
    %23 = vector.load %arg4[%c0_14, %c0_15] : memref<128x32xbf16, #tpu.memory_space<vmem>>, vector<128x32xbf16>
    %cst_16 = arith.constant dense<0.000000e+00> : vector<64x32xf32>
    %24 = tpu.matmul %22, %23, %cst_16 {dimension_numbers = #tpu.dot_dimension_numbers<[1], [0], [0], [1], [0, 0, 1, 1], [], []>} : vector<64x128xbf16>, vector<128x32xbf16>, vector<64x32xf32> -> vector<64x32xf32>
    %c0_17 = arith.constant 0 : index
    %c0_18 = arith.constant 0 : index
    %25 = vector.load %arg5[%c0_17, %c0_18] : memref<1x32xf32, #tpu.memory_space<vmem>>, vector<1x32xf32>
    %26 = vector.broadcast %25 : vector<1x32xf32> to vector<64x32xf32>
    %27 = arith.addf %24, %26 : vector<64x32xf32>
    %cst_19 = arith.constant 0.000000e+00 : f32
    %28 = vector.broadcast %cst_19 : f32 to vector<64x32xf32>
    %29 = arith.cmpf ogt, %27, %28 : vector<64x32xf32>
    %30 = math.exp %27 : vector<64x32xf32>
    %cst_20 = arith.constant 1.000000e+00 : f32
    %31 = vector.broadcast %cst_20 : f32 to vector<64x32xf32>
    %32 = arith.subf %30, %31 : vector<64x32xf32>
    %33 = arith.select %29, %27, %32 : vector<64x32xi1>, vector<64x32xf32>
    %34 = vector.shape_cast %33 : vector<64x32xf32> to vector<8x8x32xf32>
    %cst_21 = arith.constant dense<0.000000e+00> : vector<8x32xf32>
    %35 = vector.multi_reduction <add>, %34, %cst_21 [1] : vector<8x8x32xf32> to vector<8x32xf32>
    %cst_22 = arith.constant 8.000000e+00 : f32
    %36 = vector.broadcast %cst_22 : f32 to vector<8x32xf32>
    %37 = arith.divf %35, %36 : vector<8x32xf32>
    %38 = vector.extract_strided_slice %37 {offsets = [0, 0], sizes = [4, 32], strides = [1, 1]} : vector<8x32xf32> to vector<4x32xf32>
    %39 = vector.extract_strided_slice %38 {offsets = [3, 0], sizes = [1, 32], strides = [1, 1]} : vector<4x32xf32> to vector<1x32xf32>
    %40 = vector.extract_strided_slice %38 {offsets = [2, 0], sizes = [1, 32], strides = [1, 1]} : vector<4x32xf32> to vector<1x32xf32>
    %41 = vector.extract_strided_slice %38 {offsets = [1, 0], sizes = [1, 32], strides = [1, 1]} : vector<4x32xf32> to vector<1x32xf32>
    %42 = vector.extract_strided_slice %38 {offsets = [0, 0], sizes = [1, 32], strides = [1, 1]} : vector<4x32xf32> to vector<1x32xf32>
    %43 = tpu.concatenate %39, %40, %41, %42 in 0 : vector<1x32xf32>, vector<1x32xf32>, vector<1x32xf32>, vector<1x32xf32> -> vector<4x32xf32>
    %44 = vector.extract_strided_slice %37 {offsets = [4, 0], sizes = [4, 32], strides = [1, 1]} : vector<8x32xf32> to vector<4x32xf32>
    %45 = vector.extract_strided_slice %44 {offsets = [3, 0], sizes = [1, 32], strides = [1, 1]} : vector<4x32xf32> to vector<1x32xf32>
    %46 = vector.extract_strided_slice %44 {offsets = [2, 0], sizes = [1, 32], strides = [1, 1]} : vector<4x32xf32> to vector<1x32xf32>
    %47 = vector.extract_strided_slice %44 {offsets = [1, 0], sizes = [1, 32], strides = [1, 1]} : vector<4x32xf32> to vector<1x32xf32>
    %48 = vector.extract_strided_slice %44 {offsets = [0, 0], sizes = [1, 32], strides = [1, 1]} : vector<4x32xf32> to vector<1x32xf32>
    %49 = tpu.concatenate %45, %46, %47, %48 in 0 : vector<1x32xf32>, vector<1x32xf32>, vector<1x32xf32>, vector<1x32xf32> -> vector<4x32xf32>
    %50 = tpu.concatenate %38, %43, %44, %49 in 1 : vector<4x32xf32>, vector<4x32xf32>, vector<4x32xf32>, vector<4x32xf32> -> vector<4x128xf32>
    %cst_23 = arith.constant 0.000000e+00 : f32
    %51 = vector.broadcast %cst_23 : f32 to vector<3x128xf32>
    %52 = tpu.concatenate %51, %50 in 0 : vector<3x128xf32>, vector<4x128xf32> -> vector<7x128xf32>
    %53 = vector.extract_strided_slice %52 {offsets = [0, 0], sizes = [4, 128], strides = [1, 1]} : vector<7x128xf32> to vector<4x128xf32>
    %54 = vector.extract_strided_slice %52 {offsets = [1, 0], sizes = [4, 128], strides = [1, 1]} : vector<7x128xf32> to vector<4x128xf32>
    %55 = vector.extract_strided_slice %52 {offsets = [2, 0], sizes = [4, 128], strides = [1, 1]} : vector<7x128xf32> to vector<4x128xf32>
    %56 = vector.extract_strided_slice %52 {offsets = [3, 0], sizes = [4, 128], strides = [1, 1]} : vector<7x128xf32> to vector<4x128xf32>
    %57 = tpu.concatenate %53, %54, %55, %56 in 1 : vector<4x128xf32>, vector<4x128xf32>, vector<4x128xf32>, vector<4x128xf32> -> vector<4x512xf32>
    %58 = arith.truncf %57 : vector<4x512xf32> to vector<4x512xbf16>
    %c0_24 = arith.constant 0 : index
    %c0_25 = arith.constant 0 : index
    %c0_26 = arith.constant 0 : index
    %59 = vector.load %arg6[%c0_24, %c0_25, %c0_26] : memref<4x512x128xbf16, #tpu.memory_space<vmem>>, vector<1x512x128xbf16>
    %60 = vector.shape_cast %59 : vector<1x512x128xbf16> to vector<512x128xbf16>
    %cst_27 = arith.constant dense<0.000000e+00> : vector<4x128xf32>
    %61 = tpu.matmul %58, %60, %cst_27 {dimension_numbers = #tpu.dot_dimension_numbers<[1], [0], [0], [1], [0, 0, 1, 1], [], []>} : vector<4x512xbf16>, vector<512x128xbf16>, vector<4x128xf32> -> vector<4x128xf32>
    %c0_28 = arith.constant 0 : index
    %c0_29 = arith.constant 0 : index
    %c0_30 = arith.constant 0 : index
    %62 = vector.load %arg7[%c0_28, %c0_29, %c0_30] : memref<4x1x128xf32, #tpu.memory_space<vmem>>, vector<1x1x128xf32>
    %63 = vector.shape_cast %62 : vector<1x1x128xf32> to vector<1x128xf32>
    %64 = vector.broadcast %63 : vector<1x128xf32> to vector<4x128xf32>
    %65 = arith.addf %61, %64 : vector<4x128xf32>
    %cst_31 = arith.constant 0.000000e+00 : f32
    %66 = vector.broadcast %cst_31 : f32 to vector<4x128xf32>
    %67 = arith.cmpf ogt, %65, %66 : vector<4x128xf32>
    %68 = math.exp %65 : vector<4x128xf32>
    %cst_32 = arith.constant 1.000000e+00 : f32
    %69 = vector.broadcast %cst_32 : f32 to vector<4x128xf32>
    %70 = arith.subf %68, %69 : vector<4x128xf32>
    %71 = arith.select %67, %65, %70 : vector<4x128xi1>, vector<4x128xf32>
    %cst_33 = arith.constant 0.000000e+00 : f32
    %72 = vector.broadcast %cst_33 : f32 to vector<3x128xf32>
    %73 = tpu.concatenate %72, %71 in 0 : vector<3x128xf32>, vector<4x128xf32> -> vector<7x128xf32>
    %74 = vector.extract_strided_slice %73 {offsets = [0, 0], sizes = [4, 128], strides = [1, 1]} : vector<7x128xf32> to vector<4x128xf32>
    %75 = vector.extract_strided_slice %73 {offsets = [1, 0], sizes = [4, 128], strides = [1, 1]} : vector<7x128xf32> to vector<4x128xf32>
    %76 = vector.extract_strided_slice %73 {offsets = [2, 0], sizes = [4, 128], strides = [1, 1]} : vector<7x128xf32> to vector<4x128xf32>
    %77 = vector.extract_strided_slice %73 {offsets = [3, 0], sizes = [4, 128], strides = [1, 1]} : vector<7x128xf32> to vector<4x128xf32>
    %78 = tpu.concatenate %74, %75, %76, %77 in 1 : vector<4x128xf32>, vector<4x128xf32>, vector<4x128xf32>, vector<4x128xf32> -> vector<4x512xf32>
    %79 = arith.truncf %78 : vector<4x512xf32> to vector<4x512xbf16>
    %c1_34 = arith.constant 1 : index
    %c0_35 = arith.constant 0 : index
    %c0_36 = arith.constant 0 : index
    %80 = vector.load %arg6[%c1_34, %c0_35, %c0_36] : memref<4x512x128xbf16, #tpu.memory_space<vmem>>, vector<1x512x128xbf16>
    %81 = vector.shape_cast %80 : vector<1x512x128xbf16> to vector<512x128xbf16>
    %cst_37 = arith.constant dense<0.000000e+00> : vector<4x128xf32>
    %82 = tpu.matmul %79, %81, %cst_37 {dimension_numbers = #tpu.dot_dimension_numbers<[1], [0], [0], [1], [0, 0, 1, 1], [], []>} : vector<4x512xbf16>, vector<512x128xbf16>, vector<4x128xf32> -> vector<4x128xf32>
    %c1_38 = arith.constant 1 : index
    %c0_39 = arith.constant 0 : index
    %c0_40 = arith.constant 0 : index
    %83 = vector.load %arg7[%c1_38, %c0_39, %c0_40] : memref<4x1x128xf32, #tpu.memory_space<vmem>>, vector<1x1x128xf32>
    %84 = vector.shape_cast %83 : vector<1x1x128xf32> to vector<1x128xf32>
    %85 = vector.broadcast %84 : vector<1x128xf32> to vector<4x128xf32>
    %86 = arith.addf %82, %85 : vector<4x128xf32>
    %cst_41 = arith.constant 0.000000e+00 : f32
    %87 = vector.broadcast %cst_41 : f32 to vector<4x128xf32>
    %88 = arith.cmpf ogt, %86, %87 : vector<4x128xf32>
    %89 = math.exp %86 : vector<4x128xf32>
    %cst_42 = arith.constant 1.000000e+00 : f32
    %90 = vector.broadcast %cst_42 : f32 to vector<4x128xf32>
    %91 = arith.subf %89, %90 : vector<4x128xf32>
    %92 = arith.select %88, %86, %91 : vector<4x128xi1>, vector<4x128xf32>
    %93 = arith.addf %92, %50 : vector<4x128xf32>
    %cst_43 = arith.constant 0.000000e+00 : f32
    %94 = vector.broadcast %cst_43 : f32 to vector<4x128xf32>
    %95 = arith.cmpf ogt, %93, %94 : vector<4x128xf32>
    %96 = math.exp %93 : vector<4x128xf32>
    %cst_44 = arith.constant 1.000000e+00 : f32
    %97 = vector.broadcast %cst_44 : f32 to vector<4x128xf32>
    %98 = arith.subf %96, %97 : vector<4x128xf32>
    %99 = arith.select %95, %93, %98 : vector<4x128xi1>, vector<4x128xf32>
    %cst_45 = arith.constant 0.000000e+00 : f32
    %100 = vector.broadcast %cst_45 : f32 to vector<6x128xf32>
    %101 = tpu.concatenate %100, %99 in 0 : vector<6x128xf32>, vector<4x128xf32> -> vector<10x128xf32>
    %102 = vector.extract_strided_slice %101 {offsets = [0, 0], sizes = [4, 128], strides = [1, 1]} : vector<10x128xf32> to vector<4x128xf32>
    %103 = vector.extract_strided_slice %101 {offsets = [2, 0], sizes = [4, 128], strides = [1, 1]} : vector<10x128xf32> to vector<4x128xf32>
    %104 = vector.extract_strided_slice %101 {offsets = [4, 0], sizes = [4, 128], strides = [1, 1]} : vector<10x128xf32> to vector<4x128xf32>
    %105 = vector.extract_strided_slice %101 {offsets = [6, 0], sizes = [4, 128], strides = [1, 1]} : vector<10x128xf32> to vector<4x128xf32>
    %106 = tpu.concatenate %102, %103, %104, %105 in 1 : vector<4x128xf32>, vector<4x128xf32>, vector<4x128xf32>, vector<4x128xf32> -> vector<4x512xf32>
    %107 = arith.truncf %106 : vector<4x512xf32> to vector<4x512xbf16>
    %c2 = arith.constant 2 : index
    %c0_46 = arith.constant 0 : index
    %c0_47 = arith.constant 0 : index
    %108 = vector.load %arg6[%c2, %c0_46, %c0_47] : memref<4x512x128xbf16, #tpu.memory_space<vmem>>, vector<1x512x128xbf16>
    %109 = vector.shape_cast %108 : vector<1x512x128xbf16> to vector<512x128xbf16>
    %cst_48 = arith.constant dense<0.000000e+00> : vector<4x128xf32>
    %110 = tpu.matmul %107, %109, %cst_48 {dimension_numbers = #tpu.dot_dimension_numbers<[1], [0], [0], [1], [0, 0, 1, 1], [], []>} : vector<4x512xbf16>, vector<512x128xbf16>, vector<4x128xf32> -> vector<4x128xf32>
    %c2_49 = arith.constant 2 : index
    %c0_50 = arith.constant 0 : index
    %c0_51 = arith.constant 0 : index
    %111 = vector.load %arg7[%c2_49, %c0_50, %c0_51] : memref<4x1x128xf32, #tpu.memory_space<vmem>>, vector<1x1x128xf32>
    %112 = vector.shape_cast %111 : vector<1x1x128xf32> to vector<1x128xf32>
    %113 = vector.broadcast %112 : vector<1x128xf32> to vector<4x128xf32>
    %114 = arith.addf %110, %113 : vector<4x128xf32>
    %cst_52 = arith.constant 0.000000e+00 : f32
    %115 = vector.broadcast %cst_52 : f32 to vector<4x128xf32>
    %116 = arith.cmpf ogt, %114, %115 : vector<4x128xf32>
    %117 = math.exp %114 : vector<4x128xf32>
    %cst_53 = arith.constant 1.000000e+00 : f32
    %118 = vector.broadcast %cst_53 : f32 to vector<4x128xf32>
    %119 = arith.subf %117, %118 : vector<4x128xf32>
    %120 = arith.select %116, %114, %119 : vector<4x128xi1>, vector<4x128xf32>
    %cst_54 = arith.constant 0.000000e+00 : f32
    %121 = vector.broadcast %cst_54 : f32 to vector<6x128xf32>
    %122 = tpu.concatenate %121, %120 in 0 : vector<6x128xf32>, vector<4x128xf32> -> vector<10x128xf32>
    %123 = vector.extract_strided_slice %122 {offsets = [0, 0], sizes = [4, 128], strides = [1, 1]} : vector<10x128xf32> to vector<4x128xf32>
    %124 = vector.extract_strided_slice %122 {offsets = [2, 0], sizes = [4, 128], strides = [1, 1]} : vector<10x128xf32> to vector<4x128xf32>
    %125 = vector.extract_strided_slice %122 {offsets = [4, 0], sizes = [4, 128], strides = [1, 1]} : vector<10x128xf32> to vector<4x128xf32>
    %126 = vector.extract_strided_slice %122 {offsets = [6, 0], sizes = [4, 128], strides = [1, 1]} : vector<10x128xf32> to vector<4x128xf32>
    %127 = tpu.concatenate %123, %124, %125, %126 in 1 : vector<4x128xf32>, vector<4x128xf32>, vector<4x128xf32>, vector<4x128xf32> -> vector<4x512xf32>
    %128 = arith.truncf %127 : vector<4x512xf32> to vector<4x512xbf16>
    %c3 = arith.constant 3 : index
    %c0_55 = arith.constant 0 : index
    %c0_56 = arith.constant 0 : index
    %129 = vector.load %arg6[%c3, %c0_55, %c0_56] : memref<4x512x128xbf16, #tpu.memory_space<vmem>>, vector<1x512x128xbf16>
    %130 = vector.shape_cast %129 : vector<1x512x128xbf16> to vector<512x128xbf16>
    %cst_57 = arith.constant dense<0.000000e+00> : vector<4x128xf32>
    %131 = tpu.matmul %128, %130, %cst_57 {dimension_numbers = #tpu.dot_dimension_numbers<[1], [0], [0], [1], [0, 0, 1, 1], [], []>} : vector<4x512xbf16>, vector<512x128xbf16>, vector<4x128xf32> -> vector<4x128xf32>
    %c3_58 = arith.constant 3 : index
    %c0_59 = arith.constant 0 : index
    %c0_60 = arith.constant 0 : index
    %132 = vector.load %arg7[%c3_58, %c0_59, %c0_60] : memref<4x1x128xf32, #tpu.memory_space<vmem>>, vector<1x1x128xf32>
    %133 = vector.shape_cast %132 : vector<1x1x128xf32> to vector<1x128xf32>
    %134 = vector.broadcast %133 : vector<1x128xf32> to vector<4x128xf32>
    %135 = arith.addf %131, %134 : vector<4x128xf32>
    %cst_61 = arith.constant 0.000000e+00 : f32
    %136 = vector.broadcast %cst_61 : f32 to vector<4x128xf32>
    %137 = arith.cmpf ogt, %135, %136 : vector<4x128xf32>
    %138 = math.exp %135 : vector<4x128xf32>
    %cst_62 = arith.constant 1.000000e+00 : f32
    %139 = vector.broadcast %cst_62 : f32 to vector<4x128xf32>
    %140 = arith.subf %138, %139 : vector<4x128xf32>
    %141 = arith.select %137, %135, %140 : vector<4x128xi1>, vector<4x128xf32>
    %142 = arith.addf %141, %99 : vector<4x128xf32>
    %cst_63 = arith.constant 0.000000e+00 : f32
    %143 = vector.broadcast %cst_63 : f32 to vector<4x128xf32>
    %144 = arith.cmpf ogt, %142, %143 : vector<4x128xf32>
    %145 = math.exp %142 : vector<4x128xf32>
    %cst_64 = arith.constant 1.000000e+00 : f32
    %146 = vector.broadcast %cst_64 : f32 to vector<4x128xf32>
    %147 = arith.subf %145, %146 : vector<4x128xf32>
    %148 = arith.select %144, %142, %147 : vector<4x128xi1>, vector<4x128xf32>
    %149 = vector.extract_strided_slice %148 {offsets = [3, 0], sizes = [1, 128], strides = [1, 1]} : vector<4x128xf32> to vector<1x128xf32>
    %150 = arith.truncf %149 : vector<1x128xf32> to vector<1x128xbf16>
    %c0_65 = arith.constant 0 : index
    %c0_66 = arith.constant 0 : index
    %151 = vector.load %arg8[%c0_65, %c0_66] : memref<128x8xbf16, #tpu.memory_space<vmem>>, vector<128x8xbf16>
    %cst_67 = arith.constant dense<0.000000e+00> : vector<1x8xf32>
    %152 = tpu.matmul %150, %151, %cst_67 {dimension_numbers = #tpu.dot_dimension_numbers<[1], [0], [0], [1], [0, 0, 1, 1], [], []>} : vector<1x128xbf16>, vector<128x8xbf16>, vector<1x8xf32> -> vector<1x8xf32>
    %c0_68 = arith.constant 0 : index
    %c0_69 = arith.constant 0 : index
    %153 = vector.load %arg9[%c0_68, %c0_69] : memref<1x8xf32, #tpu.memory_space<vmem>>, vector<1x8xf32>
    %154 = arith.addf %152, %153 : vector<1x8xf32>
    %155 = vector.extract_strided_slice %154 {offsets = [0, 0], sizes = [1, 4], strides = [1, 1]} : vector<1x8xf32> to vector<1x4xf32>
    %cst_70 = arith.constant dense<0xFF800000> : vector<1xf32>
    %156 = vector.multi_reduction <maximumf>, %155, %cst_70 [1] : vector<1x4xf32> to vector<1xf32>
    %157 = vector.shape_cast %156 : vector<1xf32> to vector<1x1xf32>
    %158 = vector.broadcast %157 : vector<1x1xf32> to vector<1x4xf32>
    %159 = arith.subf %155, %158 : vector<1x4xf32>
    %160 = math.exp %159 : vector<1x4xf32>
    %cst_71 = arith.constant dense<0.000000e+00> : vector<1xf32>
    %161 = vector.multi_reduction <add>, %160, %cst_71 [1] : vector<1x4xf32> to vector<1xf32>
    %162 = vector.shape_cast %161 : vector<1xf32> to vector<1x1xf32>
    %163 = vector.broadcast %162 : vector<1x1xf32> to vector<1x4xf32>
    %164 = arith.divf %160, %163 : vector<1x4xf32>
    %c0_72 = arith.constant 0 : index
    %c0_73 = arith.constant 0 : index
    %c0_74 = arith.constant 0 : index
    %165 = vector.load %arg10[%c0_72, %c0_73, %c0_74] : memref<2x1x4xf32, #tpu.memory_space<vmem>>, vector<1x1x4xf32>
    %166 = vector.shape_cast %165 : vector<1x1x4xf32> to vector<1x4xf32>
    %167 = vector.shape_cast %164 : vector<1x4xf32> to vector<1x1x4xf32>
    tpu.vector_store %arg10[%c0_72, %c0_73, %c0_74], %167 {strides = array<i32>} : memref<2x1x4xf32, #tpu.memory_space<vmem>>, vector<1x1x4xf32>,
    %168 = vector.extract_strided_slice %154 {offsets = [0, 4], sizes = [1, 4], strides = [1, 1]} : vector<1x8xf32> to vector<1x4xf32>
    %cst_75 = arith.constant dense<0xFF800000> : vector<1xf32>
    %169 = vector.multi_reduction <maximumf>, %168, %cst_75 [1] : vector<1x4xf32> to vector<1xf32>
    %170 = vector.shape_cast %169 : vector<1xf32> to vector<1x1xf32>
    %171 = vector.broadcast %170 : vector<1x1xf32> to vector<1x4xf32>
    %172 = arith.subf %168, %171 : vector<1x4xf32>
    %173 = math.exp %172 : vector<1x4xf32>
    %cst_76 = arith.constant dense<0.000000e+00> : vector<1xf32>
    %174 = vector.multi_reduction <add>, %173, %cst_76 [1] : vector<1x4xf32> to vector<1xf32>
    %175 = vector.shape_cast %174 : vector<1xf32> to vector<1x1xf32>
    %176 = vector.broadcast %175 : vector<1x1xf32> to vector<1x4xf32>
    %177 = arith.divf %173, %176 : vector<1x4xf32>
    %c1_77 = arith.constant 1 : index
    %c0_78 = arith.constant 0 : index
    %c0_79 = arith.constant 0 : index
    %178 = vector.load %arg10[%c1_77, %c0_78, %c0_79] : memref<2x1x4xf32, #tpu.memory_space<vmem>>, vector<1x1x4xf32>
    %179 = vector.shape_cast %178 : vector<1x1x4xf32> to vector<1x4xf32>
    %180 = vector.shape_cast %177 : vector<1x4xf32> to vector<1x1x4xf32>
    tpu.vector_store %arg10[%c1_77, %c0_78, %c0_79], %180 {strides = array<i32>} : memref<2x1x4xf32, #tpu.memory_space<vmem>>, vector<1x1x4xf32>,
    return
  }
  func.func @transform_0(%arg0: i32) -> (i32, i32, i32, i32) {
    %c0_i32 = arith.constant 0 : i32
    %c0_i32_0 = arith.constant 0 : i32
    %c0_i32_1 = arith.constant 0 : i32
    %c0_i32_2 = arith.constant 0 : i32
    return %arg0, %c0_i32, %c0_i32_0, %c0_i32_1 : i32, i32, i32, i32
  }
  func.func @transform_1(%arg0: i32) -> (i32, i32) {
    %c0_i32 = arith.constant 0 : i32
    %c0_i32_0 = arith.constant 0 : i32
    %c0_i32_1 = arith.constant 0 : i32
    return %c0_i32, %c0_i32_0 : i32, i32
  }
  func.func @transform_2(%arg0: i32) -> (i32, i32) {
    %c0_i32 = arith.constant 0 : i32
    %c0_i32_0 = arith.constant 0 : i32
    %c0_i32_1 = arith.constant 0 : i32
    return %c0_i32, %c0_i32_0 : i32, i32
  }
  func.func @transform_3(%arg0: i32) -> (i32, i32) {
    %c0_i32 = arith.constant 0 : i32
    %c0_i32_0 = arith.constant 0 : i32
    %c0_i32_1 = arith.constant 0 : i32
    return %c0_i32, %c0_i32_0 : i32, i32
  }
  func.func @transform_4(%arg0: i32) -> (i32, i32) {
    %c0_i32 = arith.constant 0 : i32
    %c0_i32_0 = arith.constant 0 : i32
    %c0_i32_1 = arith.constant 0 : i32
    return %c0_i32, %c0_i32_0 : i32, i32
  }
  func.func @transform_5(%arg0: i32) -> (i32, i32, i32) {
    %c0_i32 = arith.constant 0 : i32
    %c0_i32_0 = arith.constant 0 : i32
    %c0_i32_1 = arith.constant 0 : i32
    %c0_i32_2 = arith.constant 0 : i32
    return %c0_i32, %c0_i32_0, %c0_i32_1 : i32, i32, i32
  }
  func.func @transform_6(%arg0: i32) -> (i32, i32, i32) {
    %c0_i32 = arith.constant 0 : i32
    %c0_i32_0 = arith.constant 0 : i32
    %c0_i32_1 = arith.constant 0 : i32
    %c0_i32_2 = arith.constant 0 : i32
    return %c0_i32, %c0_i32_0, %c0_i32_1 : i32, i32, i32
  }
  func.func @transform_7(%arg0: i32) -> (i32, i32) {
    %c0_i32 = arith.constant 0 : i32
    %c0_i32_0 = arith.constant 0 : i32
    %c0_i32_1 = arith.constant 0 : i32
    return %c0_i32, %c0_i32_0 : i32, i32
  }
  func.func @transform_8(%arg0: i32) -> (i32, i32) {
    %c0_i32 = arith.constant 0 : i32
    %c0_i32_0 = arith.constant 0 : i32
    %c0_i32_1 = arith.constant 0 : i32
    return %c0_i32, %c0_i32_0 : i32, i32
  }
  func.func @transform_9(%arg0: i32) -> (i32, i32, i32) {
    %c0_i32 = arith.constant 0 : i32
    %c0_i32_0 = arith.constant 0 : i32
    %c0_i32_1 = arith.constant 0 : i32
    return %arg0, %c0_i32, %c0_i32_0 : i32, i32, i32
  }
}

</mosaic_0001>

<llo_original>
// kernel: forward.1
$region0: #{forward.1}
  #allocation0 [shape = 'u32[]', space=smem, size = 0x4, offset = 0x4, fixed_abs, tag = 'smem constant byte address 0x4 - core index']
  #allocation1 [shape = 'u32[72,128]{1,0:T(1,128)}', space=vmem, size = 0x9000, scoped, tag = 'internal scratch']
  %s0 = inlined_call_operand.hbm [shape: f32[2,1,32,256], index: 0, kind: input, shape index: {}]
  %s1 = inlined_call_operand.hbm [shape: f32[32,128], index: 1, kind: input, shape index: {}]
  %s2 = inlined_call_operand.hbm [shape: f32[1,128], index: 2, kind: input, shape index: {}]
  %s3 = inlined_call_operand.hbm [shape: bf16[128,32], index: 3, kind: input, shape index: {}]
  %s4 = inlined_call_operand.hbm [shape: f32[1,32], index: 4, kind: input, shape index: {}]
  %s5 = inlined_call_operand.hbm [shape: bf16[4,512,128], index: 5, kind: input, shape index: {}]
  %s6 = inlined_call_operand.vmem [shape: f32[4,1,128], index: 6, kind: input, shape index: {}]
  %s7 = inlined_call_operand.hbm [shape: bf16[128,8], index: 7, kind: input, shape index: {}]
  %s8 = inlined_call_operand.vmem [shape: f32[1,8], index: 8, kind: input, shape index: {}]
  %s9 = inlined_call_operand.hbm [shape: f32[2,1,4], index: 9, kind: output, shape index: {}]
  %s10 = sld [smem:[#allocation0]]
  $region74: #{forward.1} parent=0
    _
  %s12 = ssub.s32 1, %s10
  %s13 = scalar_select 0, %s12, %s10
  $region1: #{forward.1} parent=0
    #allocation2 [shape = 'u8[65536]{0}', space=vmem, size = 0x10000, scoped, tag = 'input window, operand 0, single buffered']
    #allocation3 [shape = 's32[1]{0}', space=sflag, size = 0x4, scoped, tag = 'scoped memory for forward.1']
    #allocation4 [shape = 's32[1]{0}', space=sflag, size = 0x4, scoped, tag = 'scoped memory for forward.1']
    #allocation5 [shape = 'u8[16384]{0}', space=vmem, size = 0x4000, scoped, tag = 'input window, operand 1, single buffered']
    #allocation6 [shape = 's32[1]{0}', space=sflag, size = 0x4, scoped, tag = 'scoped memory for forward.1']
    #allocation7 [shape = 'u8[512]{0}', space=vmem, size = 0x400, scoped, tag = 'input window, operand 2, single buffered']
    #allocation8 [shape = 'u8[32768]{0}', space=vmem, size = 0x8000, scoped, tag = 'input window, operand 3, single buffered']
    #allocation9 [shape = 's32[1]{0}', space=sflag, size = 0x4, scoped, tag = 'scoped memory for forward.1']
    #allocation10 [shape = 'u8[512]{0}', space=vmem, size = 0x400, scoped, tag = 'input window, operand 4, single buffered']
    #allocation11 [shape = 'u8[524288]{0}', space=vmem, size = 0x80000, scoped, tag = 'input window, operand 5, single buffered']
    #allocation12 [shape = 's32[1]{0}', space=sflag, size = 0x4, scoped, tag = 'scoped memory for forward.1']
    #allocation13 [shape = 'u8[32768]{0}', space=vmem, size = 0x8000, scoped, tag = 'input window, operand 7, single buffered']
    #allocation14 [shape = 'u8[1024]{0}', space=vmem, size = 0x400, scoped, tag = 'output window, operand 0, single buffered']
    %14 = vsyncpa [#allocation3], 0
    %15 = vsyncpa [#allocation6], 0
    %16 = vsyncpa [#allocation9], 0
    %17 = vsyncpa [#allocation12], 0
    %18 = vsyncpa [#allocation4], 0
    // Predicated region
    $region2: #{forward.1} parent=1 // pred_check
      _
    $region3: #{forward.1} parent=1 // pred_check_branch
      %20 = sbr.rel (0) target = $region5
    $region4: #{forward.1} parent=1 // pred_region
      %22 = vsyncadd [#allocation3], 0
      %s23 = sshll.u32 %s0, 4
      %s24 = int_to_ptr.hbm [resolvable:$true] %s23
      %s25 = sshll.u32 [#allocation2], 4
      %s26 = int_to_ptr.vmem [resolvable:$true] %s25
      %31 = dma.hbm_to_vmem [thread:$0]  %s24, 2048, %s26, [#allocation3], 256, 256, 16
    $region5: #{forward.1} parent=1 // pred_fallthru
      _
    // Predicated region
    $region6: #{forward.1} parent=1 // pred_check
      _
    $region7: #{forward.1} parent=1 // pred_check_branch
      %33 = sbr.rel (0) target = $region9
    $region8: #{forward.1} parent=1 // pred_region
      %35 = vsyncadd [#allocation6], 0
      %s36 = sshll.u32 %s1, 4
      %s37 = int_to_ptr.hbm [resolvable:$true] %s36
      %s38 = sshll.u32 [#allocation5], 4
      %s39 = int_to_ptr.vmem [resolvable:$true] %s38
      %44 = dma.hbm_to_vmem [thread:$0]  %s37, 512, %s39, [#allocation6], 128, 128, 8
    $region9: #{forward.1} parent=1 // pred_fallthru
      _
    // Predicated region
    $region10: #{forward.1} parent=1 // pred_check
      _
    $region11: #{forward.1} parent=1 // pred_check_branch
      %46 = sbr.rel (0) target = $region13
    $region12: #{forward.1} parent=1 // pred_region
      %48 = vsyncadd [#allocation6], 0
      %s50 = sshll.u32 %s2, 4
      %s51 = int_to_ptr.hbm [resolvable:$true] %s50
      %s52 = sshll.u32 [#allocation7], 4
      %s53 = int_to_ptr.vmem [resolvable:$true] %s52
      %55 = dma.hbm_to_vmem [thread:$0]  %s51, 16, %s53, [#allocation6]
    $region13: #{forward.1} parent=1 // pred_fallthru
      _
    // Predicated region
    $region14: #{forward.1} parent=1 // pred_check
      _
    $region15: #{forward.1} parent=1 // pred_check_branch
      %57 = sbr.rel (0) target = $region17
    $region16: #{forward.1} parent=1 // pred_region
      %59 = vsyncadd [#allocation9], 0
      %s60 = sshll.u32 %s3, 4
      %s61 = int_to_ptr.hbm [resolvable:$true] %s60
      %s62 = sshll.u32 [#allocation8], 4
      %s63 = int_to_ptr.vmem [resolvable:$true] %s62
      %68 = dma.hbm_to_vmem [thread:$0]  %s61, 1024, %s63, [#allocation9], 64, 64, 4
    $region17: #{forward.1} parent=1 // pred_fallthru
      _
    // Predicated region
    $region18: #{forward.1} parent=1 // pred_check
      _
    $region19: #{forward.1} parent=1 // pred_check_branch
      %70 = sbr.rel (0) target = $region21
    $region20: #{forward.1} parent=1 // pred_region
      %72 = vsyncadd [#allocation9], 0
      %s74 = sshll.u32 %s4, 4
      %s75 = int_to_ptr.hbm [resolvable:$true] %s74
      %s76 = sshll.u32 [#allocation10], 4
      %s77 = int_to_ptr.vmem [resolvable:$true] %s76
      %79 = dma.hbm_to_vmem [thread:$0]  %s75, 16, %s77, [#allocation9]
    $region21: #{forward.1} parent=1 // pred_fallthru
      _
    // Predicated region
    $region22: #{forward.1} parent=1 // pred_check
      _
    $region23: #{forward.1} parent=1 // pred_check_branch
      %81 = sbr.rel (0) target = $region25
    $region24: #{forward.1} parent=1 // pred_region
      %83 = vsyncadd [#allocation12], 0
      %s84 = sshll.u32 %s5, 4
      %s85 = int_to_ptr.hbm [resolvable:$true] %s84
      %s86 = sshll.u32 [#allocation11], 4
      %s87 = int_to_ptr.vmem [resolvable:$true] %s86
      %92 = dma.hbm_to_vmem [thread:$0]  %s85, 16384, %s87, [#allocation12], 64, 64, 4
    $region25: #{forward.1} parent=1 // pred_fallthru
      _
    // Predicated region
    $region26: #{forward.1} parent=1 // pred_check
      _
    $region27: #{forward.1} parent=1 // pred_check_branch
      %94 = sbr.rel (0) target = $region29
    $region28: #{forward.1} parent=1 // pred_region
      _
    $region29: #{forward.1} parent=1 // pred_fallthru
      _
    // Predicated region
    $region30: #{forward.1} parent=1 // pred_check
      _
    $region31: #{forward.1} parent=1 // pred_check_branch
      %96 = sbr.rel (0) target = $region33
    $region32: #{forward.1} parent=1 // pred_region
      %98 = vsyncadd [#allocation12], 0
      %s99 = sshll.u32 %s7, 4
      %s100 = int_to_ptr.hbm [resolvable:$true] %s99
      %s101 = sshll.u32 [#allocation13], 4
      %s102 = int_to_ptr.vmem [resolvable:$true] %s101
      %107 = dma.hbm_to_vmem [thread:$0]  %s100, 1024, %s102, [#allocation12], 64, 64, 4
    $region33: #{forward.1} parent=1 // pred_fallthru
      _
    // Predicated region
    $region34: #{forward.1} parent=1 // pred_check
      _
    $region35: #{forward.1} parent=1 // pred_check_branch
      %109 = sbr.rel (0) target = $region37
    $region36: #{forward.1} parent=1 // pred_region
      _
    $region37: #{forward.1} parent=1 // pred_fallthru
      _
    // Predicated region
    $region38: #{forward.1} parent=1 // pred_check
      _
    $region39: #{forward.1} parent=1 // pred_check_branch
      %111 = sbr.rel (0) target = $region41
    $region40: #{forward.1} parent=1 // pred_region
      %113 = dma.done [#allocation3], 2048
    $region41: #{forward.1} parent=1 // pred_fallthru
      _
    // Predicated region
    $region42: #{forward.1} parent=1 // pred_check
      _
    $region43: #{forward.1} parent=1 // pred_check_branch
      %115 = sbr.rel (0) target = $region45
    $region44: #{forward.1} parent=1 // pred_region
      %117 = dma.done [#allocation6], 512
    $region45: #{forward.1} parent=1 // pred_fallthru
      _
    // Predicated region
    $region46: #{forward.1} parent=1 // pred_check
      _
    $region47: #{forward.1} parent=1 // pred_check_branch
      %119 = sbr.rel (0) target = $region49
    $region48: #{forward.1} parent=1 // pred_region
      %121 = dma.done [#allocation6], 16
    $region49: #{forward.1} parent=1 // pred_fallthru
      _
    // Predicated region
    $region50: #{forward.1} parent=1 // pred_check
      _
    $region51: #{forward.1} parent=1 // pred_check_branch
      %123 = sbr.rel (0) target = $region53
    $region52: #{forward.1} parent=1 // pred_region
      %125 = dma.done [#allocation9], 1024
    $region53: #{forward.1} parent=1 // pred_fallthru
      _
    // Predicated region
    $region54: #{forward.1} parent=1 // pred_check
      _
    $region55: #{forward.1} parent=1 // pred_check_branch
      %127 = sbr.rel (0) target = $region57
    $region56: #{forward.1} parent=1 // pred_region
      %129 = dma.done [#allocation9], 16
    $region57: #{forward.1} parent=1 // pred_fallthru
      _
    // Predicated region
    $region58: #{forward.1} parent=1 // pred_check
      _
    $region59: #{forward.1} parent=1 // pred_check_branch
      %131 = sbr.rel (0) target = $region61
    $region60: #{forward.1} parent=1 // pred_region
      %133 = dma.done [#allocation12], 16384
    $region61: #{forward.1} parent=1 // pred_fallthru
      _
    // Predicated region
    $region62: #{forward.1} parent=1 // pred_check
      _
    $region63: #{forward.1} parent=1 // pred_check_branch
      %135 = sbr.rel (0) target = $region65
    $region64: #{forward.1} parent=1 // pred_region
      %137 = dma.done [#allocation12], 1024
    $region65: #{forward.1} parent=1 // pred_fallthru
      _
    %v138 = vld [vmem:[#allocation2] sm:$0xff]
    %v139 = vld [vmem:[#allocation2 + $0x8] sm:$0xff]
    %v140 = vld [vmem:[#allocation2 + $0x10] sm:$0xff]
    %v141 = vld [vmem:[#allocation2 + $0x18] sm:$0xff]
    %v142 = vld [vmem:[#allocation2 + $0x20] sm:$0xff]
    %v143 = vld [vmem:[#allocation2 + $0x28] sm:$0xff]
    %v144 = vld [vmem:[#allocation2 + $0x30] sm:$0xff]
    %v145 = vld [vmem:[#allocation2 + $0x38] sm:$0xff]
    %146 = vxpose.xlu0.b32.start [1/16] %v138, 128
    %147 = vxpose.xlu0.b32.cont [2/16] %v140, 128
    %148 = vxpose.xlu0.b32.cont [3/16] %v142, 128
    %149 = vxpose.xlu0.b32.cont [4/16] %v144, 128
    %150 = vxpose.xlu0.b32.cont [5/16] 0.0, 128
    %151 = vxpose.xlu0.b32.cont [6/16] 0.0, 128
    %152 = vxpose.xlu0.b32.cont [7/16] 0.0, 128
    %153 = vxpose.xlu0.b32.cont [8/16] 0.0, 128
    %154 = vxpose.xlu0.b32.cont [9/16] 0.0, 128
    %155 = vxpose.xlu0.b32.cont [10/16] 0.0, 128
    %156 = vxpose.xlu0.b32.cont [11/16] 0.0, 128
    %157 = vxpose.xlu0.b32.cont [12/16] 0.0, 128
    %158 = vxpose.xlu0.b32.cont [13/16] 0.0, 128
    %159 = vxpose.xlu0.b32.cont [14/16] 0.0, 128
    %160 = vxpose.xlu0.b32.cont [15/16] 0.0, 128
    %161 = vxpose.xlu0.b32.end [16/16] 0.0, 128
    %v162 = vpop.trf.xlu0
    %v163 = vpop.trf.xlu0
    %v164 = vpop.trf.xlu0
    %v165 = vpop.trf.xlu0
    %v166 = vpop.trf.xlu0
    %v167 = vpop.trf.xlu0
    %v168 = vpop.trf.xlu0
    %v169 = vpop.trf.xlu0
    %v170 = vpop.trf.xlu0
    %v171 = vpop.trf.xlu0
    %v172 = vpop.trf.xlu0
    %v173 = vpop.trf.xlu0
    %v174 = vpop.trf.xlu0
    %v175 = vpop.trf.xlu0
    %v176 = vpop.trf.xlu0
    %v177 = vpop.trf.xlu0
    %178 = vxpose.xlu0.b32.start [1/16] %v139, 128
    %179 = vxpose.xlu0.b32.cont [2/16] %v141, 128
    %180 = vxpose.xlu0.b32.cont [3/16] %v143, 128
    %181 = vxpose.xlu0.b32.cont [4/16] %v145, 128
    %182 = vxpose.xlu0.b32.cont [5/16] 0.0, 128
    %183 = vxpose.xlu0.b32.cont [6/16] 0.0, 128
    %184 = vxpose.xlu0.b32.cont [7/16] 0.0, 128
    %185 = vxpose.xlu0.b32.cont [8/16] 0.0, 128
    %186 = vxpose.xlu0.b32.cont [9/16] 0.0, 128
    %187 = vxpose.xlu0.b32.cont [10/16] 0.0, 128
    %188 = vxpose.xlu0.b32.cont [11/16] 0.0, 128
    %189 = vxpose.xlu0.b32.cont [12/16] 0.0, 128
    %190 = vxpose.xlu0.b32.cont [13/16] 0.0, 128
    %191 = vxpose.xlu0.b32.cont [14/16] 0.0, 128
    %192 = vxpose.xlu0.b32.cont [15/16] 0.0, 128
    %193 = vxpose.xlu0.b32.end [16/16] 0.0, 128
    %v194 = vpop.trf.xlu0
    %v195 = vpop.trf.xlu0
    %v196 = vpop.trf.xlu0
    %v197 = vpop.trf.xlu0
    %v198 = vpop.trf.xlu0
    %v199 = vpop.trf.xlu0
    %v200 = vpop.trf.xlu0
    %v201 = vpop.trf.xlu0
    %v202 = vpop.trf.xlu0
    %v203 = vpop.trf.xlu0
    %v204 = vpop.trf.xlu0
    %v205 = vpop.trf.xlu0
    %v206 = vpop.trf.xlu0
    %v207 = vpop.trf.xlu0
    %v208 = vpop.trf.xlu0
    %v209 = vpop.trf.xlu0
    %s210 = scalar_lea.vmem [#allocation2], 64
    %v211 = vld [vmem:[%s210] sm:$0xff]
    %v212 = vld [vmem:[%s210 + $0x8] sm:$0xff]
    %v213 = vld [vmem:[%s210 + $0x10] sm:$0xff]
    %v214 = vld [vmem:[%s210 + $0x18] sm:$0xff]
    %v215 = vld [vmem:[%s210 + $0x20] sm:$0xff]
    %v216 = vld [vmem:[%s210 + $0x28] sm:$0xff]
    %v217 = vld [vmem:[%s210 + $0x30] sm:$0xff]
    %v218 = vld [vmem:[%s210 + $0x38] sm:$0xff]
    %219 = vxpose.xlu0.b32.start [1/16] %v211, 128
    %220 = vxpose.xlu0.b32.cont [2/16] %v213, 128
    %221 = vxpose.xlu0.b32.cont [3/16] %v215, 128
    %222 = vxpose.xlu0.b32.cont [4/16] %v217, 128
    %223 = vxpose.xlu0.b32.cont [5/16] 0.0, 128
    %224 = vxpose.xlu0.b32.cont [6/16] 0.0, 128
    %225 = vxpose.xlu0.b32.cont [7/16] 0.0, 128
    %226 = vxpose.xlu0.b32.cont [8/16] 0.0, 128
    %227 = vxpose.xlu0.b32.cont [9/16] 0.0, 128
    %228 = vxpose.xlu0.b32.cont [10/16] 0.0, 128
    %229 = vxpose.xlu0.b32.cont [11/16] 0.0, 128
    %230 = vxpose.xlu0.b32.cont [12/16] 0.0, 128
    %231 = vxpose.xlu0.b32.cont [13/16] 0.0, 128
    %232 = vxpose.xlu0.b32.cont [14/16] 0.0, 128
    %233 = vxpose.xlu0.b32.cont [15/16] 0.0, 128
    %234 = vxpose.xlu0.b32.end [16/16] 0.0, 128
    %v235 = vpop.trf.xlu0
    %v236 = vpop.trf.xlu0
    %v237 = vpop.trf.xlu0
    %v238 = vpop.trf.xlu0
    %v239 = vpop.trf.xlu0
    %v240 = vpop.trf.xlu0
    %v241 = vpop.trf.xlu0
    %v242 = vpop.trf.xlu0
    %v243 = vpop.trf.xlu0
    %v244 = vpop.trf.xlu0
    %v245 = vpop.trf.xlu0
    %v246 = vpop.trf.xlu0
    %v247 = vpop.trf.xlu0
    %v248 = vpop.trf.xlu0
    %v249 = vpop.trf.xlu0
    %v250 = vpop.trf.xlu0
    %251 = vxpose.xlu0.b32.start [1/16] %v212, 128
    %252 = vxpose.xlu0.b32.cont [2/16] %v214, 128
    %253 = vxpose.xlu0.b32.cont [3/16] %v216, 128
    %254 = vxpose.xlu0.b32.cont [4/16] %v218, 128
    %255 = vxpose.xlu0.b32.cont [5/16] 0.0, 128
    %256 = vxpose.xlu0.b32.cont [6/16] 0.0, 128
    %257 = vxpose.xlu0.b32.cont [7/16] 0.0, 128
    %258 = vxpose.xlu0.b32.cont [8/16] 0.0, 128
    %259 = vxpose.xlu0.b32.cont [9/16] 0.0, 128
    %260 = vxpose.xlu0.b32.cont [10/16] 0.0, 128
    %261 = vxpose.xlu0.b32.cont [11/16] 0.0, 128
    %262 = vxpose.xlu0.b32.cont [12/16] 0.0, 128
    %263 = vxpose.xlu0.b32.cont [13/16] 0.0, 128
    %264 = vxpose.xlu0.b32.cont [14/16] 0.0, 128
    %265 = vxpose.xlu0.b32.cont [15/16] 0.0, 128
    %266 = vxpose.xlu0.b32.end [16/16] 0.0, 128
    %v267 = vpop.trf.xlu0
    %v268 = vpop.trf.xlu0
    %v269 = vpop.trf.xlu0
    %v270 = vpop.trf.xlu0
    %v271 = vpop.trf.xlu0
    %v272 = vpop.trf.xlu0
    %v273 = vpop.trf.xlu0
    %v274 = vpop.trf.xlu0
    %v275 = vpop.trf.xlu0
    %v276 = vpop.trf.xlu0
    %v277 = vpop.trf.xlu0
    %v278 = vpop.trf.xlu0
    %v279 = vpop.trf.xlu0
    %v280 = vpop.trf.xlu0
    %v281 = vpop.trf.xlu0
    %v282 = vpop.trf.xlu0
    %v283 = vld [vmem:[#allocation5] sm:$0xff]
    %v284 = vld [vmem:[#allocation5 + $0x8] sm:$0xff]
    %v285 = vld [vmem:[#allocation5 + $0x10] sm:$0xff]
    %v286 = vld [vmem:[#allocation5 + $0x18] sm:$0xff]
    %v287 = vld [vmem:[#allocation7] sm:$0x1]
    %v289 = vperm.slane %v287, 0
    %vm291 = vcmask 261120
    %v293 = vsel %vm291, %v162, 0
    %v296 = vsel %vm291, %v163, 0
    %v299 = vsel %vm291, %v164, 0
    %v302 = vsel %vm291, %v165, 0
    %v305 = vsel %vm291, %v166, 0
    %v308 = vsel %vm291, %v167, 0
    %v311 = vsel %vm291, %v168, 0
    %v314 = vsel %vm291, %v169, 0
    %v317 = vsel %vm291, %v170, 0
    %v320 = vsel %vm291, %v171, 0
    %v323 = vsel %vm291, %v172, 0
    %v326 = vsel %vm291, %v173, 0
    %v329 = vsel %vm291, %v174, 0
    %v332 = vsel %vm291, %v175, 0
    %v335 = vsel %vm291, %v176, 0
    %v338 = vsel %vm291, %v177, 0
    %v341 = vsel %vm291, %v194, 0
    %v344 = vsel %vm291, %v195, 0
    %v347 = vsel %vm291, %v196, 0
    %v350 = vsel %vm291, %v197, 0
    %v353 = vsel %vm291, %v198, 0
    %v356 = vsel %vm291, %v199, 0
    %v359 = vsel %vm291, %v200, 0
    %v362 = vsel %vm291, %v201, 0
    %v365 = vsel %vm291, %v202, 0
    %v368 = vsel %vm291, %v203, 0
    %v371 = vsel %vm291, %v204, 0
    %v374 = vsel %vm291, %v205, 0
    %v377 = vsel %vm291, %v206, 0
    %v380 = vsel %vm291, %v207, 0
    %v383 = vsel %vm291, %v208, 0
    %v386 = vsel %vm291, %v209, 0
    %v389 = vsel %vm291, %v235, 0
    %v392 = vsel %vm291, %v236, 0
    %v395 = vsel %vm291, %v237, 0
    %v398 = vsel %vm291, %v238, 0
    %v401 = vsel %vm291, %v239, 0
    %v404 = vsel %vm291, %v240, 0
    %v407 = vsel %vm291, %v241, 0
    %v410 = vsel %vm291, %v242, 0
    %v413 = vsel %vm291, %v243, 0
    %v416 = vsel %vm291, %v244, 0
    %v419 = vsel %vm291, %v245, 0
    %v422 = vsel %vm291, %v246, 0
    %v425 = vsel %vm291, %v247, 0
    %v428 = vsel %vm291, %v248, 0
    %v431 = vsel %vm291, %v249, 0
    %v434 = vsel %vm291, %v250, 0
    %v437 = vsel %vm291, %v267, 0
    %v440 = vsel %vm291, %v268, 0
    %v443 = vsel %vm291, %v269, 0
    %v446 = vsel %vm291, %v270, 0
    %v449 = vsel %vm291, %v271, 0
    %v452 = vsel %vm291, %v272, 0
    %v455 = vsel %vm291, %v273, 0
    %v458 = vsel %vm291, %v274, 0
    %v461 = vsel %vm291, %v275, 0
    %v464 = vsel %vm291, %v276, 0
    %v467 = vsel %vm291, %v277, 0
    %v470 = vsel %vm291, %v278, 0
    %v473 = vsel %vm291, %v279, 0
    %v476 = vsel %vm291, %v280, 0
    %v479 = vsel %vm291, %v281, 0
    %v482 = vsel %vm291, %v282, 0
    %484 = vmatpush.msra.mxu0 0.0
    %485 = vmatpush.msra.mxu0 0.0
    %486 = vmatpush.msra.mxu0 0.0
    %487 = vmatpush.msra.mxu0 0.0
    %488 = vmatpush.msra.mxu0 0.0
    %489 = vmatpush.msra.mxu0 0.0
    %490 = vmatpush.msra.mxu0 0.0
    %491 = vmatpush.msra.mxu0 0.0
    %492 = vmatpush.msra.mxu0 0.0
    %493 = vmatpush.msra.mxu0 0.0
    %494 = vmatpush.msra.mxu0 0.0
    %495 = vmatpush.msra.mxu0 0.0
    %496 = vmatpush.msra.mxu0 %v286
    %497 = vmatpush.msra.mxu0 %v285
    %498 = vmatpush.msra.mxu0 %v284
    %499 = vmatpush.msra.mxu0 %v283
    %500 = vmatmul.f32.gmra.mxu0 %v293
    %v501 = vpop.f32.mrf.mxu0
    %v502 = vadd.f32 %v289, %v501
    %503 = vmatmul.f32.gmra.mxu0 %v296
    %v504 = vpop.f32.mrf.mxu0
    %v505 = vadd.f32 %v289, %v504
    %506 = vmatmul.f32.gmra.mxu0 %v299
    %v507 = vpop.f32.mrf.mxu0
    %v508 = vadd.f32 %v289, %v507
    %509 = vmatmul.f32.gmra.mxu0 %v302
    %v510 = vpop.f32.mrf.mxu0
    %v511 = vadd.f32 %v289, %v510
    %512 = vmatmul.f32.gmra.mxu0 %v305
    %v513 = vpop.f32.mrf.mxu0
    %v514 = vadd.f32 %v289, %v513
    %515 = vmatmul.f32.gmra.mxu0 %v308
    %v516 = vpop.f32.mrf.mxu0
    %v517 = vadd.f32 %v289, %v516
    %518 = vmatmul.f32.gmra.mxu0 %v311
    %v519 = vpop.f32.mrf.mxu0
    %v520 = vadd.f32 %v289, %v519
    %521 = vmatmul.f32.gmra.mxu0 %v314
    %v522 = vpop.f32.mrf.mxu0
    %v523 = vadd.f32 %v289, %v522
    %524 = vmatmul.f32.gmra.mxu0 %v317
    %v525 = vpop.f32.mrf.mxu0
    %v526 = vadd.f32 %v289, %v525
    %527 = vmatmul.f32.gmra.mxu0 %v320
    %v528 = vpop.f32.mrf.mxu0
    %v529 = vadd.f32 %v289, %v528
    %530 = vmatmul.f32.gmra.mxu0 %v323
    %v531 = vpop.f32.mrf.mxu0
    %v532 = vadd.f32 %v289, %v531
    %533 = vmatmul.f32.gmra.mxu0 %v326
    %v534 = vpop.f32.mrf.mxu0
    %v535 = vadd.f32 %v289, %v534
    %536 = vmatmul.f32.gmra.mxu0 %v329
    %v537 = vpop.f32.mrf.mxu0
    %v538 = vadd.f32 %v289, %v537
    %539 = vmatmul.f32.gmra.mxu0 %v332
    %v540 = vpop.f32.mrf.mxu0
    %v541 = vadd.f32 %v289, %v540
    %542 = vmatmul.f32.gmra.mxu0 %v335
    %v543 = vpop.f32.mrf.mxu0
    %v544 = vadd.f32 %v289, %v543
    %545 = vmatmul.f32.gmra.mxu0 %v338
    %v546 = vpop.f32.mrf.mxu0
    %v547 = vadd.f32 %v289, %v546
    %548 = vmatmul.f32.gmra.mxu0 %v341
    %v549 = vpop.f32.mrf.mxu0
    %v550 = vadd.f32 %v289, %v549
    %551 = vmatmul.f32.gmra.mxu0 %v344
    %v552 = vpop.f32.mrf.mxu0
    %v553 = vadd.f32 %v289, %v552
    %554 = vmatmul.f32.gmra.mxu0 %v347
    %v555 = vpop.f32.mrf.mxu0
    %v556 = vadd.f32 %v289, %v555
    %557 = vmatmul.f32.gmra.mxu0 %v350
    %v558 = vpop.f32.mrf.mxu0
    %v559 = vadd.f32 %v289, %v558
    %560 = vmatmul.f32.gmra.mxu0 %v353
    %v561 = vpop.f32.mrf.mxu0
    %v562 = vadd.f32 %v289, %v561
    %563 = vmatmul.f32.gmra.mxu0 %v356
    %v564 = vpop.f32.mrf.mxu0
    %v565 = vadd.f32 %v289, %v564
    %566 = vmatmul.f32.gmra.mxu0 %v359
    %v567 = vpop.f32.mrf.mxu0
    %v568 = vadd.f32 %v289, %v567
    %569 = vmatmul.f32.gmra.mxu0 %v362
    %v570 = vpop.f32.mrf.mxu0
    %v571 = vadd.f32 %v289, %v570
    %572 = vmatmul.f32.gmra.mxu0 %v365
    %v573 = vpop.f32.mrf.mxu0
    %v574 = vadd.f32 %v289, %v573
    %575 = vmatmul.f32.gmra.mxu0 %v368
    %v576 = vpop.f32.mrf.mxu0
    %v577 = vadd.f32 %v289, %v576
    %578 = vmatmul.f32.gmra.mxu0 %v371
    %v579 = vpop.f32.mrf.mxu0
    %v580 = vadd.f32 %v289, %v579
    %581 = vmatmul.f32.gmra.mxu0 %v374
    %v582 = vpop.f32.mrf.mxu0
    %v583 = vadd.f32 %v289, %v582
    %584 = vmatmul.f32.gmra.mxu0 %v377
    %v585 = vpop.f32.mrf.mxu0
    %v586 = vadd.f32 %v289, %v585
    %587 = vmatmul.f32.gmra.mxu0 %v380
    %v588 = vpop.f32.mrf.mxu0
    %v589 = vadd.f32 %v289, %v588
    %590 = vmatmul.f32.gmra.mxu0 %v383
    %v591 = vpop.f32.mrf.mxu0
    %v592 = vadd.f32 %v289, %v591
    %593 = vmatmul.f32.gmra.mxu0 %v386
    %v594 = vpop.f32.mrf.mxu0
    %v595 = vadd.f32 %v289, %v594
    %596 = vmatmul.f32.gmra.mxu0 %v389
    %v597 = vpop.f32.mrf.mxu0
    %v598 = vadd.f32 %v289, %v597
    %599 = vmatmul.f32.gmra.mxu0 %v392
    %v600 = vpop.f32.mrf.mxu0
    %v601 = vadd.f32 %v289, %v600
    %602 = vmatmul.f32.gmra.mxu0 %v395
    %v603 = vpop.f32.mrf.mxu0
    %v604 = vadd.f32 %v289, %v603
    %605 = vmatmul.f32.gmra.mxu0 %v398
    %v606 = vpop.f32.mrf.mxu0
    %v607 = vadd.f32 %v289, %v606
    %608 = vmatmul.f32.gmra.mxu0 %v401
    %v609 = vpop.f32.mrf.mxu0
    %v610 = vadd.f32 %v289, %v609
    %611 = vmatmul.f32.gmra.mxu0 %v404
    %v612 = vpop.f32.mrf.mxu0
    %v613 = vadd.f32 %v289, %v612
    %614 = vmatmul.f32.gmra.mxu0 %v407
    %v615 = vpop.f32.mrf.mxu0
    %v616 = vadd.f32 %v289, %v615
    %617 = vmatmul.f32.gmra.mxu0 %v410
    %v618 = vpop.f32.mrf.mxu0
    %v619 = vadd.f32 %v289, %v618
    %620 = vmatmul.f32.gmra.mxu0 %v413
    %v621 = vpop.f32.mrf.mxu0
    %v622 = vadd.f32 %v289, %v621
    %623 = vmatmul.f32.gmra.mxu0 %v416
    %v624 = vpop.f32.mrf.mxu0
    %v625 = vadd.f32 %v289, %v624
    %626 = vmatmul.f32.gmra.mxu0 %v419
    %v627 = vpop.f32.mrf.mxu0
    %v628 = vadd.f32 %v289, %v627
    %629 = vmatmul.f32.gmra.mxu0 %v422
    %v630 = vpop.f32.mrf.mxu0
    %v631 = vadd.f32 %v289, %v630
    %632 = vmatmul.f32.gmra.mxu0 %v425
    %v633 = vpop.f32.mrf.mxu0
    %v634 = vadd.f32 %v289, %v633
    %635 = vmatmul.f32.gmra.mxu0 %v428
    %v636 = vpop.f32.mrf.mxu0
    %v637 = vadd.f32 %v289, %v636
    %638 = vmatmul.f32.gmra.mxu0 %v431
    %v639 = vpop.f32.mrf.mxu0
    %v640 = vadd.f32 %v289, %v639
    %641 = vmatmul.f32.gmra.mxu0 %v434
    %v642 = vpop.f32.mrf.mxu0
    %v643 = vadd.f32 %v289, %v642
    %644 = vmatmul.f32.gmra.mxu0 %v437
    %v645 = vpop.f32.mrf.mxu0
    %v646 = vadd.f32 %v289, %v645
    %647 = vmatmul.f32.gmra.mxu0 %v440
    %v648 = vpop.f32.mrf.mxu0
    %v649 = vadd.f32 %v289, %v648
    %650 = vmatmul.f32.gmra.mxu0 %v443
    %v651 = vpop.f32.mrf.mxu0
    %v652 = vadd.f32 %v289, %v651
    %653 = vmatmul.f32.gmra.mxu0 %v446
    %v654 = vpop.f32.mrf.mxu0
    %v655 = vadd.f32 %v289, %v654
    %656 = vmatmul.f32.gmra.mxu0 %v449
    %v657 = vpop.f32.mrf.mxu0
    %v658 = vadd.f32 %v289, %v657
    %659 = vmatmul.f32.gmra.mxu0 %v452
    %v660 = vpop.f32.mrf.mxu0
    %v661 = vadd.f32 %v289, %v660
    %662 = vmatmul.f32.gmra.mxu0 %v455
    %v663 = vpop.f32.mrf.mxu0
    %v664 = vadd.f32 %v289, %v663
    %665 = vmatmul.f32.gmra.mxu0 %v458
    %v666 = vpop.f32.mrf.mxu0
    %v667 = vadd.f32 %v289, %v666
    %668 = vmatmul.f32.gmra.mxu0 %v461
    %v669 = vpop.f32.mrf.mxu0
    %v670 = vadd.f32 %v289, %v669
    %671 = vmatmul.f32.gmra.mxu0 %v464
    %v672 = vpop.f32.mrf.mxu0
    %v673 = vadd.f32 %v289, %v672
    %674 = vmatmul.f32.gmra.mxu0 %v467
    %v675 = vpop.f32.mrf.mxu0
    %v676 = vadd.f32 %v289, %v675
    %677 = vmatmul.f32.gmra.mxu0 %v470
    %v678 = vpop.f32.mrf.mxu0
    %v679 = vadd.f32 %v289, %v678
    %680 = vmatmul.f32.gmra.mxu0 %v473
    %v681 = vpop.f32.mrf.mxu0
    %v682 = vadd.f32 %v289, %v681
    %683 = vmatmul.f32.gmra.mxu0 %v476
    %v684 = vpop.f32.mrf.mxu0
    %v685 = vadd.f32 %v289, %v684
    %686 = vmatmul.f32.gmra.mxu0 %v479
    %v687 = vpop.f32.mrf.mxu0
    %v688 = vadd.f32 %v289, %v687
    %689 = vmatmul.f32.gmra.mxu0 %v482
    %v690 = vpop.f32.mrf.mxu0
    %v691 = vadd.f32 %v289, %v690
    %692 = vdwg.mxu0
    %vm693 = vcmp.gt.f32.partialorder %v502, 0.0
    %vm694 = vcmp.gt.f32.partialorder %v505, 0.0
    %vm695 = vcmp.gt.f32.partialorder %v508, 0.0
    %vm696 = vcmp.gt.f32.partialorder %v511, 0.0
    %vm697 = vcmp.gt.f32.partialorder %v514, 0.0
    %vm698 = vcmp.gt.f32.partialorder %v517, 0.0
    %vm699 = vcmp.gt.f32.partialorder %v520, 0.0
    %vm700 = vcmp.gt.f32.partialorder %v523, 0.0
    %vm701 = vcmp.gt.f32.partialorder %v526, 0.0
    %vm702 = vcmp.gt.f32.partialorder %v529, 0.0
    %vm703 = vcmp.gt.f32.partialorder %v532, 0.0
    %vm704 = vcmp.gt.f32.partialorder %v535, 0.0
    %vm705 = vcmp.gt.f32.partialorder %v538, 0.0
    %vm706 = vcmp.gt.f32.partialorder %v541, 0.0
    %vm707 = vcmp.gt.f32.partialorder %v544, 0.0
    %vm708 = vcmp.gt.f32.partialorder %v547, 0.0
    %vm709 = vcmp.gt.f32.partialorder %v550, 0.0
    %vm710 = vcmp.gt.f32.partialorder %v553, 0.0
    %vm711 = vcmp.gt.f32.partialorder %v556, 0.0
    %vm712 = vcmp.gt.f32.partialorder %v559, 0.0
    %vm713 = vcmp.gt.f32.partialorder %v562, 0.0
    %vm714 = vcmp.gt.f32.partialorder %v565, 0.0
    %vm715 = vcmp.gt.f32.partialorder %v568, 0.0
    %vm716 = vcmp.gt.f32.partialorder %v571, 0.0
    %vm717 = vcmp.gt.f32.partialorder %v574, 0.0
    %vm718 = vcmp.gt.f32.partialorder %v577, 0.0
    %vm719 = vcmp.gt.f32.partialorder %v580, 0.0
    %vm720 = vcmp.gt.f32.partialorder %v583, 0.0
    %vm721 = vcmp.gt.f32.partialorder %v586, 0.0
    %vm722 = vcmp.gt.f32.partialorder %v589, 0.0
    %vm723 = vcmp.gt.f32.partialorder %v592, 0.0
    %vm724 = vcmp.gt.f32.partialorder %v595, 0.0
    %vm725 = vcmp.gt.f32.partialorder %v598, 0.0
    %vm726 = vcmp.gt.f32.partialorder %v601, 0.0
    %vm727 = vcmp.gt.f32.partialorder %v604, 0.0
    %vm728 = vcmp.gt.f32.partialorder %v607, 0.0
    %vm729 = vcmp.gt.f32.partialorder %v610, 0.0
    %vm730 = vcmp.gt.f32.partialorder %v613, 0.0
    %vm731 = vcmp.gt.f32.partialorder %v616, 0.0
    %vm732 = vcmp.gt.f32.partialorder %v619, 0.0
    %vm733 = vcmp.gt.f32.partialorder %v622, 0.0
    %vm734 = vcmp.gt.f32.partialorder %v625, 0.0
    %vm735 = vcmp.gt.f32.partialorder %v628, 0.0
    %vm736 = vcmp.gt.f32.partialorder %v631, 0.0
    %vm737 = vcmp.gt.f32.partialorder %v634, 0.0
    %vm738 = vcmp.gt.f32.partialorder %v637, 0.0
    %vm739 = vcmp.gt.f32.partialorder %v640, 0.0
    %vm740 = vcmp.gt.f32.partialorder %v643, 0.0
    %vm741 = vcmp.gt.f32.partialorder %v646, 0.0
    %vm742 = vcmp.gt.f32.partialorder %v649, 0.0
    %vm743 = vcmp.gt.f32.partialorder %v652, 0.0
    %vm744 = vcmp.gt.f32.partialorder %v655, 0.0
    %vm745 = vcmp.gt.f32.partialorder %v658, 0.0
    %vm746 = vcmp.gt.f32.partialorder %v661, 0.0
    %vm747 = vcmp.gt.f32.partialorder %v664, 0.0
    %vm748 = vcmp.gt.f32.partialorder %v667, 0.0
    %vm749 = vcmp.gt.f32.partialorder %v670, 0.0
    %vm750 = vcmp.gt.f32.partialorder %v673, 0.0
    %vm751 = vcmp.gt.f32.partialorder %v676, 0.0
    %vm752 = vcmp.gt.f32.partialorder %v679, 0.0
    %vm753 = vcmp.gt.f32.partialorder %v682, 0.0
    %vm754 = vcmp.gt.f32.partialorder %v685, 0.0
    %vm755 = vcmp.gt.f32.partialorder %v688, 0.0
    %vm756 = vcmp.gt.f32.partialorder %v691, 0.0
    %v757 = vmul.f32 %v502, 1.442695
    %v758 = vpow.pop %v757
    %v759 = vmul.f32 %v505, 1.442695
    %v760 = vpow.pop %v759
    %v761 = vmul.f32 %v508, 1.442695
    %v762 = vpow.pop %v761
    %v763 = vmul.f32 %v511, 1.442695
    %v764 = vpow.pop %v763
    %v765 = vmul.f32 %v514, 1.442695
    %v766 = vpow.pop %v765
    %v767 = vmul.f32 %v517, 1.442695
    %v768 = vpow.pop %v767
    %v769 = vmul.f32 %v520, 1.442695
    %v770 = vpow.pop %v769
    %v771 = vmul.f32 %v523, 1.442695
    %v772 = vpow.pop %v771
    %v773 = vmul.f32 %v526, 1.442695
    %v774 = vpow.pop %v773
    %v775 = vmul.f32 %v529, 1.442695
    %v776 = vpow.pop %v775
    %v777 = vmul.f32 %v532, 1.442695
    %v778 = vpow.pop %v777
    %v779 = vmul.f32 %v535, 1.442695
    %v780 = vpow.pop %v779
    %v781 = vmul.f32 %v538, 1.442695
    %v782 = vpow.pop %v781
    %v783 = vmul.f32 %v541, 1.442695
    %v784 = vpow.pop %v783
    %v785 = vmul.f32 %v544, 1.442695
    %v786 = vpow.pop %v785
    %v787 = vmul.f32 %v547, 1.442695
    %v788 = vpow.pop %v787
    %v789 = vmul.f32 %v550, 1.442695
    %v790 = vpow.pop %v789
    %v791 = vmul.f32 %v553, 1.442695
    %v792 = vpow.pop %v791
    %v793 = vmul.f32 %v556, 1.442695
    %v794 = vpow.pop %v793
    %v795 = vmul.f32 %v559, 1.442695
    %v796 = vpow.pop %v795
    %v797 = vmul.f32 %v562, 1.442695
    %v798 = vpow.pop %v797
    %v799 = vmul.f32 %v565, 1.442695
    %v800 = vpow.pop %v799
    %v801 = vmul.f32 %v568, 1.442695
    %v802 = vpow.pop %v801
    %v803 = vmul.f32 %v571, 1.442695
    %v804 = vpow.pop %v803
    %v805 = vmul.f32 %v574, 1.442695
    %v806 = vpow.pop %v805
    %v807 = vmul.f32 %v577, 1.442695
    %v808 = vpow.pop %v807
    %v809 = vmul.f32 %v580, 1.442695
    %v810 = vpow.pop %v809
    %v811 = vmul.f32 %v583, 1.442695
    %v812 = vpow.pop %v811
    %v813 = vmul.f32 %v586, 1.442695
    %v814 = vpow.pop %v813
    %v815 = vmul.f32 %v589, 1.442695
    %v816 = vpow.pop %v815
    %v817 = vmul.f32 %v592, 1.442695
    %v818 = vpow.pop %v817
    %v819 = vmul.f32 %v595, 1.442695
    %v820 = vpow.pop %v819
    %v821 = vmul.f32 %v598, 1.442695
    %v822 = vpow.pop %v821
    %v823 = vmul.f32 %v601, 1.442695
    %v824 = vpow.pop %v823
    %v825 = vmul.f32 %v604, 1.442695
    %v826 = vpow.pop %v825
    %v827 = vmul.f32 %v607, 1.442695
    %v828 = vpow.pop %v827
    %v829 = vmul.f32 %v610, 1.442695
    %v830 = vpow.pop %v829
    %v831 = vmul.f32 %v613, 1.442695
    %v832 = vpow.pop %v831
    %v833 = vmul.f32 %v616, 1.442695
    %v834 = vpow.pop %v833
    %v835 = vmul.f32 %v619, 1.442695
    %v836 = vpow.pop %v835
    %v837 = vmul.f32 %v622, 1.442695
    %v838 = vpow.pop %v837
    %v839 = vmul.f32 %v625, 1.442695
    %v840 = vpow.pop %v839
    %v841 = vmul.f32 %v628, 1.442695
    %v842 = vpow.pop %v841
    %v843 = vmul.f32 %v631, 1.442695
    %v844 = vpow.pop %v843
    %v845 = vmul.f32 %v634, 1.442695
    %v846 = vpow.pop %v845
    %v847 = vmul.f32 %v637, 1.442695
    %v848 = vpow.pop %v847
    %v849 = vmul.f32 %v640, 1.442695
    %v850 = vpow.pop %v849
    %v851 = vmul.f32 %v643, 1.442695
    %v852 = vpow.pop %v851
    %v853 = vmul.f32 %v646, 1.442695
    %v854 = vpow.pop %v853
    %v855 = vmul.f32 %v649, 1.442695
    %v856 = vpow.pop %v855
    %v857 = vmul.f32 %v652, 1.442695
    %v858 = vpow.pop %v857
    %v859 = vmul.f32 %v655, 1.442695
    %v860 = vpow.pop %v859
    %v861 = vmul.f32 %v658, 1.442695
    %v862 = vpow.pop %v861
    %v863 = vmul.f32 %v661, 1.442695
    %v864 = vpow.pop %v863
    %v865 = vmul.f32 %v664, 1.442695
    %v866 = vpow.pop %v865
    %v867 = vmul.f32 %v667, 1.442695
    %v868 = vpow.pop %v867
    %v869 = vmul.f32 %v670, 1.442695
    %v870 = vpow.pop %v869
    %v871 = vmul.f32 %v673, 1.442695
    %v872 = vpow.pop %v871
    %v873 = vmul.f32 %v676, 1.442695
    %v874 = vpow.pop %v873
    %v875 = vmul.f32 %v679, 1.442695
    %v876 = vpow.pop %v875
    %v877 = vmul.f32 %v682, 1.442695
    %v878 = vpow.pop %v877
    %v879 = vmul.f32 %v685, 1.442695
    %v880 = vpow.pop %v879
    %v881 = vmul.f32 %v688, 1.442695
    %v882 = vpow.pop %v881
    %v883 = vmul.f32 %v691, 1.442695
    %v884 = vpow.pop %v883
    %v885 = vsub.f32 %v758, 1.0
    %v886 = vsub.f32 %v760, 1.0
    %v887 = vsub.f32 %v762, 1.0
    %v888 = vsub.f32 %v764, 1.0
    %v889 = vsub.f32 %v766, 1.0
    %v890 = vsub.f32 %v768, 1.0
    %v891 = vsub.f32 %v770, 1.0
    %v892 = vsub.f32 %v772, 1.0
    %v893 = vsub.f32 %v774, 1.0
    %v894 = vsub.f32 %v776, 1.0
    %v895 = vsub.f32 %v778, 1.0
    %v896 = vsub.f32 %v780, 1.0
    %v897 = vsub.f32 %v782, 1.0
    %v898 = vsub.f32 %v784, 1.0
    %v899 = vsub.f32 %v786, 1.0
    %v900 = vsub.f32 %v788, 1.0
    %v901 = vsub.f32 %v790, 1.0
    %v902 = vsub.f32 %v792, 1.0
    %v903 = vsub.f32 %v794, 1.0
    %v904 = vsub.f32 %v796, 1.0
    %v905 = vsub.f32 %v798, 1.0
    %v906 = vsub.f32 %v800, 1.0
    %v907 = vsub.f32 %v802, 1.0
    %v908 = vsub.f32 %v804, 1.0
    %v909 = vsub.f32 %v806, 1.0
    %v910 = vsub.f32 %v808, 1.0
    %v911 = vsub.f32 %v810, 1.0
    %v912 = vsub.f32 %v812, 1.0
    %v913 = vsub.f32 %v814, 1.0
    %v914 = vsub.f32 %v816, 1.0
    %v915 = vsub.f32 %v818, 1.0
    %v916 = vsub.f32 %v820, 1.0
    %v917 = vsub.f32 %v822, 1.0
    %v918 = vsub.f32 %v824, 1.0
    %v919 = vsub.f32 %v826, 1.0
    %v920 = vsub.f32 %v828, 1.0
    %v921 = vsub.f32 %v830, 1.0
    %v922 = vsub.f32 %v832, 1.0
    %v923 = vsub.f32 %v834, 1.0
    %v924 = vsub.f32 %v836, 1.0
    %v925 = vsub.f32 %v838, 1.0
    %v926 = vsub.f32 %v840, 1.0
    %v927 = vsub.f32 %v842, 1.0
    %v928 = vsub.f32 %v844, 1.0
    %v929 = vsub.f32 %v846, 1.0
    %v930 = vsub.f32 %v848, 1.0
    %v931 = vsub.f32 %v850, 1.0
    %v932 = vsub.f32 %v852, 1.0
    %v933 = vsub.f32 %v854, 1.0
    %v934 = vsub.f32 %v856, 1.0
    %v935 = vsub.f32 %v858, 1.0
    %v936 = vsub.f32 %v860, 1.0
    %v937 = vsub.f32 %v862, 1.0
    %v938 = vsub.f32 %v864, 1.0
    %v939 = vsub.f32 %v866, 1.0
    %v940 = vsub.f32 %v868, 1.0
    %v941 = vsub.f32 %v870, 1.0
    %v942 = vsub.f32 %v872, 1.0
    %v943 = vsub.f32 %v874, 1.0
    %v944 = vsub.f32 %v876, 1.0
    %v945 = vsub.f32 %v878, 1.0
    %v946 = vsub.f32 %v880, 1.0
    %v947 = vsub.f32 %v882, 1.0
    %v948 = vsub.f32 %v884, 1.0
    %v949 = vsel %vm693, %v502, %v885
    %v950 = vsel %vm694, %v505, %v886
    %v951 = vsel %vm695, %v508, %v887
    %v952 = vsel %vm696, %v511, %v888
    %v953 = vsel %vm697, %v514, %v889
    %v954 = vsel %vm698, %v517, %v890
    %v955 = vsel %vm699, %v520, %v891
    %v956 = vsel %vm700, %v523, %v892
    %v957 = vsel %vm701, %v526, %v893
    %v958 = vsel %vm702, %v529, %v894
    %v959 = vsel %vm703, %v532, %v895
    %v960 = vsel %vm704, %v535, %v896
    %v961 = vsel %vm705, %v538, %v897
    %v962 = vsel %vm706, %v541, %v898
    %v963 = vsel %vm707, %v544, %v899
    %v964 = vsel %vm708, %v547, %v900
    %v965 = vsel %vm709, %v550, %v901
    %v966 = vsel %vm710, %v553, %v902
    %v967 = vsel %vm711, %v556, %v903
    %v968 = vsel %vm712, %v559, %v904
    %v969 = vsel %vm713, %v562, %v905
    %v970 = vsel %vm714, %v565, %v906
    %v971 = vsel %vm715, %v568, %v907
    %v972 = vsel %vm716, %v571, %v908
    %v973 = vsel %vm717, %v574, %v909
    %v974 = vsel %vm718, %v577, %v910
    %v975 = vsel %vm719, %v580, %v911
    %v976 = vsel %vm720, %v583, %v912
    %v977 = vsel %vm721, %v586, %v913
    %v978 = vsel %vm722, %v589, %v914
    %v979 = vsel %vm723, %v592, %v915
    %v980 = vsel %vm724, %v595, %v916
    %v981 = vsel %vm725, %v598, %v917
    %v982 = vsel %vm726, %v601, %v918
    %v983 = vsel %vm727, %v604, %v919
    %v984 = vsel %vm728, %v607, %v920
    %v985 = vsel %vm729, %v610, %v921
    %v986 = vsel %vm730, %v613, %v922
    %v987 = vsel %vm731, %v616, %v923
    %v988 = vsel %vm732, %v619, %v924
    %v989 = vsel %vm733, %v622, %v925
    %v990 = vsel %vm734, %v625, %v926
    %v991 = vsel %vm735, %v628, %v927
    %v992 = vsel %vm736, %v631, %v928
    %v993 = vsel %vm737, %v634, %v929
    %v994 = vsel %vm738, %v637, %v930
    %v995 = vsel %vm739, %v640, %v931
    %v996 = vsel %vm740, %v643, %v932
    %v997 = vsel %vm741, %v646, %v933
    %v998 = vsel %vm742, %v649, %v934
    %v999 = vsel %vm743, %v652, %v935
    %v1000 = vsel %vm744, %v655, %v936
    %v1001 = vsel %vm745, %v658, %v937
    %v1002 = vsel %vm746, %v661, %v938
    %v1003 = vsel %vm747, %v664, %v939
    %v1004 = vsel %vm748, %v667, %v940
    %v1005 = vsel %vm749, %v670, %v941
    %v1006 = vsel %vm750, %v673, %v942
    %v1007 = vsel %vm751, %v676, %v943
    %v1008 = vsel %vm752, %v679, %v944
    %v1009 = vsel %vm753, %v682, %v945
    %v1010 = vsel %vm754, %v685, %v946
    %v1011 = vsel %vm755, %v688, %v947
    %v1012 = vsel %vm756, %v691, %v948
    %v1013 = vrot.slane %v949, 4
    %v1014 = vadd.f32 %v949, %v1013
    %v1015 = vrot.slane %v1014, 2
    %v1016 = vadd.f32 %v1014, %v1015
    %v1017 = vrot.slane %v1016, 1
    %v1018 = vadd.f32 %v1016, %v1017
    %v1019 = vrot.slane %v950, 4
    %v1020 = vadd.f32 %v950, %v1019
    %v1021 = vrot.slane %v1020, 2
    %v1022 = vadd.f32 %v1020, %v1021
    %v1023 = vrot.slane %v1022, 1
    %v1024 = vadd.f32 %v1022, %v1023
    %v1025 = vrot.slane %v951, 4
    %v1026 = vadd.f32 %v951, %v1025
    %v1027 = vrot.slane %v1026, 2
    %v1028 = vadd.f32 %v1026, %v1027
    %v1029 = vrot.slane %v1028, 1
    %v1030 = vadd.f32 %v1028, %v1029
    %v1031 = vrot.slane %v952, 4
    %v1032 = vadd.f32 %v952, %v1031
    %v1033 = vrot.slane %v1032, 2
    %v1034 = vadd.f32 %v1032, %v1033
    %v1035 = vrot.slane %v1034, 1
    %v1036 = vadd.f32 %v1034, %v1035
    %v1037 = vrot.slane %v953, 4
    %v1038 = vadd.f32 %v953, %v1037
    %v1039 = vrot.slane %v1038, 2
    %v1040 = vadd.f32 %v1038, %v1039
    %v1041 = vrot.slane %v1040, 1
    %v1042 = vadd.f32 %v1040, %v1041
    %v1043 = vrot.slane %v954, 4
    %v1044 = vadd.f32 %v954, %v1043
    %v1045 = vrot.slane %v1044, 2
    %v1046 = vadd.f32 %v1044, %v1045
    %v1047 = vrot.slane %v1046, 1
    %v1048 = vadd.f32 %v1046, %v1047
    %v1049 = vrot.slane %v955, 4
    %v1050 = vadd.f32 %v955, %v1049
    %v1051 = vrot.slane %v1050, 2
    %v1052 = vadd.f32 %v1050, %v1051
    %v1053 = vrot.slane %v1052, 1
    %v1054 = vadd.f32 %v1052, %v1053
    %v1055 = vrot.slane %v956, 4
    %v1056 = vadd.f32 %v956, %v1055
    %v1057 = vrot.slane %v1056, 2
    %v1058 = vadd.f32 %v1056, %v1057
    %v1059 = vrot.slane %v1058, 1
    %v1060 = vadd.f32 %v1058, %v1059
    %v1061 = vrot.slane %v957, 4
    %v1062 = vadd.f32 %v957, %v1061
    %v1063 = vrot.slane %v1062, 2
    %v1064 = vadd.f32 %v1062, %v1063
    %v1065 = vrot.slane %v1064, 1
    %v1066 = vadd.f32 %v1064, %v1065
    %v1067 = vrot.slane %v958, 4
    %v1068 = vadd.f32 %v958, %v1067
    %v1069 = vrot.slane %v1068, 2
    %v1070 = vadd.f32 %v1068, %v1069
    %v1071 = vrot.slane %v1070, 1
    %v1072 = vadd.f32 %v1070, %v1071
    %v1073 = vrot.slane %v959, 4
    %v1074 = vadd.f32 %v959, %v1073
    %v1075 = vrot.slane %v1074, 2
    %v1076 = vadd.f32 %v1074, %v1075
    %v1077 = vrot.slane %v1076, 1
    %v1078 = vadd.f32 %v1076, %v1077
    %v1079 = vrot.slane %v960, 4
    %v1080 = vadd.f32 %v960, %v1079
    %v1081 = vrot.slane %v1080, 2
    %v1082 = vadd.f32 %v1080, %v1081
    %v1083 = vrot.slane %v1082, 1
    %v1084 = vadd.f32 %v1082, %v1083
    %v1085 = vrot.slane %v961, 4
    %v1086 = vadd.f32 %v961, %v1085
    %v1087 = vrot.slane %v1086, 2
    %v1088 = vadd.f32 %v1086, %v1087
    %v1089 = vrot.slane %v1088, 1
    %v1090 = vadd.f32 %v1088, %v1089
    %v1091 = vrot.slane %v962, 4
    %v1092 = vadd.f32 %v962, %v1091
    %v1093 = vrot.slane %v1092, 2
    %v1094 = vadd.f32 %v1092, %v1093
    %v1095 = vrot.slane %v1094, 1
    %v1096 = vadd.f32 %v1094, %v1095
    %v1097 = vrot.slane %v963, 4
    %v1098 = vadd.f32 %v963, %v1097
    %v1099 = vrot.slane %v1098, 2
    %v1100 = vadd.f32 %v1098, %v1099
    %v1101 = vrot.slane %v1100, 1
    %v1102 = vadd.f32 %v1100, %v1101
    %v1103 = vrot.slane %v964, 4
    %v1104 = vadd.f32 %v964, %v1103
    %v1105 = vrot.slane %v1104, 2
    %v1106 = vadd.f32 %v1104, %v1105
    %v1107 = vrot.slane %v1106, 1
    %v1108 = vadd.f32 %v1106, %v1107
    %v1109 = vrot.slane %v965, 4
    %v1110 = vadd.f32 %v965, %v1109
    %v1111 = vrot.slane %v1110, 2
    %v1112 = vadd.f32 %v1110, %v1111
    %v1113 = vrot.slane %v1112, 1
    %v1114 = vadd.f32 %v1112, %v1113
    %v1115 = vrot.slane %v966, 4
    %v1116 = vadd.f32 %v966, %v1115
    %v1117 = vrot.slane %v1116, 2
    %v1118 = vadd.f32 %v1116, %v1117
    %v1119 = vrot.slane %v1118, 1
    %v1120 = vadd.f32 %v1118, %v1119
    %v1121 = vrot.slane %v967, 4
    %v1122 = vadd.f32 %v967, %v1121
    %v1123 = vrot.slane %v1122, 2
    %v1124 = vadd.f32 %v1122, %v1123
    %v1125 = vrot.slane %v1124, 1
    %v1126 = vadd.f32 %v1124, %v1125
    %v1127 = vrot.slane %v968, 4
    %v1128 = vadd.f32 %v968, %v1127
    %v1129 = vrot.slane %v1128, 2
    %v1130 = vadd.f32 %v1128, %v1129
    %v1131 = vrot.slane %v1130, 1
    %v1132 = vadd.f32 %v1130, %v1131
    %v1133 = vrot.slane %v969, 4
    %v1134 = vadd.f32 %v969, %v1133
    %v1135 = vrot.slane %v1134, 2
    %v1136 = vadd.f32 %v1134, %v1135
    %v1137 = vrot.slane %v1136, 1
    %v1138 = vadd.f32 %v1136, %v1137
    %v1139 = vrot.slane %v970, 4
    %v1140 = vadd.f32 %v970, %v1139
    %v1141 = vrot.slane %v1140, 2
    %v1142 = vadd.f32 %v1140, %v1141
    %v1143 = vrot.slane %v1142, 1
    %v1144 = vadd.f32 %v1142, %v1143
    %v1145 = vrot.slane %v971, 4
    %v1146 = vadd.f32 %v971, %v1145
    %v1147 = vrot.slane %v1146, 2
    %v1148 = vadd.f32 %v1146, %v1147
    %v1149 = vrot.slane %v1148, 1
    %v1150 = vadd.f32 %v1148, %v1149
    %v1151 = vrot.slane %v972, 4
    %v1152 = vadd.f32 %v972, %v1151
    %v1153 = vrot.slane %v1152, 2
    %v1154 = vadd.f32 %v1152, %v1153
    %v1155 = vrot.slane %v1154, 1
    %v1156 = vadd.f32 %v1154, %v1155
    %v1157 = vrot.slane %v973, 4
    %v1158 = vadd.f32 %v973, %v1157
    %v1159 = vrot.slane %v1158, 2
    %v1160 = vadd.f32 %v1158, %v1159
    %v1161 = vrot.slane %v1160, 1
    %v1162 = vadd.f32 %v1160, %v1161
    %v1163 = vrot.slane %v974, 4
    %v1164 = vadd.f32 %v974, %v1163
    %v1165 = vrot.slane %v1164, 2
    %v1166 = vadd.f32 %v1164, %v1165
    %v1167 = vrot.slane %v1166, 1
    %v1168 = vadd.f32 %v1166, %v1167
    %v1169 = vrot.slane %v975, 4
    %v1170 = vadd.f32 %v975, %v1169
    %v1171 = vrot.slane %v1170, 2
    %v1172 = vadd.f32 %v1170, %v1171
    %v1173 = vrot.slane %v1172, 1
    %v1174 = vadd.f32 %v1172, %v1173
    %v1175 = vrot.slane %v976, 4
    %v1176 = vadd.f32 %v976, %v1175
    %v1177 = vrot.slane %v1176, 2
    %v1178 = vadd.f32 %v1176, %v1177
    %v1179 = vrot.slane %v1178, 1
    %v1180 = vadd.f32 %v1178, %v1179
    %v1181 = vrot.slane %v977, 4
    %v1182 = vadd.f32 %v977, %v1181
    %v1183 = vrot.slane %v1182, 2
    %v1184 = vadd.f32 %v1182, %v1183
    %v1185 = vrot.slane %v1184, 1
    %v1186 = vadd.f32 %v1184, %v1185
    %v1187 = vrot.slane %v978, 4
    %v1188 = vadd.f32 %v978, %v1187
    %v1189 = vrot.slane %v1188, 2
    %v1190 = vadd.f32 %v1188, %v1189
    %v1191 = vrot.slane %v1190, 1
    %v1192 = vadd.f32 %v1190, %v1191
    %v1193 = vrot.slane %v979, 4
    %v1194 = vadd.f32 %v979, %v1193
    %v1195 = vrot.slane %v1194, 2
    %v1196 = vadd.f32 %v1194, %v1195
    %v1197 = vrot.slane %v1196, 1
    %v1198 = vadd.f32 %v1196, %v1197
    %v1199 = vrot.slane %v980, 4
    %v1200 = vadd.f32 %v980, %v1199
    %v1201 = vrot.slane %v1200, 2
    %v1202 = vadd.f32 %v1200, %v1201
    %v1203 = vrot.slane %v1202, 1
    %v1204 = vadd.f32 %v1202, %v1203
    %v1205 = vrot.slane %v981, 4
    %v1206 = vadd.f32 %v981, %v1205
    %v1207 = vrot.slane %v1206, 2
    %v1208 = vadd.f32 %v1206, %v1207
    %v1209 = vrot.slane %v1208, 1
    %v1210 = vadd.f32 %v1208, %v1209
    %v1211 = vrot.slane %v982, 4
    %v1212 = vadd.f32 %v982, %v1211
    %v1213 = vrot.slane %v1212, 2
    %v1214 = vadd.f32 %v1212, %v1213
    %v1215 = vrot.slane %v1214, 1
    %v1216 = vadd.f32 %v1214, %v1215
    %v1217 = vrot.slane %v983, 4
    %v1218 = vadd.f32 %v983, %v1217
    %v1219 = vrot.slane %v1218, 2
    %v1220 = vadd.f32 %v1218, %v1219
    %v1221 = vrot.slane %v1220, 1
    %v1222 = vadd.f32 %v1220, %v1221
    %v1223 = vrot.slane %v984, 4
    %v1224 = vadd.f32 %v984, %v1223
    %v1225 = vrot.slane %v1224, 2
    %v1226 = vadd.f32 %v1224, %v1225
    %v1227 = vrot.slane %v1226, 1
    %v1228 = vadd.f32 %v1226, %v1227
    %v1229 = vrot.slane %v985, 4
    %v1230 = vadd.f32 %v985, %v1229
    %v1231 = vrot.slane %v1230, 2
    %v1232 = vadd.f32 %v1230, %v1231
    %v1233 = vrot.slane %v1232, 1
    %v1234 = vadd.f32 %v1232, %v1233
    %v1235 = vrot.slane %v986, 4
    %v1236 = vadd.f32 %v986, %v1235
    %v1237 = vrot.slane %v1236, 2
    %v1238 = vadd.f32 %v1236, %v1237
    %v1239 = vrot.slane %v1238, 1
    %v1240 = vadd.f32 %v1238, %v1239
    %v1241 = vrot.slane %v987, 4
    %v1242 = vadd.f32 %v987, %v1241
    %v1243 = vrot.slane %v1242, 2
    %v1244 = vadd.f32 %v1242, %v1243
    %v1245 = vrot.slane %v1244, 1
    %v1246 = vadd.f32 %v1244, %v1245
    %v1247 = vrot.slane %v988, 4
    %v1248 = vadd.f32 %v988, %v1247
    %v1249 = vrot.slane %v1248, 2
    %v1250 = vadd.f32 %v1248, %v1249
    %v1251 = vrot.slane %v1250, 1
    %v1252 = vadd.f32 %v1250, %v1251
    %v1253 = vrot.slane %v989, 4
    %v1254 = vadd.f32 %v989, %v1253
    %v1255 = vrot.slane %v1254, 2
    %v1256 = vadd.f32 %v1254, %v1255
    %v1257 = vrot.slane %v1256, 1
    %v1258 = vadd.f32 %v1256, %v1257
    %v1259 = vrot.slane %v990, 4
    %v1260 = vadd.f32 %v990, %v1259
    %v1261 = vrot.slane %v1260, 2
    %v1262 = vadd.f32 %v1260, %v1261
    %v1263 = vrot.slane %v1262, 1
    %v1264 = vadd.f32 %v1262, %v1263
    %v1265 = vrot.slane %v991, 4
    %v1266 = vadd.f32 %v991, %v1265
    %v1267 = vrot.slane %v1266, 2
    %v1268 = vadd.f32 %v1266, %v1267
    %v1269 = vrot.slane %v1268, 1
    %v1270 = vadd.f32 %v1268, %v1269
    %v1271 = vrot.slane %v992, 4
    %v1272 = vadd.f32 %v992, %v1271
    %v1273 = vrot.slane %v1272, 2
    %v1274 = vadd.f32 %v1272, %v1273
    %v1275 = vrot.slane %v1274, 1
    %v1276 = vadd.f32 %v1274, %v1275
    %v1277 = vrot.slane %v993, 4
    %v1278 = vadd.f32 %v993, %v1277
    %v1279 = vrot.slane %v1278, 2
    %v1280 = vadd.f32 %v1278, %v1279
    %v1281 = vrot.slane %v1280, 1
    %v1282 = vadd.f32 %v1280, %v1281
    %v1283 = vrot.slane %v994, 4
    %v1284 = vadd.f32 %v994, %v1283
    %v1285 = vrot.slane %v1284, 2
    %v1286 = vadd.f32 %v1284, %v1285
    %v1287 = vrot.slane %v1286, 1
    %v1288 = vadd.f32 %v1286, %v1287
    %v1289 = vrot.slane %v995, 4
    %v1290 = vadd.f32 %v995, %v1289
    %v1291 = vrot.slane %v1290, 2
    %v1292 = vadd.f32 %v1290, %v1291
    %v1293 = vrot.slane %v1292, 1
    %v1294 = vadd.f32 %v1292, %v1293
    %v1295 = vrot.slane %v996, 4
    %v1296 = vadd.f32 %v996, %v1295
    %v1297 = vrot.slane %v1296, 2
    %v1298 = vadd.f32 %v1296, %v1297
    %v1299 = vrot.slane %v1298, 1
    %v1300 = vadd.f32 %v1298, %v1299
    %v1301 = vrot.slane %v997, 4
    %v1302 = vadd.f32 %v997, %v1301
    %v1303 = vrot.slane %v1302, 2
    %v1304 = vadd.f32 %v1302, %v1303
    %v1305 = vrot.slane %v1304, 1
    %v1306 = vadd.f32 %v1304, %v1305
    %v1307 = vrot.slane %v998, 4
    %v1308 = vadd.f32 %v998, %v1307
    %v1309 = vrot.slane %v1308, 2
    %v1310 = vadd.f32 %v1308, %v1309
    %v1311 = vrot.slane %v1310, 1
    %v1312 = vadd.f32 %v1310, %v1311
    %v1313 = vrot.slane %v999, 4
    %v1314 = vadd.f32 %v999, %v1313
    %v1315 = vrot.slane %v1314, 2
    %v1316 = vadd.f32 %v1314, %v1315
    %v1317 = vrot.slane %v1316, 1
    %v1318 = vadd.f32 %v1316, %v1317
    %v1319 = vrot.slane %v1000, 4
    %v1320 = vadd.f32 %v1000, %v1319
    %v1321 = vrot.slane %v1320, 2
    %v1322 = vadd.f32 %v1320, %v1321
    %v1323 = vrot.slane %v1322, 1
    %v1324 = vadd.f32 %v1322, %v1323
    %v1325 = vrot.slane %v1001, 4
    %v1326 = vadd.f32 %v1001, %v1325
    %v1327 = vrot.slane %v1326, 2
    %v1328 = vadd.f32 %v1326, %v1327
    %v1329 = vrot.slane %v1328, 1
    %v1330 = vadd.f32 %v1328, %v1329
    %v1331 = vrot.slane %v1002, 4
    %v1332 = vadd.f32 %v1002, %v1331
    %v1333 = vrot.slane %v1332, 2
    %v1334 = vadd.f32 %v1332, %v1333
    %v1335 = vrot.slane %v1334, 1
    %v1336 = vadd.f32 %v1334, %v1335
    %v1337 = vrot.slane %v1003, 4
    %v1338 = vadd.f32 %v1003, %v1337
    %v1339 = vrot.slane %v1338, 2
    %v1340 = vadd.f32 %v1338, %v1339
    %v1341 = vrot.slane %v1340, 1
    %v1342 = vadd.f32 %v1340, %v1341
    %v1343 = vrot.slane %v1004, 4
    %v1344 = vadd.f32 %v1004, %v1343
    %v1345 = vrot.slane %v1344, 2
    %v1346 = vadd.f32 %v1344, %v1345
    %v1347 = vrot.slane %v1346, 1
    %v1348 = vadd.f32 %v1346, %v1347
    %v1349 = vrot.slane %v1005, 4
    %v1350 = vadd.f32 %v1005, %v1349
    %v1351 = vrot.slane %v1350, 2
    %v1352 = vadd.f32 %v1350, %v1351
    %v1353 = vrot.slane %v1352, 1
    %v1354 = vadd.f32 %v1352, %v1353
    %v1355 = vrot.slane %v1006, 4
    %v1356 = vadd.f32 %v1006, %v1355
    %v1357 = vrot.slane %v1356, 2
    %v1358 = vadd.f32 %v1356, %v1357
    %v1359 = vrot.slane %v1358, 1
    %v1360 = vadd.f32 %v1358, %v1359
    %v1361 = vrot.slane %v1007, 4
    %v1362 = vadd.f32 %v1007, %v1361
    %v1363 = vrot.slane %v1362, 2
    %v1364 = vadd.f32 %v1362, %v1363
    %v1365 = vrot.slane %v1364, 1
    %v1366 = vadd.f32 %v1364, %v1365
    %v1367 = vrot.slane %v1008, 4
    %v1368 = vadd.f32 %v1008, %v1367
    %v1369 = vrot.slane %v1368, 2
    %v1370 = vadd.f32 %v1368, %v1369
    %v1371 = vrot.slane %v1370, 1
    %v1372 = vadd.f32 %v1370, %v1371
    %v1373 = vrot.slane %v1009, 4
    %v1374 = vadd.f32 %v1009, %v1373
    %v1375 = vrot.slane %v1374, 2
    %v1376 = vadd.f32 %v1374, %v1375
    %v1377 = vrot.slane %v1376, 1
    %v1378 = vadd.f32 %v1376, %v1377
    %v1379 = vrot.slane %v1010, 4
    %v1380 = vadd.f32 %v1010, %v1379
    %v1381 = vrot.slane %v1380, 2
    %v1382 = vadd.f32 %v1380, %v1381
    %v1383 = vrot.slane %v1382, 1
    %v1384 = vadd.f32 %v1382, %v1383
    %v1385 = vrot.slane %v1011, 4
    %v1386 = vadd.f32 %v1011, %v1385
    %v1387 = vrot.slane %v1386, 2
    %v1388 = vadd.f32 %v1386, %v1387
    %v1389 = vrot.slane %v1388, 1
    %v1390 = vadd.f32 %v1388, %v1389
    %v1391 = vrot.slane %v1012, 4
    %v1392 = vadd.f32 %v1012, %v1391
    %v1393 = vrot.slane %v1392, 2
    %v1394 = vadd.f32 %v1392, %v1393
    %v1395 = vrot.slane %v1394, 1
    %v1396 = vadd.f32 %v1394, %v1395
    %v1397 = vrcp.pop 8.0
    %v1398 = vmul.f32 8.0, %v1397
    %v1399 = vsub.f32 1.0, %v1398
    %v1400 = vmul.f32 %v1397, %v1399
    %v1401 = vadd.f32 %v1397, %v1400
    %vm1402 = vweird.f32 %v1397
    %v1403 = vsel %vm1402, %v1397, %v1401
    %v1404 = vmul.f32 %v1018, %v1403
    %v1405 = vmul.f32 %v1024, %v1403
    %v1406 = vmul.f32 %v1030, %v1403
    %v1407 = vmul.f32 %v1036, %v1403
    %v1408 = vmul.f32 %v1042, %v1403
    %v1409 = vmul.f32 %v1048, %v1403
    %v1410 = vmul.f32 %v1054, %v1403
    %v1411 = vmul.f32 %v1060, %v1403
    %v1412 = vmul.f32 %v1066, %v1403
    %v1413 = vmul.f32 %v1072, %v1403
    %v1414 = vmul.f32 %v1078, %v1403
    %v1415 = vmul.f32 %v1084, %v1403
    %v1416 = vmul.f32 %v1090, %v1403
    %v1417 = vmul.f32 %v1096, %v1403
    %v1418 = vmul.f32 %v1102, %v1403
    %v1419 = vmul.f32 %v1108, %v1403
    %v1420 = vmul.f32 %v1114, %v1403
    %v1421 = vmul.f32 %v1120, %v1403
    %v1422 = vmul.f32 %v1126, %v1403
    %v1423 = vmul.f32 %v1132, %v1403
    %v1424 = vmul.f32 %v1138, %v1403
    %v1425 = vmul.f32 %v1144, %v1403
    %v1426 = vmul.f32 %v1150, %v1403
    %v1427 = vmul.f32 %v1156, %v1403
    %v1428 = vmul.f32 %v1162, %v1403
    %v1429 = vmul.f32 %v1168, %v1403
    %v1430 = vmul.f32 %v1174, %v1403
    %v1431 = vmul.f32 %v1180, %v1403
    %v1432 = vmul.f32 %v1186, %v1403
    %v1433 = vmul.f32 %v1192, %v1403
    %v1434 = vmul.f32 %v1198, %v1403
    %v1435 = vmul.f32 %v1204, %v1403
    %v1436 = vmul.f32 %v1210, %v1403
    %v1437 = vmul.f32 %v1216, %v1403
    %v1438 = vmul.f32 %v1222, %v1403
    %v1439 = vmul.f32 %v1228, %v1403
    %v1440 = vmul.f32 %v1234, %v1403
    %v1441 = vmul.f32 %v1240, %v1403
    %v1442 = vmul.f32 %v1246, %v1403
    %v1443 = vmul.f32 %v1252, %v1403
    %v1444 = vmul.f32 %v1258, %v1403
    %v1445 = vmul.f32 %v1264, %v1403
    %v1446 = vmul.f32 %v1270, %v1403
    %v1447 = vmul.f32 %v1276, %v1403
    %v1448 = vmul.f32 %v1282, %v1403
    %v1449 = vmul.f32 %v1288, %v1403
    %v1450 = vmul.f32 %v1294, %v1403
    %v1451 = vmul.f32 %v1300, %v1403
    %v1452 = vmul.f32 %v1306, %v1403
    %v1453 = vmul.f32 %v1312, %v1403
    %v1454 = vmul.f32 %v1318, %v1403
    %v1455 = vmul.f32 %v1324, %v1403
    %v1456 = vmul.f32 %v1330, %v1403
    %v1457 = vmul.f32 %v1336, %v1403
    %v1458 = vmul.f32 %v1342, %v1403
    %v1459 = vmul.f32 %v1348, %v1403
    %v1460 = vmul.f32 %v1354, %v1403
    %v1461 = vmul.f32 %v1360, %v1403
    %v1462 = vmul.f32 %v1366, %v1403
    %v1463 = vmul.f32 %v1372, %v1403
    %v1464 = vmul.f32 %v1378, %v1403
    %v1465 = vmul.f32 %v1384, %v1403
    %v1466 = vmul.f32 %v1390, %v1403
    %v1467 = vmul.f32 %v1396, %v1403
    %v1468 = vpack.c.bf16 %v1404, %v1404
    %v1469 = vpack.c.bf16 %v1405, %v1405
    %v1470 = vpack.c.bf16 %v1406, %v1406
    %v1471 = vpack.c.bf16 %v1407, %v1407
    %v1472 = vpack.c.bf16 %v1408, %v1408
    %v1473 = vpack.c.bf16 %v1409, %v1409
    %v1474 = vpack.c.bf16 %v1410, %v1410
    %v1475 = vpack.c.bf16 %v1411, %v1411
    %v1476 = vpack.c.bf16 %v1412, %v1412
    %v1477 = vpack.c.bf16 %v1413, %v1413
    %v1478 = vpack.c.bf16 %v1414, %v1414
    %v1479 = vpack.c.bf16 %v1415, %v1415
    %v1480 = vpack.c.bf16 %v1416, %v1416
    %v1481 = vpack.c.bf16 %v1417, %v1417
    %v1482 = vpack.c.bf16 %v1418, %v1418
    %v1483 = vpack.c.bf16 %v1419, %v1419
    %v1484 = vpack.c.bf16 %v1420, %v1420
    %v1485 = vpack.c.bf16 %v1421, %v1421
    %v1486 = vpack.c.bf16 %v1422, %v1422
    %v1487 = vpack.c.bf16 %v1423, %v1423
    %v1488 = vpack.c.bf16 %v1424, %v1424
    %v1489 = vpack.c.bf16 %v1425, %v1425
    %v1490 = vpack.c.bf16 %v1426, %v1426
    %v1491 = vpack.c.bf16 %v1427, %v1427
    %v1492 = vpack.c.bf16 %v1428, %v1428
    %v1493 = vpack.c.bf16 %v1429, %v1429
    %v1494 = vpack.c.bf16 %v1430, %v1430
    %v1495 = vpack.c.bf16 %v1431, %v1431
    %v1496 = vpack.c.bf16 %v1432, %v1432
    %v1497 = vpack.c.bf16 %v1433, %v1433
    %v1498 = vpack.c.bf16 %v1434, %v1434
    %v1499 = vpack.c.bf16 %v1435, %v1435
    %v1500 = vpack.c.bf16 %v1436, %v1436
    %v1501 = vpack.c.bf16 %v1437, %v1437
    %v1502 = vpack.c.bf16 %v1438, %v1438
    %v1503 = vpack.c.bf16 %v1439, %v1439
    %v1504 = vpack.c.bf16 %v1440, %v1440
    %v1505 = vpack.c.bf16 %v1441, %v1441
    %v1506 = vpack.c.bf16 %v1442, %v1442
    %v1507 = vpack.c.bf16 %v1443, %v1443
    %v1508 = vpack.c.bf16 %v1444, %v1444
    %v1509 = vpack.c.bf16 %v1445, %v1445
    %v1510 = vpack.c.bf16 %v1446, %v1446
    %v1511 = vpack.c.bf16 %v1447, %v1447
    %v1512 = vpack.c.bf16 %v1448, %v1448
    %v1513 = vpack.c.bf16 %v1449, %v1449
    %v1514 = vpack.c.bf16 %v1450, %v1450
    %v1515 = vpack.c.bf16 %v1451, %v1451
    %v1516 = vpack.c.bf16 %v1452, %v1452
    %v1517 = vpack.c.bf16 %v1453, %v1453
    %v1518 = vpack.c.bf16 %v1454, %v1454
    %v1519 = vpack.c.bf16 %v1455, %v1455
    %v1520 = vpack.c.bf16 %v1456, %v1456
    %v1521 = vpack.c.bf16 %v1457, %v1457
    %v1522 = vpack.c.bf16 %v1458, %v1458
    %v1523 = vpack.c.bf16 %v1459, %v1459
    %v1524 = vpack.c.bf16 %v1460, %v1460
    %v1525 = vpack.c.bf16 %v1461, %v1461
    %v1526 = vpack.c.bf16 %v1462, %v1462
    %v1527 = vpack.c.bf16 %v1463, %v1463
    %v1528 = vpack.c.bf16 %v1464, %v1464
    %v1529 = vpack.c.bf16 %v1465, %v1465
    %v1530 = vpack.c.bf16 %v1466, %v1466
    %v1531 = vpack.c.bf16 %v1467, %v1467
    %v1532 = vld [vmem:[#allocation8] sm:$0xf]
    %v1533 = vld [vmem:[#allocation8 + $0x4] sm:$0xf]
    %v1534 = vld [vmem:[#allocation8 + $0x8] sm:$0xf]
    %v1535 = vld [vmem:[#allocation8 + $0xc] sm:$0xf]
    %v1536 = vld [vmem:[#allocation8 + $0x10] sm:$0xf]
    %v1537 = vld [vmem:[#allocation8 + $0x14] sm:$0xf]
    %v1538 = vld [vmem:[#allocation8 + $0x18] sm:$0xf]
    %v1539 = vld [vmem:[#allocation8 + $0x1c] sm:$0xf]
    %v1540 = vld [vmem:[#allocation8 + $0x20] sm:$0xf]
    %v1541 = vld [vmem:[#allocation8 + $0x24] sm:$0xf]
    %v1542 = vld [vmem:[#allocation8 + $0x28] sm:$0xf]
    %v1543 = vld [vmem:[#allocation8 + $0x2c] sm:$0xf]
    %v1544 = vld [vmem:[#allocation8 + $0x30] sm:$0xf]
    %v1545 = vld [vmem:[#allocation8 + $0x34] sm:$0xf]
    %v1546 = vld [vmem:[#allocation8 + $0x38] sm:$0xf]
    %v1547 = vld [vmem:[#allocation8 + $0x3c] sm:$0xf]
    %v1548 = vld [vmem:[#allocation10] sm:$0x1]
    %v1550 = vperm.slane %v1548, 0
    %v1616 = vunpack.c.l.b16 %v1468
    %v1617 = vunpack.c.l.b16 %v1469
    %v1618 = vunpack.c.l.b16 %v1470
    %v1619 = vunpack.c.l.b16 %v1471
    %v1620 = vunpack.c.l.b16 %v1472
    %v1621 = vunpack.c.l.b16 %v1473
    %v1622 = vunpack.c.l.b16 %v1474
    %v1623 = vunpack.c.l.b16 %v1475
    %v1624 = vunpack.c.l.b16 %v1476
    %v1625 = vunpack.c.l.b16 %v1477
    %v1626 = vunpack.c.l.b16 %v1478
    %v1627 = vunpack.c.l.b16 %v1479
    %v1628 = vunpack.c.l.b16 %v1480
    %v1629 = vunpack.c.l.b16 %v1481
    %v1630 = vunpack.c.l.b16 %v1482
    %v1631 = vunpack.c.l.b16 %v1483
    %v1632 = vunpack.c.l.b16 %v1484
    %v1633 = vunpack.c.l.b16 %v1485
    %v1634 = vunpack.c.l.b16 %v1486
    %v1635 = vunpack.c.l.b16 %v1487
    %v1636 = vunpack.c.l.b16 %v1488
    %v1637 = vunpack.c.l.b16 %v1489
    %v1638 = vunpack.c.l.b16 %v1490
    %v1639 = vunpack.c.l.b16 %v1491
    %v1640 = vunpack.c.l.b16 %v1492
    %v1641 = vunpack.c.l.b16 %v1493
    %v1642 = vunpack.c.l.b16 %v1494
    %v1643 = vunpack.c.l.b16 %v1495
    %v1644 = vunpack.c.l.b16 %v1496
    %v1645 = vunpack.c.l.b16 %v1497
    %v1646 = vunpack.c.l.b16 %v1498
    %v1647 = vunpack.c.l.b16 %v1499
    %v1648 = vunpack.c.l.b16 %v1500
    %v1649 = vunpack.c.l.b16 %v1501
    %v1650 = vunpack.c.l.b16 %v1502
    %v1651 = vunpack.c.l.b16 %v1503
    %v1652 = vunpack.c.l.b16 %v1504
    %v1653 = vunpack.c.l.b16 %v1505
    %v1654 = vunpack.c.l.b16 %v1506
    %v1655 = vunpack.c.l.b16 %v1507
    %v1656 = vunpack.c.l.b16 %v1508
    %v1657 = vunpack.c.l.b16 %v1509
    %v1658 = vunpack.c.l.b16 %v1510
    %v1659 = vunpack.c.l.b16 %v1511
    %v1660 = vunpack.c.l.b16 %v1512
    %v1661 = vunpack.c.l.b16 %v1513
    %v1662 = vunpack.c.l.b16 %v1514
    %v1663 = vunpack.c.l.b16 %v1515
    %v1664 = vunpack.c.l.b16 %v1516
    %v1665 = vunpack.c.l.b16 %v1517
    %v1666 = vunpack.c.l.b16 %v1518
    %v1667 = vunpack.c.l.b16 %v1519
    %v1668 = vunpack.c.l.b16 %v1520
    %v1669 = vunpack.c.l.b16 %v1521
    %v1670 = vunpack.c.l.b16 %v1522
    %v1671 = vunpack.c.l.b16 %v1523
    %v1672 = vunpack.c.l.b16 %v1524
    %v1673 = vunpack.c.l.b16 %v1525
    %v1674 = vunpack.c.l.b16 %v1526
    %v1675 = vunpack.c.l.b16 %v1527
    %v1676 = vunpack.c.l.b16 %v1528
    %v1677 = vunpack.c.l.b16 %v1529
    %v1678 = vunpack.c.l.b16 %v1530
    %v1679 = vunpack.c.l.b16 %v1531
    %vm1680 = vcmask 1041409
    %v1681 = vsel %vm1680, %v1617, %v1616
    %vm1682 = vcmask 1042434
    %v1683 = vsel %vm1682, %v1618, %v1681
    %vm1684 = vcmask 1043459
    %v1685 = vsel %vm1684, %v1619, %v1683
    %vm1686 = vcmask 1044484
    %v1687 = vsel %vm1686, %v1620, %v1685
    %vm1688 = vcmask 1045509
    %v1689 = vsel %vm1688, %v1621, %v1687
    %vm1690 = vcmask 1046534
    %v1691 = vsel %vm1690, %v1622, %v1689
    %vm1692 = vcmask 1047559
    %v1693 = vsel %vm1692, %v1623, %v1691
    %v1694 = vsel %vm1680, %v1625, %v1624
    %v1695 = vsel %vm1682, %v1626, %v1694
    %v1696 = vsel %vm1684, %v1627, %v1695
    %v1697 = vsel %vm1686, %v1628, %v1696
    %v1698 = vsel %vm1688, %v1629, %v1697
    %v1699 = vsel %vm1690, %v1630, %v1698
    %v1700 = vsel %vm1692, %v1631, %v1699
    %v1701 = vsel %vm1680, %v1633, %v1632
    %v1702 = vsel %vm1682, %v1634, %v1701
    %v1703 = vsel %vm1684, %v1635, %v1702
    %v1704 = vsel %vm1686, %v1636, %v1703
    %v1705 = vsel %vm1688, %v1637, %v1704
    %v1706 = vsel %vm1690, %v1638, %v1705
    %v1707 = vsel %vm1692, %v1639, %v1706
    %v1708 = vsel %vm1680, %v1641, %v1640
    %v1709 = vsel %vm1682, %v1642, %v1708
    %v1710 = vsel %vm1684, %v1643, %v1709
    %v1711 = vsel %vm1686, %v1644, %v1710
    %v1712 = vsel %vm1688, %v1645, %v1711
    %v1713 = vsel %vm1690, %v1646, %v1712
    %v1714 = vsel %vm1692, %v1647, %v1713
    %v1715 = vsel %vm1680, %v1649, %v1648
    %v1716 = vsel %vm1682, %v1650, %v1715
    %v1717 = vsel %vm1684, %v1651, %v1716
    %v1718 = vsel %vm1686, %v1652, %v1717
    %v1719 = vsel %vm1688, %v1653, %v1718
    %v1720 = vsel %vm1690, %v1654, %v1719
    %v1721 = vsel %vm1692, %v1655, %v1720
    %v1722 = vsel %vm1680, %v1657, %v1656
    %v1723 = vsel %vm1682, %v1658, %v1722
    %v1724 = vsel %vm1684, %v1659, %v1723
    %v1725 = vsel %vm1686, %v1660, %v1724
    %v1726 = vsel %vm1688, %v1661, %v1725
    %v1727 = vsel %vm1690, %v1662, %v1726
    %v1728 = vsel %vm1692, %v1663, %v1727
    %v1729 = vsel %vm1680, %v1665, %v1664
    %v1730 = vsel %vm1682, %v1666, %v1729
    %v1731 = vsel %vm1684, %v1667, %v1730
    %v1732 = vsel %vm1686, %v1668, %v1731
    %v1733 = vsel %vm1688, %v1669, %v1732
    %v1734 = vsel %vm1690, %v1670, %v1733
    %v1735 = vsel %vm1692, %v1671, %v1734
    %v1736 = vsel %vm1680, %v1673, %v1672
    %v1737 = vsel %vm1682, %v1674, %v1736
    %v1738 = vsel %vm1684, %v1675, %v1737
    %v1739 = vsel %vm1686, %v1676, %v1738
    %v1740 = vsel %vm1688, %v1677, %v1739
    %v1741 = vsel %vm1690, %v1678, %v1740
    %v1742 = vsel %vm1692, %v1679, %v1741
    %v1743 = vpack.c.b16 %v1700, %v1693
    %v1744 = vpack.c.b16 %v1714, %v1707
    %v1745 = vpack.c.b16 %v1728, %v1721
    %v1746 = vpack.c.b16 %v1742, %v1735
    %v1767 = vunpack.c.l.b16 %v1532
    %v1768 = vunpack.c.l.b16 %v1533
    %v1769 = vunpack.c.l.b16 %v1534
    %v1770 = vunpack.c.l.b16 %v1535
    %v1771 = vunpack.c.l.b16 %v1536
    %v1772 = vunpack.c.l.b16 %v1537
    %v1773 = vunpack.c.l.b16 %v1538
    %v1774 = vunpack.c.l.b16 %v1539
    %v1775 = vunpack.c.l.b16 %v1540
    %v1776 = vunpack.c.l.b16 %v1541
    %v1777 = vunpack.c.l.b16 %v1542
    %v1778 = vunpack.c.l.b16 %v1543
    %v1779 = vunpack.c.l.b16 %v1544
    %v1780 = vunpack.c.l.b16 %v1545
    %v1781 = vunpack.c.l.b16 %v1546
    %v1782 = vunpack.c.l.b16 %v1547
    %v1783 = vpack.c.b16 %v1768, %v1767
    %v1784 = vpack.c.b16 %v1770, %v1769
    %v1785 = vpack.c.b16 %v1772, %v1771
    %v1786 = vpack.c.b16 %v1774, %v1773
    %v1787 = vpack.c.b16 %v1776, %v1775
    %v1788 = vpack.c.b16 %v1778, %v1777
    %v1789 = vpack.c.b16 %v1780, %v1779
    %v1790 = vpack.c.b16 %v1782, %v1781
    %1799 = vmatpush.bf16.msra.mxu0 %v1790
    %1800 = vmatpush.bf16.msra.mxu0 %v1789
    %1801 = vmatpush.bf16.msra.mxu0 %v1788
    %1802 = vmatpush.bf16.msra.mxu0 %v1787
    %1803 = vmatpush.bf16.msra.mxu0 %v1786
    %1804 = vmatpush.bf16.msra.mxu0 %v1785
    %1805 = vmatpush.bf16.msra.mxu0 %v1784
    %1806 = vmatpush.bf16.msra.mxu0 %v1783
    %1807 = vmatmul.bf16.gmra.mxu0 %v1743
    %v1808 = vpop.f32.mrf.mxu0
    %v1809 = vadd.f32 %v1550, %v1808
    %v1810 = vpop.f32.mrf.mxu0
    %v1811 = vadd.f32 %v1550, %v1810
    %1812 = vmatmul.bf16.gmra.mxu0 %v1744
    %v1813 = vpop.f32.mrf.mxu0
    %v1814 = vadd.f32 %v1550, %v1813
    %v1815 = vpop.f32.mrf.mxu0
    %v1816 = vadd.f32 %v1550, %v1815
    %1817 = vmatmul.bf16.gmra.mxu0 %v1745
    %v1818 = vpop.f32.mrf.mxu0
    %v1819 = vadd.f32 %v1550, %v1818
    %v1820 = vpop.f32.mrf.mxu0
    %v1821 = vadd.f32 %v1550, %v1820
    %1822 = vmatmul.bf16.gmra.mxu0 %v1746
    %v1823 = vpop.f32.mrf.mxu0
    %v1824 = vadd.f32 %v1550, %v1823
    %v1825 = vpop.f32.mrf.mxu0
    %v1826 = vadd.f32 %v1550, %v1825
    %1827 = vdwg.mxu0
    %vm1828 = vcmp.gt.f32.partialorder %v1809, 0.0
    %vm1829 = vcmp.gt.f32.partialorder %v1811, 0.0
    %vm1830 = vcmp.gt.f32.partialorder %v1814, 0.0
    %vm1831 = vcmp.gt.f32.partialorder %v1816, 0.0
    %vm1832 = vcmp.gt.f32.partialorder %v1819, 0.0
    %vm1833 = vcmp.gt.f32.partialorder %v1821, 0.0
    %vm1834 = vcmp.gt.f32.partialorder %v1824, 0.0
    %vm1835 = vcmp.gt.f32.partialorder %v1826, 0.0
    %v1836 = vmul.f32 %v1809, 1.442695
    %v1837 = vpow.pop %v1836
    %v1838 = vmul.f32 %v1811, 1.442695
    %v1839 = vpow.pop %v1838
    %v1840 = vmul.f32 %v1814, 1.442695
    %v1841 = vpow.pop %v1840
    %v1842 = vmul.f32 %v1816, 1.442695
    %v1843 = vpow.pop %v1842
    %v1844 = vmul.f32 %v1819, 1.442695
    %v1845 = vpow.pop %v1844
    %v1846 = vmul.f32 %v1821, 1.442695
    %v1847 = vpow.pop %v1846
    %v1848 = vmul.f32 %v1824, 1.442695
    %v1849 = vpow.pop %v1848
    %v1850 = vmul.f32 %v1826, 1.442695
    %v1851 = vpow.pop %v1850
    %v1852 = vsub.f32 %v1837, 1.0
    %v1853 = vsub.f32 %v1839, 1.0
    %v1854 = vsub.f32 %v1841, 1.0
    %v1855 = vsub.f32 %v1843, 1.0
    %v1856 = vsub.f32 %v1845, 1.0
    %v1857 = vsub.f32 %v1847, 1.0
    %v1858 = vsub.f32 %v1849, 1.0
    %v1859 = vsub.f32 %v1851, 1.0
    %v1860 = vsel %vm1828, %v1809, %v1852
    %v1861 = vsel %vm1829, %v1811, %v1853
    %v1862 = vsel %vm1830, %v1814, %v1854
    %v1863 = vsel %vm1831, %v1816, %v1855
    %v1864 = vsel %vm1832, %v1819, %v1856
    %v1865 = vsel %vm1833, %v1821, %v1857
    %v1866 = vsel %vm1834, %v1824, %v1858
    %v1867 = vsel %vm1835, %v1826, %v1859
    %v1868 = vsel %vm291, %v1860, 0.0
    %v1869 = vrot.slane %v1868, 4
    %v1870 = vadd.f32 %v1868, %v1869
    %v1871 = vrot.slane %v1870, 2
    %v1872 = vadd.f32 %v1870, %v1871
    %v1873 = vrot.slane %v1872, 1
    %v1874 = vadd.f32 %v1872, %v1873
    %v1875 = vsel %vm291, %v1861, 0.0
    %v1876 = vrot.slane %v1875, 4
    %v1877 = vadd.f32 %v1875, %v1876
    %v1878 = vrot.slane %v1877, 2
    %v1879 = vadd.f32 %v1877, %v1878
    %v1880 = vrot.slane %v1879, 1
    %v1881 = vadd.f32 %v1879, %v1880
    %v1882 = vsel %vm291, %v1862, 0.0
    %v1883 = vrot.slane %v1882, 4
    %v1884 = vadd.f32 %v1882, %v1883
    %v1885 = vrot.slane %v1884, 2
    %v1886 = vadd.f32 %v1884, %v1885
    %v1887 = vrot.slane %v1886, 1
    %v1888 = vadd.f32 %v1886, %v1887
    %v1889 = vsel %vm291, %v1863, 0.0
    %v1890 = vrot.slane %v1889, 4
    %v1891 = vadd.f32 %v1889, %v1890
    %v1892 = vrot.slane %v1891, 2
    %v1893 = vadd.f32 %v1891, %v1892
    %v1894 = vrot.slane %v1893, 1
    %v1895 = vadd.f32 %v1893, %v1894
    %v1896 = vsel %vm291, %v1864, 0.0
    %v1897 = vrot.slane %v1896, 4
    %v1898 = vadd.f32 %v1896, %v1897
    %v1899 = vrot.slane %v1898, 2
    %v1900 = vadd.f32 %v1898, %v1899
    %v1901 = vrot.slane %v1900, 1
    %v1902 = vadd.f32 %v1900, %v1901
    %v1903 = vsel %vm291, %v1865, 0.0
    %v1904 = vrot.slane %v1903, 4
    %v1905 = vadd.f32 %v1903, %v1904
    %v1906 = vrot.slane %v1905, 2
    %v1907 = vadd.f32 %v1905, %v1906
    %v1908 = vrot.slane %v1907, 1
    %v1909 = vadd.f32 %v1907, %v1908
    %v1910 = vsel %vm291, %v1866, 0.0
    %v1911 = vrot.slane %v1910, 4
    %v1912 = vadd.f32 %v1910, %v1911
    %v1913 = vrot.slane %v1912, 2
    %v1914 = vadd.f32 %v1912, %v1913
    %v1915 = vrot.slane %v1914, 1
    %v1916 = vadd.f32 %v1914, %v1915
    %v1917 = vsel %vm291, %v1867, 0.0
    %v1918 = vrot.slane %v1917, 4
    %v1919 = vadd.f32 %v1917, %v1918
    %v1920 = vrot.slane %v1919, 2
    %v1921 = vadd.f32 %v1919, %v1920
    %v1922 = vrot.slane %v1921, 1
    %v1923 = vadd.f32 %v1921, %v1922
    %v1924 = vmul.f32 %v1874, %v1403
    %v1925 = vmul.f32 %v1881, %v1403
    %v1926 = vmul.f32 %v1888, %v1403
    %v1927 = vmul.f32 %v1895, %v1403
    %v1928 = vmul.f32 %v1902, %v1403
    %v1929 = vmul.f32 %v1909, %v1403
    %v1930 = vmul.f32 %v1916, %v1403
    %v1931 = vmul.f32 %v1923, %v1403
    %vm1932 = vcmask 1040384
    %v1933 = vsel %vm1932, %v1927, %v1926
    %vm1934 = vcmask 1041408
    %v1935 = vsel %vm1934, %v1933, %v1925
    %vm1936 = vcmask 1042432
    %v1937 = vsel %vm1936, %v1935, %v1924
    %v1938 = vsel %vm1932, %v1931, %v1930
    %v1939 = vsel %vm1934, %v1938, %v1929
    %v1940 = vsel %vm1936, %v1939, %v1928
    %v1945 = vsel %vm1680, %v1925, %v1924
    %v1946 = vsel %vm1682, %v1926, %v1945
    %v1947 = vsel %vm1684, %v1927, %v1946
    %1950 = vrot.lane.b32.xlu0 %v1937, 32
    %v1951 = vpop.permute.xlu0 %1950
    %v1957 = vsel %vm1680, %v1929, %v1928
    %v1958 = vsel %vm1682, %v1930, %v1957
    %v1959 = vsel %vm1684, %v1931, %v1958
    %1960 = vrot.lane.b32.xlu0 %v1959, 64
    %v1961 = vpop.permute.xlu0 %1960
    %1964 = vrot.lane.b32.xlu0 %v1940, 96
    %v1965 = vpop.permute.xlu0 %1964
    %v1967 = vsel %vm291, %v1947, %v1951
    %vm1968 = vcmask 523264
    %v1969 = vsel %vm1968, %v1967, %v1961
    %vm1970 = vcmask 785408
    %v1971 = vsel %vm1970, %v1969, %v1965
    %v1973 = vrot.slane %v1971, 5
    %v1975 = vsel %vm1936, 0.0, %v1973
    %v1977 = vrot.slane %v1975, 1
    %v1979 = vrot.slane %v1975, 2
    %v1981 = vrot.slane %v1975, 3
    %v1983 = vpack.c.bf16 %v1975, %v1975
    %v1984 = vpack.c.bf16 %v1977, %v1977
    %v1985 = vpack.c.bf16 %v1979, %v1979
    %v1986 = vpack.c.bf16 %v1981, %v1981
    %v1987 = vld [vmem:[#allocation11] sm:$0xf]
    %v1988 = vld [vmem:[#allocation11 + $0x4] sm:$0xf]
    %v1989 = vld [vmem:[#allocation11 + $0x8] sm:$0xf]
    %v1990 = vld [vmem:[#allocation11 + $0xc] sm:$0xf]
    %v1991 = vld [vmem:[#allocation11 + $0x10] sm:$0xf]
    %v1992 = vld [vmem:[#allocation11 + $0x14] sm:$0xf]
    %v1993 = vld [vmem:[#allocation11 + $0x18] sm:$0xf]
    %v1994 = vld [vmem:[#allocation11 + $0x1c] sm:$0xf]
    %v1995 = vld [vmem:[#allocation11 + $0x20] sm:$0xf]
    %v1996 = vld [vmem:[#allocation11 + $0x24] sm:$0xf]
    %v1997 = vld [vmem:[#allocation11 + $0x28] sm:$0xf]
    %v1998 = vld [vmem:[#allocation11 + $0x2c] sm:$0xf]
    %v1999 = vld [vmem:[#allocation11 + $0x30] sm:$0xf]
    %v2000 = vld [vmem:[#allocation11 + $0x34] sm:$0xf]
    %v2001 = vld [vmem:[#allocation11 + $0x38] sm:$0xf]
    %v2002 = vld [vmem:[#allocation11 + $0x3c] sm:$0xf]
    %v2003 = vld [vmem:[#allocation11 + $0x40] sm:$0xf]
    %v2004 = vld [vmem:[#allocation11 + $0x44] sm:$0xf]
    %v2005 = vld [vmem:[#allocation11 + $0x48] sm:$0xf]
    %v2006 = vld [vmem:[#allocation11 + $0x4c] sm:$0xf]
    %v2007 = vld [vmem:[#allocation11 + $0x50] sm:$0xf]
    %v2008 = vld [vmem:[#allocation11 + $0x54] sm:$0xf]
    %v2009 = vld [vmem:[#allocation11 + $0x58] sm:$0xf]
    %v2010 = vld [vmem:[#allocation11 + $0x5c] sm:$0xf]
    %v2011 = vld [vmem:[#allocation11 + $0x60] sm:$0xf]
    %v2012 = vld [vmem:[#allocation11 + $0x64] sm:$0xf]
    %v2013 = vld [vmem:[#allocation11 + $0x68] sm:$0xf]
    %v2014 = vld [vmem:[#allocation11 + $0x6c] sm:$0xf]
    %v2015 = vld [vmem:[#allocation11 + $0x70] sm:$0xf]
    %v2016 = vld [vmem:[#allocation11 + $0x74] sm:$0xf]
    %v2017 = vld [vmem:[#allocation11 + $0x78] sm:$0xf]
    %v2018 = vld [vmem:[#allocation11 + $0x7c] sm:$0xf]
    %v2019 = vld [vmem:[#allocation11 + $0x80] sm:$0xf]
    %v2020 = vld [vmem:[#allocation11 + $0x84] sm:$0xf]
    %v2021 = vld [vmem:[#allocation11 + $0x88] sm:$0xf]
    %v2022 = vld [vmem:[#allocation11 + $0x8c] sm:$0xf]
    %v2023 = vld [vmem:[#allocation11 + $0x90] sm:$0xf]
    %v2024 = vld [vmem:[#allocation11 + $0x94] sm:$0xf]
    %v2025 = vld [vmem:[#allocation11 + $0x98] sm:$0xf]
    %v2026 = vld [vmem:[#allocation11 + $0x9c] sm:$0xf]
    %v2027 = vld [vmem:[#allocation11 + $0xa0] sm:$0xf]
    %v2028 = vld [vmem:[#allocation11 + $0xa4] sm:$0xf]
    %v2029 = vld [vmem:[#allocation11 + $0xa8] sm:$0xf]
    %v2030 = vld [vmem:[#allocation11 + $0xac] sm:$0xf]
    %v2031 = vld [vmem:[#allocation11 + $0xb0] sm:$0xf]
    %v2032 = vld [vmem:[#allocation11 + $0xb4] sm:$0xf]
    %v2033 = vld [vmem:[#allocation11 + $0xb8] sm:$0xf]
    %v2034 = vld [vmem:[#allocation11 + $0xbc] sm:$0xf]
    %v2035 = vld [vmem:[#allocation11 + $0xc0] sm:$0xf]
    %v2036 = vld [vmem:[#allocation11 + $0xc4] sm:$0xf]
    %v2037 = vld [vmem:[#allocation11 + $0xc8] sm:$0xf]
    %v2038 = vld [vmem:[#allocation11 + $0xcc] sm:$0xf]
    %v2039 = vld [vmem:[#allocation11 + $0xd0] sm:$0xf]
    %v2040 = vld [vmem:[#allocation11 + $0xd4] sm:$0xf]
    %v2041 = vld [vmem:[#allocation11 + $0xd8] sm:$0xf]
    %v2042 = vld [vmem:[#allocation11 + $0xdc] sm:$0xf]
    %v2043 = vld [vmem:[#allocation11 + $0xe0] sm:$0xf]
    %v2044 = vld [vmem:[#allocation11 + $0xe4] sm:$0xf]
    %v2045 = vld [vmem:[#allocation11 + $0xe8] sm:$0xf]
    %v2046 = vld [vmem:[#allocation11 + $0xec] sm:$0xf]
    %v2047 = vld [vmem:[#allocation11 + $0xf0] sm:$0xf]
    %v2048 = vld [vmem:[#allocation11 + $0xf4] sm:$0xf]
    %v2049 = vld [vmem:[#allocation11 + $0xf8] sm:$0xf]
    %v2050 = vld [vmem:[#allocation11 + $0xfc] sm:$0xf]
    %v2051 = vld [vmem:[%s6] sm:$0x1]
    %v2053 = vperm.slane %v2051, 0
    %v2119 = vunpack.c.l.b16 %v1987
    %v2120 = vunpack.c.l.b16 %v1988
    %v2121 = vunpack.c.l.b16 %v1989
    %v2122 = vunpack.c.l.b16 %v1990
    %v2123 = vunpack.c.l.b16 %v1991
    %v2124 = vunpack.c.l.b16 %v1992
    %v2125 = vunpack.c.l.b16 %v1993
    %v2126 = vunpack.c.l.b16 %v1994
    %v2127 = vunpack.c.l.b16 %v1995
    %v2128 = vunpack.c.l.b16 %v1996
    %v2129 = vunpack.c.l.b16 %v1997
    %v2130 = vunpack.c.l.b16 %v1998
    %v2131 = vunpack.c.l.b16 %v1999
    %v2132 = vunpack.c.l.b16 %v2000
    %v2133 = vunpack.c.l.b16 %v2001
    %v2134 = vunpack.c.l.b16 %v2002
    %v2135 = vunpack.c.l.b16 %v2003
    %v2136 = vunpack.c.l.b16 %v2004
    %v2137 = vunpack.c.l.b16 %v2005
    %v2138 = vunpack.c.l.b16 %v2006
    %v2139 = vunpack.c.l.b16 %v2007
    %v2140 = vunpack.c.l.b16 %v2008
    %v2141 = vunpack.c.l.b16 %v2009
    %v2142 = vunpack.c.l.b16 %v2010
    %v2143 = vunpack.c.l.b16 %v2011
    %v2144 = vunpack.c.l.b16 %v2012
    %v2145 = vunpack.c.l.b16 %v2013
    %v2146 = vunpack.c.l.b16 %v2014
    %v2147 = vunpack.c.l.b16 %v2015
    %v2148 = vunpack.c.l.b16 %v2016
    %v2149 = vunpack.c.l.b16 %v2017
    %v2150 = vunpack.c.l.b16 %v2018
    %v2151 = vunpack.c.l.b16 %v2019
    %v2152 = vunpack.c.l.b16 %v2020
    %v2153 = vunpack.c.l.b16 %v2021
    %v2154 = vunpack.c.l.b16 %v2022
    %v2155 = vunpack.c.l.b16 %v2023
    %v2156 = vunpack.c.l.b16 %v2024
    %v2157 = vunpack.c.l.b16 %v2025
    %v2158 = vunpack.c.l.b16 %v2026
    %v2159 = vunpack.c.l.b16 %v2027
    %v2160 = vunpack.c.l.b16 %v2028
    %v2161 = vunpack.c.l.b16 %v2029
    %v2162 = vunpack.c.l.b16 %v2030
    %v2163 = vunpack.c.l.b16 %v2031
    %v2164 = vunpack.c.l.b16 %v2032
    %v2165 = vunpack.c.l.b16 %v2033
    %v2166 = vunpack.c.l.b16 %v2034
    %v2167 = vunpack.c.l.b16 %v2035
    %v2168 = vunpack.c.l.b16 %v2036
    %v2169 = vunpack.c.l.b16 %v2037
    %v2170 = vunpack.c.l.b16 %v2038
    %v2171 = vunpack.c.l.b16 %v2039
    %v2172 = vunpack.c.l.b16 %v2040
    %v2173 = vunpack.c.l.b16 %v2041
    %v2174 = vunpack.c.l.b16 %v2042
    %v2175 = vunpack.c.l.b16 %v2043
    %v2176 = vunpack.c.l.b16 %v2044
    %v2177 = vunpack.c.l.b16 %v2045
    %v2178 = vunpack.c.l.b16 %v2046
    %v2179 = vunpack.c.l.b16 %v2047
    %v2180 = vunpack.c.l.b16 %v2048
    %v2181 = vunpack.c.l.b16 %v2049
    %v2182 = vunpack.c.l.b16 %v2050
    %v2183 = vpack.c.b16 %v2120, %v2119
    %v2184 = vpack.c.b16 %v2122, %v2121
    %v2185 = vpack.c.b16 %v2124, %v2123
    %v2186 = vpack.c.b16 %v2126, %v2125
    %v2187 = vpack.c.b16 %v2128, %v2127
    %v2188 = vpack.c.b16 %v2130, %v2129
    %v2189 = vpack.c.b16 %v2132, %v2131
    %v2190 = vpack.c.b16 %v2134, %v2133
    %v2191 = vpack.c.b16 %v2136, %v2135
    %v2192 = vpack.c.b16 %v2138, %v2137
    %v2193 = vpack.c.b16 %v2140, %v2139
    %v2194 = vpack.c.b16 %v2142, %v2141
    %v2195 = vpack.c.b16 %v2144, %v2143
    %v2196 = vpack.c.b16 %v2146, %v2145
    %v2197 = vpack.c.b16 %v2148, %v2147
    %v2198 = vpack.c.b16 %v2150, %v2149
    %v2199 = vpack.c.b16 %v2152, %v2151
    %v2200 = vpack.c.b16 %v2154, %v2153
    %v2201 = vpack.c.b16 %v2156, %v2155
    %v2202 = vpack.c.b16 %v2158, %v2157
    %v2203 = vpack.c.b16 %v2160, %v2159
    %v2204 = vpack.c.b16 %v2162, %v2161
    %v2205 = vpack.c.b16 %v2164, %v2163
    %v2206 = vpack.c.b16 %v2166, %v2165
    %v2207 = vpack.c.b16 %v2168, %v2167
    %v2208 = vpack.c.b16 %v2170, %v2169
    %v2209 = vpack.c.b16 %v2172, %v2171
    %v2210 = vpack.c.b16 %v2174, %v2173
    %v2211 = vpack.c.b16 %v2176, %v2175
    %v2212 = vpack.c.b16 %v2178, %v2177
    %v2213 = vpack.c.b16 %v2180, %v2179
    %v2214 = vpack.c.b16 %v2182, %v2181
    %2247 = vmatpush.bf16.msra.mxu0 %v2190
    %2248 = vmatpush.bf16.msra.mxu0 %v2189
    %2249 = vmatpush.bf16.msra.mxu0 %v2188
    %2250 = vmatpush.bf16.msra.mxu0 %v2187
    %2251 = vmatpush.bf16.msra.mxu0 %v2186
    %2252 = vmatpush.bf16.msra.mxu0 %v2185
    %2253 = vmatpush.bf16.msra.mxu0 %v2184
    %2254 = vmatpush.bf16.msra.mxu0 %v2183
    %2255 = vmatmul.bf16.gmra.mxu0 %v1983
    %v2256 = vpop.f32.mrf.mxu0
    %v2257 = vadd.f32 %v2053, %v2256
    %v2258 = vpop.f32.mrf.mxu0
    %2259 = vdwg.mxu0
    %2260 = vmatpush.bf16.msra.mxu0 %v2198
    %2261 = vmatpush.bf16.msra.mxu0 %v2197
    %2262 = vmatpush.bf16.msra.mxu0 %v2196
    %2263 = vmatpush.bf16.msra.mxu0 %v2195
    %2264 = vmatpush.bf16.msra.mxu0 %v2194
    %2265 = vmatpush.bf16.msra.mxu0 %v2193
    %2266 = vmatpush.bf16.msra.mxu0 %v2192
    %2267 = vmatpush.bf16.msra.mxu0 %v2191
    %2268 = vmatmul.bf16.gmra.mxu0 %v1984
    %v2269 = vpop.f32.mrf.mxu0
    %v2270 = vadd.f32 %v2257, %v2269
    %v2271 = vpop.f32.mrf.mxu0
    %2272 = vdwg.mxu0
    %2273 = vmatpush.bf16.msra.mxu0 %v2206
    %2274 = vmatpush.bf16.msra.mxu0 %v2205
    %2275 = vmatpush.bf16.msra.mxu0 %v2204
    %2276 = vmatpush.bf16.msra.mxu0 %v2203
    %2277 = vmatpush.bf16.msra.mxu0 %v2202
    %2278 = vmatpush.bf16.msra.mxu0 %v2201
    %2279 = vmatpush.bf16.msra.mxu0 %v2200
    %2280 = vmatpush.bf16.msra.mxu0 %v2199
    %2281 = vmatmul.bf16.gmra.mxu0 %v1985
    %v2282 = vpop.f32.mrf.mxu0
    %v2283 = vadd.f32 %v2270, %v2282
    %v2284 = vpop.f32.mrf.mxu0
    %2285 = vdwg.mxu0
    %2286 = vmatpush.bf16.msra.mxu0 %v2214
    %2287 = vmatpush.bf16.msra.mxu0 %v2213
    %2288 = vmatpush.bf16.msra.mxu0 %v2212
    %2289 = vmatpush.bf16.msra.mxu0 %v2211
    %2290 = vmatpush.bf16.msra.mxu0 %v2210
    %2291 = vmatpush.bf16.msra.mxu0 %v2209
    %2292 = vmatpush.bf16.msra.mxu0 %v2208
    %2293 = vmatpush.bf16.msra.mxu0 %v2207
    %2294 = vmatmul.bf16.gmra.mxu0 %v1986
    %v2295 = vpop.f32.mrf.mxu0
    %v2296 = vadd.f32 %v2283, %v2295
    %v2297 = vpop.f32.mrf.mxu0
    %2298 = vdwg.mxu0
    %vm2299 = vcmp.gt.f32.partialorder %v2296, 0.0
    %v2300 = vmul.f32 %v2296, 1.442695
    %v2301 = vpow.pop %v2300
    %v2302 = vsub.f32 %v2301, 1.0
    %v2303 = vsel %vm2299, %v2296, %v2302
    %v2305 = vrot.slane %v2303, 5
    %v2307 = vsel %vm1936, 0.0, %v2305
    %v2309 = vrot.slane %v2307, 1
    %v2311 = vrot.slane %v2307, 2
    %v2313 = vrot.slane %v2307, 3
    %v2315 = vpack.c.bf16 %v2307, %v2307
    %v2316 = vpack.c.bf16 %v2309, %v2309
    %v2317 = vpack.c.bf16 %v2311, %v2311
    %v2318 = vpack.c.bf16 %v2313, %v2313
    %s2319 = scalar_lea.vmem [#allocation11], 256
    %v2320 = vld [vmem:[%s2319] sm:$0xf]
    %v2321 = vld [vmem:[%s2319 + $0x4] sm:$0xf]
    %v2322 = vld [vmem:[%s2319 + $0x8] sm:$0xf]
    %v2323 = vld [vmem:[%s2319 + $0xc] sm:$0xf]
    %v2324 = vld [vmem:[%s2319 + $0x10] sm:$0xf]
    %v2325 = vld [vmem:[%s2319 + $0x14] sm:$0xf]
    %v2326 = vld [vmem:[%s2319 + $0x18] sm:$0xf]
    %v2327 = vld [vmem:[%s2319 + $0x1c] sm:$0xf]
    %v2328 = vld [vmem:[%s2319 + $0x20] sm:$0xf]
    %v2329 = vld [vmem:[%s2319 + $0x24] sm:$0xf]
    %v2330 = vld [vmem:[%s2319 + $0x28] sm:$0xf]
    %v2331 = vld [vmem:[%s2319 + $0x2c] sm:$0xf]
    %v2332 = vld [vmem:[%s2319 + $0x30] sm:$0xf]
    %v2333 = vld [vmem:[%s2319 + $0x34] sm:$0xf]
    %v2334 = vld [vmem:[%s2319 + $0x38] sm:$0xf]
    %v2335 = vld [vmem:[%s2319 + $0x3c] sm:$0xf]
    %v2336 = vld [vmem:[%s2319 + $0x40] sm:$0xf]
    %v2337 = vld [vmem:[%s2319 + $0x44] sm:$0xf]
    %v2338 = vld [vmem:[%s2319 + $0x48] sm:$0xf]
    %v2339 = vld [vmem:[%s2319 + $0x4c] sm:$0xf]
    %v2340 = vld [vmem:[%s2319 + $0x50] sm:$0xf]
    %v2341 = vld [vmem:[%s2319 + $0x54] sm:$0xf]
    %v2342 = vld [vmem:[%s2319 + $0x58] sm:$0xf]
    %v2343 = vld [vmem:[%s2319 + $0x5c] sm:$0xf]
    %v2344 = vld [vmem:[%s2319 + $0x60] sm:$0xf]
    %v2345 = vld [vmem:[%s2319 + $0x64] sm:$0xf]
    %v2346 = vld [vmem:[%s2319 + $0x68] sm:$0xf]
    %v2347 = vld [vmem:[%s2319 + $0x6c] sm:$0xf]
    %v2348 = vld [vmem:[%s2319 + $0x70] sm:$0xf]
    %v2349 = vld [vmem:[%s2319 + $0x74] sm:$0xf]
    %v2350 = vld [vmem:[%s2319 + $0x78] sm:$0xf]
    %v2351 = vld [vmem:[%s2319 + $0x7c] sm:$0xf]
    %v2352 = vld [vmem:[%s2319 + $0x80] sm:$0xf]
    %v2353 = vld [vmem:[%s2319 + $0x84] sm:$0xf]
    %v2354 = vld [vmem:[%s2319 + $0x88] sm:$0xf]
    %v2355 = vld [vmem:[%s2319 + $0x8c] sm:$0xf]
    %v2356 = vld [vmem:[%s2319 + $0x90] sm:$0xf]
    %v2357 = vld [vmem:[%s2319 + $0x94] sm:$0xf]
    %v2358 = vld [vmem:[%s2319 + $0x98] sm:$0xf]
    %v2359 = vld [vmem:[%s2319 + $0x9c] sm:$0xf]
    %v2360 = vld [vmem:[%s2319 + $0xa0] sm:$0xf]
    %v2361 = vld [vmem:[%s2319 + $0xa4] sm:$0xf]
    %v2362 = vld [vmem:[%s2319 + $0xa8] sm:$0xf]
    %v2363 = vld [vmem:[%s2319 + $0xac] sm:$0xf]
    %v2364 = vld [vmem:[%s2319 + $0xb0] sm:$0xf]
    %v2365 = vld [vmem:[%s2319 + $0xb4] sm:$0xf]
    %v2366 = vld [vmem:[%s2319 + $0xb8] sm:$0xf]
    %v2367 = vld [vmem:[%s2319 + $0xbc] sm:$0xf]
    %v2368 = vld [vmem:[%s2319 + $0xc0] sm:$0xf]
    %v2369 = vld [vmem:[%s2319 + $0xc4] sm:$0xf]
    %v2370 = vld [vmem:[%s2319 + $0xc8] sm:$0xf]
    %v2371 = vld [vmem:[%s2319 + $0xcc] sm:$0xf]
    %v2372 = vld [vmem:[%s2319 + $0xd0] sm:$0xf]
    %v2373 = vld [vmem:[%s2319 + $0xd4] sm:$0xf]
    %v2374 = vld [vmem:[%s2319 + $0xd8] sm:$0xf]
    %v2375 = vld [vmem:[%s2319 + $0xdc] sm:$0xf]
    %v2376 = vld [vmem:[%s2319 + $0xe0] sm:$0xf]
    %v2377 = vld [vmem:[%s2319 + $0xe4] sm:$0xf]
    %v2378 = vld [vmem:[%s2319 + $0xe8] sm:$0xf]
    %v2379 = vld [vmem:[%s2319 + $0xec] sm:$0xf]
    %v2380 = vld [vmem:[%s2319 + $0xf0] sm:$0xf]
    %v2381 = vld [vmem:[%s2319 + $0xf4] sm:$0xf]
    %v2382 = vld [vmem:[%s2319 + $0xf8] sm:$0xf]
    %v2383 = vld [vmem:[%s2319 + $0xfc] sm:$0xf]
    %s2384 = scalar_lea.vmem %s6, 1
    %v2385 = vld [vmem:[%s2384] sm:$0x1]
    %v2387 = vperm.slane %v2385, 0
    %v2453 = vunpack.c.l.b16 %v2320
    %v2454 = vunpack.c.l.b16 %v2321
    %v2455 = vunpack.c.l.b16 %v2322
    %v2456 = vunpack.c.l.b16 %v2323
    %v2457 = vunpack.c.l.b16 %v2324
    %v2458 = vunpack.c.l.b16 %v2325
    %v2459 = vunpack.c.l.b16 %v2326
    %v2460 = vunpack.c.l.b16 %v2327
    %v2461 = vunpack.c.l.b16 %v2328
    %v2462 = vunpack.c.l.b16 %v2329
    %v2463 = vunpack.c.l.b16 %v2330
    %v2464 = vunpack.c.l.b16 %v2331
    %v2465 = vunpack.c.l.b16 %v2332
    %v2466 = vunpack.c.l.b16 %v2333
    %v2467 = vunpack.c.l.b16 %v2334
    %v2468 = vunpack.c.l.b16 %v2335
    %v2469 = vunpack.c.l.b16 %v2336
    %v2470 = vunpack.c.l.b16 %v2337
    %v2471 = vunpack.c.l.b16 %v2338
    %v2472 = vunpack.c.l.b16 %v2339
    %v2473 = vunpack.c.l.b16 %v2340
    %v2474 = vunpack.c.l.b16 %v2341
    %v2475 = vunpack.c.l.b16 %v2342
    %v2476 = vunpack.c.l.b16 %v2343
    %v2477 = vunpack.c.l.b16 %v2344
    %v2478 = vunpack.c.l.b16 %v2345
    %v2479 = vunpack.c.l.b16 %v2346
    %v2480 = vunpack.c.l.b16 %v2347
    %v2481 = vunpack.c.l.b16 %v2348
    %v2482 = vunpack.c.l.b16 %v2349
    %v2483 = vunpack.c.l.b16 %v2350
    %v2484 = vunpack.c.l.b16 %v2351
    %v2485 = vunpack.c.l.b16 %v2352
    %v2486 = vunpack.c.l.b16 %v2353
    %v2487 = vunpack.c.l.b16 %v2354
    %v2488 = vunpack.c.l.b16 %v2355
    %v2489 = vunpack.c.l.b16 %v2356
    %v2490 = vunpack.c.l.b16 %v2357
    %v2491 = vunpack.c.l.b16 %v2358
    %v2492 = vunpack.c.l.b16 %v2359
    %v2493 = vunpack.c.l.b16 %v2360
    %v2494 = vunpack.c.l.b16 %v2361
    %v2495 = vunpack.c.l.b16 %v2362
    %v2496 = vunpack.c.l.b16 %v2363
    %v2497 = vunpack.c.l.b16 %v2364
    %v2498 = vunpack.c.l.b16 %v2365
    %v2499 = vunpack.c.l.b16 %v2366
    %v2500 = vunpack.c.l.b16 %v2367
    %v2501 = vunpack.c.l.b16 %v2368
    %v2502 = vunpack.c.l.b16 %v2369
    %v2503 = vunpack.c.l.b16 %v2370
    %v2504 = vunpack.c.l.b16 %v2371
    %v2505 = vunpack.c.l.b16 %v2372
    %v2506 = vunpack.c.l.b16 %v2373
    %v2507 = vunpack.c.l.b16 %v2374
    %v2508 = vunpack.c.l.b16 %v2375
    %v2509 = vunpack.c.l.b16 %v2376
    %v2510 = vunpack.c.l.b16 %v2377
    %v2511 = vunpack.c.l.b16 %v2378
    %v2512 = vunpack.c.l.b16 %v2379
    %v2513 = vunpack.c.l.b16 %v2380
    %v2514 = vunpack.c.l.b16 %v2381
    %v2515 = vunpack.c.l.b16 %v2382
    %v2516 = vunpack.c.l.b16 %v2383
    %v2517 = vpack.c.b16 %v2454, %v2453
    %v2518 = vpack.c.b16 %v2456, %v2455
    %v2519 = vpack.c.b16 %v2458, %v2457
    %v2520 = vpack.c.b16 %v2460, %v2459
    %v2521 = vpack.c.b16 %v2462, %v2461
    %v2522 = vpack.c.b16 %v2464, %v2463
    %v2523 = vpack.c.b16 %v2466, %v2465
    %v2524 = vpack.c.b16 %v2468, %v2467
    %v2525 = vpack.c.b16 %v2470, %v2469
    %v2526 = vpack.c.b16 %v2472, %v2471
    %v2527 = vpack.c.b16 %v2474, %v2473
    %v2528 = vpack.c.b16 %v2476, %v2475
    %v2529 = vpack.c.b16 %v2478, %v2477
    %v2530 = vpack.c.b16 %v2480, %v2479
    %v2531 = vpack.c.b16 %v2482, %v2481
    %v2532 = vpack.c.b16 %v2484, %v2483
    %v2533 = vpack.c.b16 %v2486, %v2485
    %v2534 = vpack.c.b16 %v2488, %v2487
    %v2535 = vpack.c.b16 %v2490, %v2489
    %v2536 = vpack.c.b16 %v2492, %v2491
    %v2537 = vpack.c.b16 %v2494, %v2493
    %v2538 = vpack.c.b16 %v2496, %v2495
    %v2539 = vpack.c.b16 %v2498, %v2497
    %v2540 = vpack.c.b16 %v2500, %v2499
    %v2541 = vpack.c.b16 %v2502, %v2501
    %v2542 = vpack.c.b16 %v2504, %v2503
    %v2543 = vpack.c.b16 %v2506, %v2505
    %v2544 = vpack.c.b16 %v2508, %v2507
    %v2545 = vpack.c.b16 %v2510, %v2509
    %v2546 = vpack.c.b16 %v2512, %v2511
    %v2547 = vpack.c.b16 %v2514, %v2513
    %v2548 = vpack.c.b16 %v2516, %v2515
    %2581 = vmatpush.bf16.msra.mxu0 %v2524
    %2582 = vmatpush.bf16.msra.mxu0 %v2523
    %2583 = vmatpush.bf16.msra.mxu0 %v2522
    %2584 = vmatpush.bf16.msra.mxu0 %v2521
    %2585 = vmatpush.bf16.msra.mxu0 %v2520
    %2586 = vmatpush.bf16.msra.mxu0 %v2519
    %2587 = vmatpush.bf16.msra.mxu0 %v2518
    %2588 = vmatpush.bf16.msra.mxu0 %v2517
    %2589 = vmatmul.bf16.gmra.mxu0 %v2315
    %v2590 = vpop.f32.mrf.mxu0
    %v2591 = vadd.f32 %v2387, %v2590
    %v2592 = vpop.f32.mrf.mxu0
    %2593 = vdwg.mxu0
    %2594 = vmatpush.bf16.msra.mxu0 %v2532
    %2595 = vmatpush.bf16.msra.mxu0 %v2531
    %2596 = vmatpush.bf16.msra.mxu0 %v2530
    %2597 = vmatpush.bf16.msra.mxu0 %v2529
    %2598 = vmatpush.bf16.msra.mxu0 %v2528
    %2599 = vmatpush.bf16.msra.mxu0 %v2527
    %2600 = vmatpush.bf16.msra.mxu0 %v2526
    %2601 = vmatpush.bf16.msra.mxu0 %v2525
    %2602 = vmatmul.bf16.gmra.mxu0 %v2316
    %v2603 = vpop.f32.mrf.mxu0
    %v2604 = vadd.f32 %v2591, %v2603
    %v2605 = vpop.f32.mrf.mxu0
    %2606 = vdwg.mxu0
    %2607 = vmatpush.bf16.msra.mxu0 %v2540
    %2608 = vmatpush.bf16.msra.mxu0 %v2539
    %2609 = vmatpush.bf16.msra.mxu0 %v2538
    %2610 = vmatpush.bf16.msra.mxu0 %v2537
    %2611 = vmatpush.bf16.msra.mxu0 %v2536
    %2612 = vmatpush.bf16.msra.mxu0 %v2535
    %2613 = vmatpush.bf16.msra.mxu0 %v2534
    %2614 = vmatpush.bf16.msra.mxu0 %v2533
    %2615 = vmatmul.bf16.gmra.mxu0 %v2317
    %v2616 = vpop.f32.mrf.mxu0
    %v2617 = vadd.f32 %v2604, %v2616
    %v2618 = vpop.f32.mrf.mxu0
    %2619 = vdwg.mxu0
    %2620 = vmatpush.bf16.msra.mxu0 %v2548
    %2621 = vmatpush.bf16.msra.mxu0 %v2547
    %2622 = vmatpush.bf16.msra.mxu0 %v2546
    %2623 = vmatpush.bf16.msra.mxu0 %v2545
    %2624 = vmatpush.bf16.msra.mxu0 %v2544
    %2625 = vmatpush.bf16.msra.mxu0 %v2543
    %2626 = vmatpush.bf16.msra.mxu0 %v2542
    %2627 = vmatpush.bf16.msra.mxu0 %v2541
    %2628 = vmatmul.bf16.gmra.mxu0 %v2318
    %v2629 = vpop.f32.mrf.mxu0
    %v2630 = vadd.f32 %v2617, %v2629
    %v2631 = vpop.f32.mrf.mxu0
    %2632 = vdwg.mxu0
    %vm2633 = vcmp.gt.f32.partialorder %v2630, 0.0
    %v2634 = vmul.f32 %v2630, 1.442695
    %v2635 = vpow.pop %v2634
    %v2636 = vsub.f32 %v2635, 1.0
    %v2637 = vsel %vm2633, %v2630, %v2636
    %v2638 = vadd.f32 %v2637, %v1971
    %vm2639 = vcmp.gt.f32.partialorder %v2638, 0.0
    %v2640 = vmul.f32 %v2638, 1.442695
    %v2641 = vpow.pop %v2640
    %v2642 = vsub.f32 %v2641, 1.0
    %v2643 = vsel %vm2639, %v2638, %v2642
    %v2645 = vrot.slane %v2643, 2
    %vm2647 = vcmask 1045504
    %v2648 = vsel %vm2647, 0.0, %v2645
    %v2650 = vrot.slane %v2648, 2
    %v2652 = vrot.slane %v2648, 4
    %v2654 = vrot.slane %v2648, 6
    %v2655 = vrot.slane %v2645, 6
    %v2656 = vsel %vm1934, %v2654, %v2655
    %v2658 = vpack.c.bf16 %v2648, %v2648
    %v2659 = vpack.c.bf16 %v2650, %v2650
    %v2660 = vpack.c.bf16 %v2652, %v2652
    %v2661 = vpack.c.bf16 %v2656, %v2656
    %s2662 = scalar_lea.vmem [#allocation11], 512
    %v2663 = vld [vmem:[%s2662] sm:$0xf]
    %v2664 = vld [vmem:[%s2662 + $0x4] sm:$0xf]
    %v2665 = vld [vmem:[%s2662 + $0x8] sm:$0xf]
    %v2666 = vld [vmem:[%s2662 + $0xc] sm:$0xf]
    %v2667 = vld [vmem:[%s2662 + $0x10] sm:$0xf]
    %v2668 = vld [vmem:[%s2662 + $0x14] sm:$0xf]
    %v2669 = vld [vmem:[%s2662 + $0x18] sm:$0xf]
    %v2670 = vld [vmem:[%s2662 + $0x1c] sm:$0xf]
    %v2671 = vld [vmem:[%s2662 + $0x20] sm:$0xf]
    %v2672 = vld [vmem:[%s2662 + $0x24] sm:$0xf]
    %v2673 = vld [vmem:[%s2662 + $0x28] sm:$0xf]
    %v2674 = vld [vmem:[%s2662 + $0x2c] sm:$0xf]
    %v2675 = vld [vmem:[%s2662 + $0x30] sm:$0xf]
    %v2676 = vld [vmem:[%s2662 + $0x34] sm:$0xf]
    %v2677 = vld [vmem:[%s2662 + $0x38] sm:$0xf]
    %v2678 = vld [vmem:[%s2662 + $0x3c] sm:$0xf]
    %v2679 = vld [vmem:[%s2662 + $0x40] sm:$0xf]
    %v2680 = vld [vmem:[%s2662 + $0x44] sm:$0xf]
    %v2681 = vld [vmem:[%s2662 + $0x48] sm:$0xf]
    %v2682 = vld [vmem:[%s2662 + $0x4c] sm:$0xf]
    %v2683 = vld [vmem:[%s2662 + $0x50] sm:$0xf]
    %v2684 = vld [vmem:[%s2662 + $0x54] sm:$0xf]
    %v2685 = vld [vmem:[%s2662 + $0x58] sm:$0xf]
    %v2686 = vld [vmem:[%s2662 + $0x5c] sm:$0xf]
    %v2687 = vld [vmem:[%s2662 + $0x60] sm:$0xf]
    %v2688 = vld [vmem:[%s2662 + $0x64] sm:$0xf]
    %v2689 = vld [vmem:[%s2662 + $0x68] sm:$0xf]
    %v2690 = vld [vmem:[%s2662 + $0x6c] sm:$0xf]
    %v2691 = vld [vmem:[%s2662 + $0x70] sm:$0xf]
    %v2692 = vld [vmem:[%s2662 + $0x74] sm:$0xf]
    %v2693 = vld [vmem:[%s2662 + $0x78] sm:$0xf]
    %v2694 = vld [vmem:[%s2662 + $0x7c] sm:$0xf]
    %v2695 = vld [vmem:[%s2662 + $0x80] sm:$0xf]
    %v2696 = vld [vmem:[%s2662 + $0x84] sm:$0xf]
    %v2697 = vld [vmem:[%s2662 + $0x88] sm:$0xf]
    %v2698 = vld [vmem:[%s2662 + $0x8c] sm:$0xf]
    %v2699 = vld [vmem:[%s2662 + $0x90] sm:$0xf]
    %v2700 = vld [vmem:[%s2662 + $0x94] sm:$0xf]
    %v2701 = vld [vmem:[%s2662 + $0x98] sm:$0xf]
    %v2702 = vld [vmem:[%s2662 + $0x9c] sm:$0xf]
    %v2703 = vld [vmem:[%s2662 + $0xa0] sm:$0xf]
    %v2704 = vld [vmem:[%s2662 + $0xa4] sm:$0xf]
    %v2705 = vld [vmem:[%s2662 + $0xa8] sm:$0xf]
    %v2706 = vld [vmem:[%s2662 + $0xac] sm:$0xf]
    %v2707 = vld [vmem:[%s2662 + $0xb0] sm:$0xf]
    %v2708 = vld [vmem:[%s2662 + $0xb4] sm:$0xf]
    %v2709 = vld [vmem:[%s2662 + $0xb8] sm:$0xf]
    %v2710 = vld [vmem:[%s2662 + $0xbc] sm:$0xf]
    %v2711 = vld [vmem:[%s2662 + $0xc0] sm:$0xf]
    %v2712 = vld [vmem:[%s2662 + $0xc4] sm:$0xf]
    %v2713 = vld [vmem:[%s2662 + $0xc8] sm:$0xf]
    %v2714 = vld [vmem:[%s2662 + $0xcc] sm:$0xf]
    %v2715 = vld [vmem:[%s2662 + $0xd0] sm:$0xf]
    %v2716 = vld [vmem:[%s2662 + $0xd4] sm:$0xf]
    %v2717 = vld [vmem:[%s2662 + $0xd8] sm:$0xf]
    %v2718 = vld [vmem:[%s2662 + $0xdc] sm:$0xf]
    %v2719 = vld [vmem:[%s2662 + $0xe0] sm:$0xf]
    %v2720 = vld [vmem:[%s2662 + $0xe4] sm:$0xf]
    %v2721 = vld [vmem:[%s2662 + $0xe8] sm:$0xf]
    %v2722 = vld [vmem:[%s2662 + $0xec] sm:$0xf]
    %v2723 = vld [vmem:[%s2662 + $0xf0] sm:$0xf]
    %v2724 = vld [vmem:[%s2662 + $0xf4] sm:$0xf]
    %v2725 = vld [vmem:[%s2662 + $0xf8] sm:$0xf]
    %v2726 = vld [vmem:[%s2662 + $0xfc] sm:$0xf]
    %s2727 = scalar_lea.vmem %s6, 2
    %v2728 = vld [vmem:[%s2727] sm:$0x1]
    %v2730 = vperm.slane %v2728, 0
    %v2796 = vunpack.c.l.b16 %v2663
    %v2797 = vunpack.c.l.b16 %v2664
    %v2798 = vunpack.c.l.b16 %v2665
    %v2799 = vunpack.c.l.b16 %v2666
    %v2800 = vunpack.c.l.b16 %v2667
    %v2801 = vunpack.c.l.b16 %v2668
    %v2802 = vunpack.c.l.b16 %v2669
    %v2803 = vunpack.c.l.b16 %v2670
    %v2804 = vunpack.c.l.b16 %v2671
    %v2805 = vunpack.c.l.b16 %v2672
    %v2806 = vunpack.c.l.b16 %v2673
    %v2807 = vunpack.c.l.b16 %v2674
    %v2808 = vunpack.c.l.b16 %v2675
    %v2809 = vunpack.c.l.b16 %v2676
    %v2810 = vunpack.c.l.b16 %v2677
    %v2811 = vunpack.c.l.b16 %v2678
    %v2812 = vunpack.c.l.b16 %v2679
    %v2813 = vunpack.c.l.b16 %v2680
    %v2814 = vunpack.c.l.b16 %v2681
    %v2815 = vunpack.c.l.b16 %v2682
    %v2816 = vunpack.c.l.b16 %v2683
    %v2817 = vunpack.c.l.b16 %v2684
    %v2818 = vunpack.c.l.b16 %v2685
    %v2819 = vunpack.c.l.b16 %v2686
    %v2820 = vunpack.c.l.b16 %v2687
    %v2821 = vunpack.c.l.b16 %v2688
    %v2822 = vunpack.c.l.b16 %v2689
    %v2823 = vunpack.c.l.b16 %v2690
    %v2824 = vunpack.c.l.b16 %v2691
    %v2825 = vunpack.c.l.b16 %v2692
    %v2826 = vunpack.c.l.b16 %v2693
    %v2827 = vunpack.c.l.b16 %v2694
    %v2828 = vunpack.c.l.b16 %v2695
    %v2829 = vunpack.c.l.b16 %v2696
    %v2830 = vunpack.c.l.b16 %v2697
    %v2831 = vunpack.c.l.b16 %v2698
    %v2832 = vunpack.c.l.b16 %v2699
    %v2833 = vunpack.c.l.b16 %v2700
    %v2834 = vunpack.c.l.b16 %v2701
    %v2835 = vunpack.c.l.b16 %v2702
    %v2836 = vunpack.c.l.b16 %v2703
    %v2837 = vunpack.c.l.b16 %v2704
    %v2838 = vunpack.c.l.b16 %v2705
    %v2839 = vunpack.c.l.b16 %v2706
    %v2840 = vunpack.c.l.b16 %v2707
    %v2841 = vunpack.c.l.b16 %v2708
    %v2842 = vunpack.c.l.b16 %v2709
    %v2843 = vunpack.c.l.b16 %v2710
    %v2844 = vunpack.c.l.b16 %v2711
    %v2845 = vunpack.c.l.b16 %v2712
    %v2846 = vunpack.c.l.b16 %v2713
    %v2847 = vunpack.c.l.b16 %v2714
    %v2848 = vunpack.c.l.b16 %v2715
    %v2849 = vunpack.c.l.b16 %v2716
    %v2850 = vunpack.c.l.b16 %v2717
    %v2851 = vunpack.c.l.b16 %v2718
    %v2852 = vunpack.c.l.b16 %v2719
    %v2853 = vunpack.c.l.b16 %v2720
    %v2854 = vunpack.c.l.b16 %v2721
    %v2855 = vunpack.c.l.b16 %v2722
    %v2856 = vunpack.c.l.b16 %v2723
    %v2857 = vunpack.c.l.b16 %v2724
    %v2858 = vunpack.c.l.b16 %v2725
    %v2859 = vunpack.c.l.b16 %v2726
    %v2860 = vpack.c.b16 %v2797, %v2796
    %v2861 = vpack.c.b16 %v2799, %v2798
    %v2862 = vpack.c.b16 %v2801, %v2800
    %v2863 = vpack.c.b16 %v2803, %v2802
    %v2864 = vpack.c.b16 %v2805, %v2804
    %v2865 = vpack.c.b16 %v2807, %v2806
    %v2866 = vpack.c.b16 %v2809, %v2808
    %v2867 = vpack.c.b16 %v2811, %v2810
    %v2868 = vpack.c.b16 %v2813, %v2812
    %v2869 = vpack.c.b16 %v2815, %v2814
    %v2870 = vpack.c.b16 %v2817, %v2816
    %v2871 = vpack.c.b16 %v2819, %v2818
    %v2872 = vpack.c.b16 %v2821, %v2820
    %v2873 = vpack.c.b16 %v2823, %v2822
    %v2874 = vpack.c.b16 %v2825, %v2824
    %v2875 = vpack.c.b16 %v2827, %v2826
    %v2876 = vpack.c.b16 %v2829, %v2828
    %v2877 = vpack.c.b16 %v2831, %v2830
    %v2878 = vpack.c.b16 %v2833, %v2832
    %v2879 = vpack.c.b16 %v2835, %v2834
    %v2880 = vpack.c.b16 %v2837, %v2836
    %v2881 = vpack.c.b16 %v2839, %v2838
    %v2882 = vpack.c.b16 %v2841, %v2840
    %v2883 = vpack.c.b16 %v2843, %v2842
    %v2884 = vpack.c.b16 %v2845, %v2844
    %v2885 = vpack.c.b16 %v2847, %v2846
    %v2886 = vpack.c.b16 %v2849, %v2848
    %v2887 = vpack.c.b16 %v2851, %v2850
    %v2888 = vpack.c.b16 %v2853, %v2852
    %v2889 = vpack.c.b16 %v2855, %v2854
    %v2890 = vpack.c.b16 %v2857, %v2856
    %v2891 = vpack.c.b16 %v2859, %v2858
    %2924 = vmatpush.bf16.msra.mxu0 %v2867
    %2925 = vmatpush.bf16.msra.mxu0 %v2866
    %2926 = vmatpush.bf16.msra.mxu0 %v2865
    %2927 = vmatpush.bf16.msra.mxu0 %v2864
    %2928 = vmatpush.bf16.msra.mxu0 %v2863
    %2929 = vmatpush.bf16.msra.mxu0 %v2862
    %2930 = vmatpush.bf16.msra.mxu0 %v2861
    %2931 = vmatpush.bf16.msra.mxu0 %v2860
    %2932 = vmatmul.bf16.gmra.mxu0 %v2658
    %v2933 = vpop.f32.mrf.mxu0
    %v2934 = vadd.f32 %v2730, %v2933
    %v2935 = vpop.f32.mrf.mxu0
    %2936 = vdwg.mxu0
    %2937 = vmatpush.bf16.msra.mxu0 %v2875
    %2938 = vmatpush.bf16.msra.mxu0 %v2874
    %2939 = vmatpush.bf16.msra.mxu0 %v2873
    %2940 = vmatpush.bf16.msra.mxu0 %v2872
    %2941 = vmatpush.bf16.msra.mxu0 %v2871
    %2942 = vmatpush.bf16.msra.mxu0 %v2870
    %2943 = vmatpush.bf16.msra.mxu0 %v2869
    %2944 = vmatpush.bf16.msra.mxu0 %v2868
    %2945 = vmatmul.bf16.gmra.mxu0 %v2659
    %v2946 = vpop.f32.mrf.mxu0
    %v2947 = vadd.f32 %v2934, %v2946
    %v2948 = vpop.f32.mrf.mxu0
    %2949 = vdwg.mxu0
    %2950 = vmatpush.bf16.msra.mxu0 %v2883
    %2951 = vmatpush.bf16.msra.mxu0 %v2882
    %2952 = vmatpush.bf16.msra.mxu0 %v2881
    %2953 = vmatpush.bf16.msra.mxu0 %v2880
    %2954 = vmatpush.bf16.msra.mxu0 %v2879
    %2955 = vmatpush.bf16.msra.mxu0 %v2878
    %2956 = vmatpush.bf16.msra.mxu0 %v2877
    %2957 = vmatpush.bf16.msra.mxu0 %v2876
    %2958 = vmatmul.bf16.gmra.mxu0 %v2660
    %v2959 = vpop.f32.mrf.mxu0
    %v2960 = vadd.f32 %v2947, %v2959
    %v2961 = vpop.f32.mrf.mxu0
    %2962 = vdwg.mxu0
    %2963 = vmatpush.bf16.msra.mxu0 %v2891
    %2964 = vmatpush.bf16.msra.mxu0 %v2890
    %2965 = vmatpush.bf16.msra.mxu0 %v2889
    %2966 = vmatpush.bf16.msra.mxu0 %v2888
    %2967 = vmatpush.bf16.msra.mxu0 %v2887
    %2968 = vmatpush.bf16.msra.mxu0 %v2886
    %2969 = vmatpush.bf16.msra.mxu0 %v2885
    %2970 = vmatpush.bf16.msra.mxu0 %v2884
    %2971 = vmatmul.bf16.gmra.mxu0 %v2661
    %v2972 = vpop.f32.mrf.mxu0
    %v2973 = vadd.f32 %v2960, %v2972
    %v2974 = vpop.f32.mrf.mxu0
    %2975 = vdwg.mxu0
    %vm2976 = vcmp.gt.f32.partialorder %v2973, 0.0
    %v2977 = vmul.f32 %v2973, 1.442695
    %v2978 = vpow.pop %v2977
    %v2979 = vsub.f32 %v2978, 1.0
    %v2980 = vsel %vm2976, %v2973, %v2979
    %v2982 = vrot.slane %v2980, 2
    %v2984 = vsel %vm2647, 0.0, %v2982
    %v2986 = vrot.slane %v2984, 2
    %v2988 = vrot.slane %v2984, 4
    %v2990 = vrot.slane %v2984, 6
    %v2991 = vrot.slane %v2982, 6
    %v2992 = vsel %vm1934, %v2990, %v2991
    %v2994 = vpack.c.bf16 %v2984, %v2984
    %v2995 = vpack.c.bf16 %v2986, %v2986
    %v2996 = vpack.c.bf16 %v2988, %v2988
    %v2997 = vpack.c.bf16 %v2992, %v2992
    %s2998 = scalar_lea.vmem [#allocation11], 768
    %v2999 = vld [vmem:[%s2998] sm:$0xf]
    %v3000 = vld [vmem:[%s2998 + $0x4] sm:$0xf]
    %v3001 = vld [vmem:[%s2998 + $0x8] sm:$0xf]
    %v3002 = vld [vmem:[%s2998 + $0xc] sm:$0xf]
    %v3003 = vld [vmem:[%s2998 + $0x10] sm:$0xf]
    %v3004 = vld [vmem:[%s2998 + $0x14] sm:$0xf]
    %v3005 = vld [vmem:[%s2998 + $0x18] sm:$0xf]
    %v3006 = vld [vmem:[%s2998 + $0x1c] sm:$0xf]
    %v3007 = vld [vmem:[%s2998 + $0x20] sm:$0xf]
    %v3008 = vld [vmem:[%s2998 + $0x24] sm:$0xf]
    %v3009 = vld [vmem:[%s2998 + $0x28] sm:$0xf]
    %v3010 = vld [vmem:[%s2998 + $0x2c] sm:$0xf]
    %v3011 = vld [vmem:[%s2998 + $0x30] sm:$0xf]
    %v3012 = vld [vmem:[%s2998 + $0x34] sm:$0xf]
    %v3013 = vld [vmem:[%s2998 + $0x38] sm:$0xf]
    %v3014 = vld [vmem:[%s2998 + $0x3c] sm:$0xf]
    %v3015 = vld [vmem:[%s2998 + $0x40] sm:$0xf]
    %v3016 = vld [vmem:[%s2998 + $0x44] sm:$0xf]
    %v3017 = vld [vmem:[%s2998 + $0x48] sm:$0xf]
    %v3018 = vld [vmem:[%s2998 + $0x4c] sm:$0xf]
    %v3019 = vld [vmem:[%s2998 + $0x50] sm:$0xf]
    %v3020 = vld [vmem:[%s2998 + $0x54] sm:$0xf]
    %v3021 = vld [vmem:[%s2998 + $0x58] sm:$0xf]
    %v3022 = vld [vmem:[%s2998 + $0x5c] sm:$0xf]
    %v3023 = vld [vmem:[%s2998 + $0x60] sm:$0xf]
    %v3024 = vld [vmem:[%s2998 + $0x64] sm:$0xf]
    %v3025 = vld [vmem:[%s2998 + $0x68] sm:$0xf]
    %v3026 = vld [vmem:[%s2998 + $0x6c] sm:$0xf]
    %v3027 = vld [vmem:[%s2998 + $0x70] sm:$0xf]
    %v3028 = vld [vmem:[%s2998 + $0x74] sm:$0xf]
    %v3029 = vld [vmem:[%s2998 + $0x78] sm:$0xf]
    %v3030 = vld [vmem:[%s2998 + $0x7c] sm:$0xf]
    %v3031 = vld [vmem:[%s2998 + $0x80] sm:$0xf]
    %v3032 = vld [vmem:[%s2998 + $0x84] sm:$0xf]
    %v3033 = vld [vmem:[%s2998 + $0x88] sm:$0xf]
    %v3034 = vld [vmem:[%s2998 + $0x8c] sm:$0xf]
    %v3035 = vld [vmem:[%s2998 + $0x90] sm:$0xf]
    %v3036 = vld [vmem:[%s2998 + $0x94] sm:$0xf]
    %v3037 = vld [vmem:[%s2998 + $0x98] sm:$0xf]
    %v3038 = vld [vmem:[%s2998 + $0x9c] sm:$0xf]
    %v3039 = vld [vmem:[%s2998 + $0xa0] sm:$0xf]
    %v3040 = vld [vmem:[%s2998 + $0xa4] sm:$0xf]
    %v3041 = vld [vmem:[%s2998 + $0xa8] sm:$0xf]
    %v3042 = vld [vmem:[%s2998 + $0xac] sm:$0xf]
    %v3043 = vld [vmem:[%s2998 + $0xb0] sm:$0xf]
    %v3044 = vld [vmem:[%s2998 + $0xb4] sm:$0xf]
    %v3045 = vld [vmem:[%s2998 + $0xb8] sm:$0xf]
    %v3046 = vld [vmem:[%s2998 + $0xbc] sm:$0xf]
    %v3047 = vld [vmem:[%s2998 + $0xc0] sm:$0xf]
    %v3048 = vld [vmem:[%s2998 + $0xc4] sm:$0xf]
    %v3049 = vld [vmem:[%s2998 + $0xc8] sm:$0xf]
    %v3050 = vld [vmem:[%s2998 + $0xcc] sm:$0xf]
    %v3051 = vld [vmem:[%s2998 + $0xd0] sm:$0xf]
    %v3052 = vld [vmem:[%s2998 + $0xd4] sm:$0xf]
    %v3053 = vld [vmem:[%s2998 + $0xd8] sm:$0xf]
    %v3054 = vld [vmem:[%s2998 + $0xdc] sm:$0xf]
    %v3055 = vld [vmem:[%s2998 + $0xe0] sm:$0xf]
    %v3056 = vld [vmem:[%s2998 + $0xe4] sm:$0xf]
    %v3057 = vld [vmem:[%s2998 + $0xe8] sm:$0xf]
    %v3058 = vld [vmem:[%s2998 + $0xec] sm:$0xf]
    %v3059 = vld [vmem:[%s2998 + $0xf0] sm:$0xf]
    %v3060 = vld [vmem:[%s2998 + $0xf4] sm:$0xf]
    %v3061 = vld [vmem:[%s2998 + $0xf8] sm:$0xf]
    %v3062 = vld [vmem:[%s2998 + $0xfc] sm:$0xf]
    %s3063 = scalar_lea.vmem %s6, 3
    %v3064 = vld [vmem:[%s3063] sm:$0x1]
    %v3066 = vperm.slane %v3064, 0
    %v3132 = vunpack.c.l.b16 %v2999
    %v3133 = vunpack.c.l.b16 %v3000
    %v3134 = vunpack.c.l.b16 %v3001
    %v3135 = vunpack.c.l.b16 %v3002
    %v3136 = vunpack.c.l.b16 %v3003
    %v3137 = vunpack.c.l.b16 %v3004
    %v3138 = vunpack.c.l.b16 %v3005
    %v3139 = vunpack.c.l.b16 %v3006
    %v3140 = vunpack.c.l.b16 %v3007
    %v3141 = vunpack.c.l.b16 %v3008
    %v3142 = vunpack.c.l.b16 %v3009
    %v3143 = vunpack.c.l.b16 %v3010
    %v3144 = vunpack.c.l.b16 %v3011
    %v3145 = vunpack.c.l.b16 %v3012
    %v3146 = vunpack.c.l.b16 %v3013
    %v3147 = vunpack.c.l.b16 %v3014
    %v3148 = vunpack.c.l.b16 %v3015
    %v3149 = vunpack.c.l.b16 %v3016
    %v3150 = vunpack.c.l.b16 %v3017
    %v3151 = vunpack.c.l.b16 %v3018
    %v3152 = vunpack.c.l.b16 %v3019
    %v3153 = vunpack.c.l.b16 %v3020
    %v3154 = vunpack.c.l.b16 %v3021
    %v3155 = vunpack.c.l.b16 %v3022
    %v3156 = vunpack.c.l.b16 %v3023
    %v3157 = vunpack.c.l.b16 %v3024
    %v3158 = vunpack.c.l.b16 %v3025
    %v3159 = vunpack.c.l.b16 %v3026
    %v3160 = vunpack.c.l.b16 %v3027
    %v3161 = vunpack.c.l.b16 %v3028
    %v3162 = vunpack.c.l.b16 %v3029
    %v3163 = vunpack.c.l.b16 %v3030
    %v3164 = vunpack.c.l.b16 %v3031
    %v3165 = vunpack.c.l.b16 %v3032
    %v3166 = vunpack.c.l.b16 %v3033
    %v3167 = vunpack.c.l.b16 %v3034
    %v3168 = vunpack.c.l.b16 %v3035
    %v3169 = vunpack.c.l.b16 %v3036
    %v3170 = vunpack.c.l.b16 %v3037
    %v3171 = vunpack.c.l.b16 %v3038
    %v3172 = vunpack.c.l.b16 %v3039
    %v3173 = vunpack.c.l.b16 %v3040
    %v3174 = vunpack.c.l.b16 %v3041
    %v3175 = vunpack.c.l.b16 %v3042
    %v3176 = vunpack.c.l.b16 %v3043
    %v3177 = vunpack.c.l.b16 %v3044
    %v3178 = vunpack.c.l.b16 %v3045
    %v3179 = vunpack.c.l.b16 %v3046
    %v3180 = vunpack.c.l.b16 %v3047
    %v3181 = vunpack.c.l.b16 %v3048
    %v3182 = vunpack.c.l.b16 %v3049
    %v3183 = vunpack.c.l.b16 %v3050
    %v3184 = vunpack.c.l.b16 %v3051
    %v3185 = vunpack.c.l.b16 %v3052
    %v3186 = vunpack.c.l.b16 %v3053
    %v3187 = vunpack.c.l.b16 %v3054
    %v3188 = vunpack.c.l.b16 %v3055
    %v3189 = vunpack.c.l.b16 %v3056
    %v3190 = vunpack.c.l.b16 %v3057
    %v3191 = vunpack.c.l.b16 %v3058
    %v3192 = vunpack.c.l.b16 %v3059
    %v3193 = vunpack.c.l.b16 %v3060
    %v3194 = vunpack.c.l.b16 %v3061
    %v3195 = vunpack.c.l.b16 %v3062
    %v3196 = vpack.c.b16 %v3133, %v3132
    %v3197 = vpack.c.b16 %v3135, %v3134
    %v3198 = vpack.c.b16 %v3137, %v3136
    %v3199 = vpack.c.b16 %v3139, %v3138
    %v3200 = vpack.c.b16 %v3141, %v3140
    %v3201 = vpack.c.b16 %v3143, %v3142
    %v3202 = vpack.c.b16 %v3145, %v3144
    %v3203 = vpack.c.b16 %v3147, %v3146
    %v3204 = vpack.c.b16 %v3149, %v3148
    %v3205 = vpack.c.b16 %v3151, %v3150
    %v3206 = vpack.c.b16 %v3153, %v3152
    %v3207 = vpack.c.b16 %v3155, %v3154
    %v3208 = vpack.c.b16 %v3157, %v3156
    %v3209 = vpack.c.b16 %v3159, %v3158
    %v3210 = vpack.c.b16 %v3161, %v3160
    %v3211 = vpack.c.b16 %v3163, %v3162
    %v3212 = vpack.c.b16 %v3165, %v3164
    %v3213 = vpack.c.b16 %v3167, %v3166
    %v3214 = vpack.c.b16 %v3169, %v3168
    %v3215 = vpack.c.b16 %v3171, %v3170
    %v3216 = vpack.c.b16 %v3173, %v3172
    %v3217 = vpack.c.b16 %v3175, %v3174
    %v3218 = vpack.c.b16 %v3177, %v3176
    %v3219 = vpack.c.b16 %v3179, %v3178
    %v3220 = vpack.c.b16 %v3181, %v3180
    %v3221 = vpack.c.b16 %v3183, %v3182
    %v3222 = vpack.c.b16 %v3185, %v3184
    %v3223 = vpack.c.b16 %v3187, %v3186
    %v3224 = vpack.c.b16 %v3189, %v3188
    %v3225 = vpack.c.b16 %v3191, %v3190
    %v3226 = vpack.c.b16 %v3193, %v3192
    %v3227 = vpack.c.b16 %v3195, %v3194
    %3260 = vmatpush.bf16.msra.mxu0 %v3203
    %3261 = vmatpush.bf16.msra.mxu0 %v3202
    %3262 = vmatpush.bf16.msra.mxu0 %v3201
    %3263 = vmatpush.bf16.msra.mxu0 %v3200
    %3264 = vmatpush.bf16.msra.mxu0 %v3199
    %3265 = vmatpush.bf16.msra.mxu0 %v3198
    %3266 = vmatpush.bf16.msra.mxu0 %v3197
    %3267 = vmatpush.bf16.msra.mxu0 %v3196
    %3268 = vmatmul.bf16.gmra.mxu0 %v2994
    %v3269 = vpop.f32.mrf.mxu0
    %v3270 = vadd.f32 %v3066, %v3269
    %v3271 = vpop.f32.mrf.mxu0
    %3272 = vdwg.mxu0
    %3273 = vmatpush.bf16.msra.mxu0 %v3211
    %3274 = vmatpush.bf16.msra.mxu0 %v3210
    %3275 = vmatpush.bf16.msra.mxu0 %v3209
    %3276 = vmatpush.bf16.msra.mxu0 %v3208
    %3277 = vmatpush.bf16.msra.mxu0 %v3207
    %3278 = vmatpush.bf16.msra.mxu0 %v3206
    %3279 = vmatpush.bf16.msra.mxu0 %v3205
    %3280 = vmatpush.bf16.msra.mxu0 %v3204
    %3281 = vmatmul.bf16.gmra.mxu0 %v2995
    %v3282 = vpop.f32.mrf.mxu0
    %v3283 = vadd.f32 %v3270, %v3282
    %v3284 = vpop.f32.mrf.mxu0
    %3285 = vdwg.mxu0
    %3286 = vmatpush.bf16.msra.mxu0 %v3219
    %3287 = vmatpush.bf16.msra.mxu0 %v3218
    %3288 = vmatpush.bf16.msra.mxu0 %v3217
    %3289 = vmatpush.bf16.msra.mxu0 %v3216
    %3290 = vmatpush.bf16.msra.mxu0 %v3215
    %3291 = vmatpush.bf16.msra.mxu0 %v3214
    %3292 = vmatpush.bf16.msra.mxu0 %v3213
    %3293 = vmatpush.bf16.msra.mxu0 %v3212
    %3294 = vmatmul.bf16.gmra.mxu0 %v2996
    %v3295 = vpop.f32.mrf.mxu0
    %v3296 = vadd.f32 %v3283, %v3295
    %v3297 = vpop.f32.mrf.mxu0
    %3298 = vdwg.mxu0
    %3299 = vmatpush.bf16.msra.mxu0 %v3227
    %3300 = vmatpush.bf16.msra.mxu0 %v3226
    %3301 = vmatpush.bf16.msra.mxu0 %v3225
    %3302 = vmatpush.bf16.msra.mxu0 %v3224
    %3303 = vmatpush.bf16.msra.mxu0 %v3223
    %3304 = vmatpush.bf16.msra.mxu0 %v3222
    %3305 = vmatpush.bf16.msra.mxu0 %v3221
    %3306 = vmatpush.bf16.msra.mxu0 %v3220
    %3307 = vmatmul.bf16.gmra.mxu0 %v2997
    %v3308 = vpop.f32.mrf.mxu0
    %v3309 = vadd.f32 %v3296, %v3308
    %v3310 = vpop.f32.mrf.mxu0
    %3311 = vdwg.mxu0
    %vm3312 = vcmp.gt.f32.partialorder %v3309, 0.0
    %v3313 = vmul.f32 %v3309, 1.442695
    %v3314 = vpow.pop %v3313
    %v3315 = vsub.f32 %v3314, 1.0
    %v3316 = vsel %vm3312, %v3309, %v3315
    %v3317 = vadd.f32 %v3316, %v2643
    %vm3318 = vcmp.gt.f32.partialorder %v3317, 0.0
    %v3319 = vmul.f32 %v3317, 1.442695
    %v3320 = vpow.pop %v3319
    %v3321 = vsub.f32 %v3320, 1.0
    %v3322 = vsel %vm3318, %v3317, %v3321
    %v3323 = vpack.c.bf16 %v3322, %v3322
    %v3324 = vld [vmem:[#allocation13] sm:$0xf]
    %v3325 = vld [vmem:[#allocation13 + $0x4] sm:$0xf]
    %v3326 = vld [vmem:[#allocation13 + $0x8] sm:$0xf]
    %v3327 = vld [vmem:[#allocation13 + $0xc] sm:$0xf]
    %v3328 = vld [vmem:[#allocation13 + $0x10] sm:$0xf]
    %v3329 = vld [vmem:[#allocation13 + $0x14] sm:$0xf]
    %v3330 = vld [vmem:[#allocation13 + $0x18] sm:$0xf]
    %v3331 = vld [vmem:[#allocation13 + $0x1c] sm:$0xf]
    %v3332 = vld [vmem:[#allocation13 + $0x20] sm:$0xf]
    %v3333 = vld [vmem:[#allocation13 + $0x24] sm:$0xf]
    %v3334 = vld [vmem:[#allocation13 + $0x28] sm:$0xf]
    %v3335 = vld [vmem:[#allocation13 + $0x2c] sm:$0xf]
    %v3336 = vld [vmem:[#allocation13 + $0x30] sm:$0xf]
    %v3337 = vld [vmem:[#allocation13 + $0x34] sm:$0xf]
    %v3338 = vld [vmem:[#allocation13 + $0x38] sm:$0xf]
    %v3339 = vld [vmem:[#allocation13 + $0x3c] sm:$0xf]
    %v3340 = vld [vmem:[%s8] sm:$0x1]
    %v3342 = vshrl.u32 %v3323, 16
    %v3344 = vrot.slane %v3342, 1
    %v3362 = vunpack.c.l.b16 %v3324
    %v3363 = vunpack.c.l.b16 %v3325
    %v3364 = vunpack.c.l.b16 %v3326
    %v3365 = vunpack.c.l.b16 %v3327
    %v3366 = vunpack.c.l.b16 %v3328
    %v3367 = vunpack.c.l.b16 %v3329
    %v3368 = vunpack.c.l.b16 %v3330
    %v3369 = vunpack.c.l.b16 %v3331
    %v3370 = vunpack.c.l.b16 %v3332
    %v3371 = vunpack.c.l.b16 %v3333
    %v3372 = vunpack.c.l.b16 %v3334
    %v3373 = vunpack.c.l.b16 %v3335
    %v3374 = vunpack.c.l.b16 %v3336
    %v3375 = vunpack.c.l.b16 %v3337
    %v3376 = vunpack.c.l.b16 %v3338
    %v3377 = vunpack.c.l.b16 %v3339
    %v3378 = vpack.c.b16 %v3363, %v3362
    %v3379 = vpack.c.b16 %v3365, %v3364
    %v3380 = vpack.c.b16 %v3367, %v3366
    %v3381 = vpack.c.b16 %v3369, %v3368
    %v3382 = vpack.c.b16 %v3371, %v3370
    %v3383 = vpack.c.b16 %v3373, %v3372
    %v3384 = vpack.c.b16 %v3375, %v3374
    %v3385 = vpack.c.b16 %v3377, %v3376
    %3394 = vmatpush.bf16.msra.mxu0 %v3385
    %3395 = vmatpush.bf16.msra.mxu0 %v3384
    %3396 = vmatpush.bf16.msra.mxu0 %v3383
    %3397 = vmatpush.bf16.msra.mxu0 %v3382
    %3398 = vmatpush.bf16.msra.mxu0 %v3381
    %3399 = vmatpush.bf16.msra.mxu0 %v3380
    %3400 = vmatpush.bf16.msra.mxu0 %v3379
    %3401 = vmatpush.bf16.msra.mxu0 %v3378
    %3402 = vmatmul.bf16.gmra.mxu0 %v3344
    %v3403 = vpop.f32.mrf.mxu0
    %v3404 = vadd.f32 %v3340, %v3403
    %v3405 = vpop.f32.mrf.mxu0
    %3406 = vdwg.mxu0
    %vm3407 = vcmask 24576
    %v3408 = vsel %vm3407, %v3404, -inf
    %3409 = vmax.xlane.f32.xlu0 %v3408
    %v3410 = vpop.xlane.xlu0 %3409
    %v3411 = vsub.f32 %v3404, %v3410
    %v3412 = vmul.f32 %v3411, 1.442695
    %v3413 = vpow.pop %v3412
    %v3414 = vsel %vm3407, %v3413, 0.0
    %3415 = vadd.xlane.f32.xlu0 %v3414
    %v3416 = vpop.xlane.xlu0 %3415
    %v3417 = vrcp.pop %v3416
    %v3418 = vmul.f32 %v3416, %v3417
    %v3419 = vsub.f32 1.0, %v3418
    %v3420 = vmul.f32 %v3417, %v3419
    %v3421 = vadd.f32 %v3417, %v3420
    %vm3422 = vweird.f32 %v3416
    %vm3423 = vweird.f32 %v3417
    %vm3424 = vmor %vm3422, %vm3423
    %v3425 = vsel %vm3424, %v3417, %v3421
    %v3426 = vand.u32 2147483647, %v3416
    %vm3427 = vcmp.eq.f32.partialorder %v3426, 8.507059e+37
    %v3428 = vand.u32 %v3416, 2147483648
    %v3429 = vor.u32 1.1754944e-38, %v3428
    %v3430 = vsel %vm3427, %v3429, %v3425
    %v3431 = vmul.f32 %v3413, %v3430
    %3432 = vst.msk [vmem:[#allocation14] sm:$0x1] %vm3407, %v3431
    %vm3433 = vcmask 57376
    %v3434 = vsel %vm3433, %v3404, -inf
    %3435 = vmax.xlane.f32.xlu0 %v3434
    %v3436 = vpop.xlane.xlu0 %3435
    %v3437 = vsub.f32 %v3404, %v3436
    %v3438 = vmul.f32 %v3437, 1.442695
    %v3439 = vpow.pop %v3438
    %3441 = vrot.lane.b32.xlu0 %v3439, 124
    %v3442 = vpop.permute.xlu0 %3441
    %v3444 = vsel %vm3407, %v3442, 0.0
    %3445 = vadd.xlane.f32.xlu0 %v3444
    %v3446 = vpop.xlane.xlu0 %3445
    %v3447 = vrcp.pop %v3446
    %v3448 = vmul.f32 %v3446, %v3447
    %v3449 = vsub.f32 1.0, %v3448
    %v3450 = vmul.f32 %v3447, %v3449
    %v3451 = vadd.f32 %v3447, %v3450
    %vm3452 = vweird.f32 %v3446
    %vm3453 = vweird.f32 %v3447
    %vm3454 = vmor %vm3452, %vm3453
    %v3455 = vsel %vm3454, %v3447, %v3451
    %v3456 = vand.u32 2147483647, %v3446
    %vm3457 = vcmp.eq.f32.partialorder %v3456, 8.507059e+37
    %v3458 = vand.u32 %v3446, 2147483648
    %v3459 = vor.u32 1.1754944e-38, %v3458
    %v3460 = vsel %vm3457, %v3459, %v3455
    %v3461 = vmul.f32 %v3439, %v3460
    %3463 = vrot.lane.b32.xlu0 %v3461, 124
    %v3464 = vpop.permute.xlu0 %3463
    %s3466 = scalar_lea.vmem [#allocation14], 1
    %3467 = vst.msk [vmem:[%s3466] sm:$0x1] %vm3407, %v3464
    // Predicated region
    $region66: #{forward.1} parent=1 // pred_check
      _
    $region67: #{forward.1} parent=1 // pred_check_branch
      %3469 = sbr.rel (0) target = $region69
    $region68: #{forward.1} parent=1 // pred_region
      %3471 = vsyncadd [#allocation4], 0
      %s3472 = sshll.u32 [#allocation14], 4
      %s3473 = int_to_ptr.vmem [resolvable:$true] %s3472
      %s3474 = sshll.u32 %s9, 4
      %s3475 = int_to_ptr.hbm [resolvable:$true] %s3474
      %3480 = dma.vmem_to_hbm [thread:$0]  %s3473, 32, %s3475, [#allocation4], 16, 16, 1
    $region69: #{forward.1} parent=1 // pred_fallthru
      _
    // Predicated region
    $region70: #{forward.1} parent=1 // pred_check
      _
    $region71: #{forward.1} parent=1 // pred_check_branch
      %3482 = sbr.rel (0) target = $region73
    $region72: #{forward.1} parent=1 // pred_region
      %3484 = dma.done [#allocation4], 32
    $region73: #{forward.1} parent=1 // pred_fallthru
      _
    %3485 = vsyncpa [#allocation3], 1
    %3486 = vsyncpa [#allocation6], 1
    %3487 = vsyncpa [#allocation9], 1
    %3488 = vsyncpa [#allocation12], 1
    %3489 = vsyncpa [#allocation4], 1

</llo_original>
